<compile_context>
chip_gen: v7x
topology: tpu7x:2x2x1
jax: 0.10.0
libtpu: 0.0.40
codegen_flags: <defaults>
</compile_context>

<pallas_src>
import math

import jax
import jax.numpy as jnp
from jax.experimental import pallas as pl
from jax.experimental.pallas import tpu as pltpu

EPS = 1e-5  # nn.BatchNorm2d default eps


def _full_spec(shape):
    """BlockSpec covering the whole array (grid=(1,))."""
    return pl.BlockSpec(shape, lambda i, n=len(shape): (0,) * n)


# ----------------------------------------------------------------------------
# Kernel A: conv1(3x3,valid)->BN1->ReLU->conv2(3x3,valid)->BN2->ReLU.
# Output per batch is the channel-major (NCHW-flat) feature map:
#   o[n] = feat[n].T  with feat[n] the (H2*W2, Cout) NHWC feature matrix.
# ----------------------------------------------------------------------------
def conv_stack_kernel(x_ref, w1_ref, g1_ref, b1_ref, w2_ref, g2_ref, b2_ref,
                      o_ref):
    x = x_ref[...]                        # (b, s, s, cin) NHWC, f32
    b, s, _, cin = x.shape
    cmid = w1_ref.shape[2]
    cout = w2_ref.shape[2]
    h1 = s - 2                            # after conv1 (valid)
    h2 = h1 - 2                           # after conv2 (valid)

    def conv3x3(img, w_ref, h_out, c_in, c_out):
        # dx taps folded into the contraction dim: 3 matmuls with K = 3*c_in
        # instead of 9 with K = c_in (bf16 operands, f32 accumulation).
        acc = jnp.zeros((b * h_out * h_out, c_out), jnp.float32)
        for dy in range(3):
            pieces = [
                img[:, dy:dy + h_out, dx:dx + h_out, :]
                .reshape(b * h_out * h_out, c_in)
                for dx in range(3)
            ]
            patch = jnp.concatenate(pieces, axis=1).astype(jnp.bfloat16)
            acc += jnp.dot(patch, w_ref[dy].astype(jnp.bfloat16),
                           preferred_element_type=jnp.float32)
        return acc

    def bn_relu(acc, g_ref, b_ref):
        # Training-mode BatchNorm2d: batch stats over (N, H, W), biased var,
        # single pass (sum and sum-of-squares).
        n = acc.shape[0]
        s1 = jnp.sum(acc, axis=0, keepdims=True)
        s2 = jnp.sum(acc * acc, axis=0, keepdims=True)
        mean = s1 * (1.0 / n)
        var = jnp.maximum(s2 * (1.0 / n) - mean * mean, 0.0)
        y = (acc - mean) * jax.lax.rsqrt(var + EPS) * g_ref[...] + b_ref[...]
        return jnp.maximum(y, 0.0)

    a1 = bn_relu(conv3x3(x, w1_ref, h1, cin, cmid), g1_ref, b1_ref)
    a1 = a1.reshape(b, h1, h1, cmid)
    a2 = bn_relu(conv3x3(a1, w2_ref, h2, cmid, cout), g2_ref, b2_ref)
    # a2: (b*h2*h2, cout), rows ordered (n, H, W)

    # Per-batch transpose to channel-major (cout, h2*h2), done on the MXU by
    # multiplying with an exact f32 identity (pure data movement, exact).
    ident = (jax.lax.broadcasted_iota(jnp.int32, (cout, cout), 0)
             == jax.lax.broadcasted_iota(jnp.int32, (cout, cout), 1)
             ).astype(jnp.float32)
    hw = h2 * h2
    for n in range(b):
        a_n = a2[n * hw:(n + 1) * hw, :]                  # (hw, cout)
        o_ref[n, :, :] = jax.lax.dot_general(              # (cout, hw) == a_n.T
            ident, a_n, (((1,), (1,)), ((), ())),
            preferred_element_type=jnp.float32)


def conv_stack(x_img, w1f, g1, b1, w2f, g2, b2):
    b, s, _, _ = x_img.shape
    cout = w2f.shape[2]
    h2 = s - 4
    out_shape = (b, cout, h2 * h2)
    return pl.pallas_call(
        conv_stack_kernel,
        grid=(1,),
        in_specs=[_full_spec(x_img.shape), _full_spec(w1f.shape),
                  _full_spec(g1.shape), _full_spec(b1.shape),
                  _full_spec(w2f.shape), _full_spec(g2.shape),
                  _full_spec(b2.shape)],
        out_specs=_full_spec(out_shape),
        out_shape=jax.ShapeDtypeStruct(out_shape, jnp.float32),
        compiler_params=pltpu.CompilerParams(
            dimension_semantics=("arbitrary",)),
    )(x_img, w1f, g1, b1, w2f, g2, b2)


# ----------------------------------------------------------------------------
# Kernel B: cls handling + final projection (nn.Linear), lane-dense output.
#   o[:, 0 , :] = cls  @ Wp + bp
#   o[:, 1:, :] = body @ Wp + bp
# ----------------------------------------------------------------------------
def proj_kernel(cls_ref, body_ref, wp_ref, bp_ref, o_ref):
    b, hw, d = body_ref.shape
    planes = wp_ref.shape[1]
    wp = wp_ref[...].astype(jnp.bfloat16)
    bp = bp_ref[...]

    body = body_ref[...].reshape(b * hw, d).astype(jnp.bfloat16)
    body_out = jnp.dot(body, wp, preferred_element_type=jnp.float32) + bp
    cls_out = jnp.dot(cls_ref[...].astype(jnp.bfloat16), wp,
                      preferred_element_type=jnp.float32) + bp

    o_ref[:, 0:1, :] = cls_out[:, None, :]
    o_ref[:, 1:, :] = body_out.reshape(b, hw, planes)


def proj(cls_, tokens_body, wp, bp):
    b, hw, _ = tokens_body.shape
    planes = wp.shape[1]
    out_shape = (b, 1 + hw, planes)
    return pl.pallas_call(
        proj_kernel,
        grid=(1,),
        in_specs=[_full_spec(cls_.shape), _full_spec(tokens_body.shape),
                  _full_spec(wp.shape), _full_spec(bp.shape)],
        out_specs=_full_spec(out_shape),
        out_shape=jax.ShapeDtypeStruct(out_shape, jnp.float32),
        compiler_params=pltpu.CompilerParams(
            dimension_semantics=("arbitrary",)),
    )(cls_, tokens_body, wp, bp)


# ----------------------------------------------------------------------------
# Full forward.  Jitted so the two pallas custom-calls are the only real
# kernels; all remaining glue is zero-copy reshapes and tiny fused slices.
# ----------------------------------------------------------------------------
@jax.jit
def cnn_forward(x, params):
    b, L, d = x.shape
    cls_ = x[:, 0, :]                                 # with_cls = 1
    xt = x[:, 1:, :]
    l = L - 1
    s = int(round(math.sqrt(l)))
    assert s * s == l, "token count minus cls must be a perfect square"

    # PyTorch: view(b,s,s,d).transpose(-1,1) -> NCHW with H = token column axis.
    # NHWC equivalent: swap the two spatial axes of the row-major token image.
    x_img = xt.reshape(b, s, s, d).transpose(0, 2, 1, 3)

    cmid = d // 2
    # dx-folded weight views (free reshapes of the HWIO weights).
    w1f = params["w1"].reshape(3, 3 * d, cmid)
    w2f = params["w2"].reshape(3, 3 * cmid, d)

    feat_cm = conv_stack(x_img, w1f, params["g1"], params["b1"],
                         w2f, params["g2"], params["b2"])   # (b, d, h2*h2)

    # PyTorch's `out.view(b, -1, C)` is a raw reinterpretation of the NCHW
    # buffer; with the channel-major kernel output this is a bitcast-
    # equivalent (zero-copy) reshape.
    h2 = s - 4
    tokens_body = feat_cm.reshape(b, h2 * h2, d)

    # TODO(synk): with_film FiLM branch (gammas/betas + tanh gates) and the
    # lora variants are not exercised under the default config (with_film=False).
    return proj(cls_, tokens_body, params["wp"], params["bp"])


if __name__ == "__main__":
    # batch=2, grid side=10 -> 101 tokens (1 cls + 100 patches), inplanes=32,
    # planes=128 (lane-dense output).  After two valid 3x3 convs: 6x6 spatial
    # -> 36 body tokens + cls = 37 output tokens.
    b, s, inplanes, planes = 2, 10, 32, 128
    cmid = inplanes // 2
    L = 1 + s * s

    key = jax.random.PRNGKey(0)
    ks = jax.random.split(key, 9)
    params = {
        "w1": 0.1 * jax.random.normal(ks[0], (3, 3, inplanes, cmid), jnp.float32),  # HWIO
        "w2": 0.1 * jax.random.normal(ks[1], (3, 3, cmid, inplanes), jnp.float32),  # HWIO
        "g1": 1.0 + 0.1 * jax.random.normal(ks[2], (1, cmid), jnp.float32),
        "b1": 0.1 * jax.random.normal(ks[3], (1, cmid), jnp.float32),
        "g2": 1.0 + 0.1 * jax.random.normal(ks[4], (1, inplanes), jnp.float32),
        "b2": 0.1 * jax.random.normal(ks[5], (1, inplanes), jnp.float32),
        "wp": (1.0 / math.sqrt(inplanes))
              * jax.random.normal(ks[6], (inplanes, planes), jnp.float32),
        "bp": 0.01 * jax.random.normal(ks[7], (1, planes), jnp.float32),
    }
    x = jax.random.normal(ks[8], (b, L, inplanes), jnp.float32)

    out = jax.block_until_ready(cnn_forward(x, params))
    assert out.shape == (b, 1 + (s - 4) * (s - 4), planes), out.shape
    assert jnp.all(jnp.isfinite(out))
    print("KERNEL_OK")
</pallas_src>

<mosaic_0001>
module attributes {stable_mosaic.version = 11 : i64} {
  func.func @proj_kernel(%arg0: i32, %arg1: memref<2x32xf32, #tpu.memory_space<vmem>>, %arg2: memref<2x36x32xf32, #tpu.memory_space<vmem>>, %arg3: memref<32x128xf32, #tpu.memory_space<vmem>>, %arg4: memref<1x128xf32, #tpu.memory_space<vmem>>, %arg5: memref<2x37x128xf32, #tpu.memory_space<vmem>>) attributes {dimension_semantics = [#tpu.dimension_semantics<arbitrary>], iteration_bounds = array<i64: 1>, scalar_prefetch = 0 : i64, scratch_operands = 0 : i64, tpu.core_type = #tpu.core_type<tc>, window_params = [{pipeline_mode = #tpu.pipeline_mode<synchronous>, transform_indices = @transform_0, window_bounds = array<i64: 2, 32>}, {pipeline_mode = #tpu.pipeline_mode<synchronous>, transform_indices = @transform_1, window_bounds = array<i64: 2, 36, 32>}, {pipeline_mode = #tpu.pipeline_mode<synchronous>, transform_indices = @transform_2, window_bounds = array<i64: 32, 128>}, {pipeline_mode = #tpu.pipeline_mode<synchronous>, transform_indices = @transform_3, window_bounds = array<i64: 1, 128>}, {pipeline_mode = #tpu.pipeline_mode<synchronous>, transform_indices = @transform_4, window_bounds = array<i64: 2, 37, 128>}]} {
    %c0 = arith.constant 0 : index
    %c0_0 = arith.constant 0 : index
    %0 = vector.load %arg3[%c0, %c0_0] : memref<32x128xf32, #tpu.memory_space<vmem>>, vector<32x128xf32>
    %1 = arith.truncf %0 : vector<32x128xf32> to vector<32x128xbf16>
    %c0_1 = arith.constant 0 : index
    %c0_2 = arith.constant 0 : index
    %2 = vector.load %arg4[%c0_1, %c0_2] : memref<1x128xf32, #tpu.memory_space<vmem>>, vector<1x128xf32>
    %c0_3 = arith.constant 0 : index
    %c0_4 = arith.constant 0 : index
    %c0_5 = arith.constant 0 : index
    %3 = vector.load %arg2[%c0_3, %c0_4, %c0_5] : memref<2x36x32xf32, #tpu.memory_space<vmem>>, vector<2x36x32xf32>
    %4 = vector.shape_cast %3 : vector<2x36x32xf32> to vector<72x32xf32>
    %5 = arith.truncf %4 : vector<72x32xf32> to vector<72x32xbf16>
    %cst = arith.constant dense<0.000000e+00> : vector<72x128xf32>
    %6 = tpu.matmul %5, %1, %cst {dimension_numbers = #tpu.dot_dimension_numbers<[1], [0], [0], [1], [0, 0, 1, 1], [], []>} : vector<72x32xbf16>, vector<32x128xbf16>, vector<72x128xf32> -> vector<72x128xf32>
    %7 = vector.broadcast %2 : vector<1x128xf32> to vector<72x128xf32>
    %8 = arith.addf %6, %7 : vector<72x128xf32>
    %c0_6 = arith.constant 0 : index
    %c0_7 = arith.constant 0 : index
    %9 = vector.load %arg1[%c0_6, %c0_7] : memref<2x32xf32, #tpu.memory_space<vmem>>, vector<2x32xf32>
    %10 = arith.truncf %9 : vector<2x32xf32> to vector<2x32xbf16>
    %cst_8 = arith.constant dense<0.000000e+00> : vector<2x128xf32>
    %11 = tpu.matmul %10, %1, %cst_8 {dimension_numbers = #tpu.dot_dimension_numbers<[1], [0], [0], [1], [0, 0, 1, 1], [], []>} : vector<2x32xbf16>, vector<32x128xbf16>, vector<2x128xf32> -> vector<2x128xf32>
    %12 = vector.broadcast %2 : vector<1x128xf32> to vector<2x128xf32>
    %13 = arith.addf %11, %12 : vector<2x128xf32>
    %14 = vector.shape_cast %13 : vector<2x128xf32> to vector<2x1x128xf32>
    %c0_9 = arith.constant 0 : index
    %c0_10 = arith.constant 0 : index
    %c0_11 = arith.constant 0 : index
    %15 = vector.load %arg5[%c0_9, %c0_10, %c0_11] : memref<2x37x128xf32, #tpu.memory_space<vmem>>, vector<2x1x128xf32>
    tpu.vector_store %arg5[%c0_9, %c0_10, %c0_11], %14 {strides = array<i32>} : memref<2x37x128xf32, #tpu.memory_space<vmem>>, vector<2x1x128xf32>,
    %16 = vector.shape_cast %8 : vector<72x128xf32> to vector<2x36x128xf32>
    %c0_12 = arith.constant 0 : index
    %c1 = arith.constant 1 : index
    %c0_13 = arith.constant 0 : index
    %17 = vector.load %arg5[%c0_12, %c1, %c0_13] : memref<2x37x128xf32, #tpu.memory_space<vmem>>, vector<2x36x128xf32>
    tpu.vector_store %arg5[%c0_12, %c1, %c0_13], %16 {strides = array<i32>} : memref<2x37x128xf32, #tpu.memory_space<vmem>>, vector<2x36x128xf32>,
    return
  }
  func.func @transform_0(%arg0: i32) -> (i32, i32) {
    %c0_i32 = arith.constant 0 : i32
    %c0_i32_0 = arith.constant 0 : i32
    %c0_i32_1 = arith.constant 0 : i32
    return %c0_i32, %c0_i32_0 : i32, i32
  }
  func.func @transform_1(%arg0: i32) -> (i32, i32, i32) {
    %c0_i32 = arith.constant 0 : i32
    %c0_i32_0 = arith.constant 0 : i32
    %c0_i32_1 = arith.constant 0 : i32
    %c0_i32_2 = arith.constant 0 : i32
    return %c0_i32, %c0_i32_0, %c0_i32_1 : i32, i32, i32
  }
  func.func @transform_2(%arg0: i32) -> (i32, i32) {
    %c0_i32 = arith.constant 0 : i32
    %c0_i32_0 = arith.constant 0 : i32
    %c0_i32_1 = arith.constant 0 : i32
    return %c0_i32, %c0_i32_0 : i32, i32
  }
  func.func @transform_3(%arg0: i32) -> (i32, i32) {
    %c0_i32 = arith.constant 0 : i32
    %c0_i32_0 = arith.constant 0 : i32
    %c0_i32_1 = arith.constant 0 : i32
    return %c0_i32, %c0_i32_0 : i32, i32
  }
  func.func @transform_4(%arg0: i32) -> (i32, i32, i32) {
    %c0_i32 = arith.constant 0 : i32
    %c0_i32_0 = arith.constant 0 : i32
    %c0_i32_1 = arith.constant 0 : i32
    %c0_i32_2 = arith.constant 0 : i32
    return %c0_i32, %c0_i32_0, %c0_i32_1 : i32, i32, i32
  }
}

module attributes {stable_mosaic.version = 11 : i64} {
  func.func @conv_stack_kernel(%arg0: i32, %arg1: memref<2x10x10x32xf32, #tpu.memory_space<vmem>>, %arg2: memref<3x96x16xf32, #tpu.memory_space<vmem>>, %arg3: memref<1x16xf32, #tpu.memory_space<vmem>>, %arg4: memref<1x16xf32, #tpu.memory_space<vmem>>, %arg5: memref<3x48x32xf32, #tpu.memory_space<vmem>>, %arg6: memref<1x32xf32, #tpu.memory_space<vmem>>, %arg7: memref<1x32xf32, #tpu.memory_space<vmem>>, %arg8: memref<2x32x36xf32, #tpu.memory_space<vmem>>) attributes {dimension_semantics = [#tpu.dimension_semantics<arbitrary>], iteration_bounds = array<i64: 1>, scalar_prefetch = 0 : i64, scratch_operands = 0 : i64, tpu.core_type = #tpu.core_type<tc>, window_params = [{pipeline_mode = #tpu.pipeline_mode<synchronous>, transform_indices = @transform_0, window_bounds = array<i64: 2, 10, 10, 32>}, {pipeline_mode = #tpu.pipeline_mode<synchronous>, transform_indices = @transform_1, window_bounds = array<i64: 3, 96, 16>}, {pipeline_mode = #tpu.pipeline_mode<synchronous>, transform_indices = @transform_2, window_bounds = array<i64: 1, 16>}, {pipeline_mode = #tpu.pipeline_mode<synchronous>, transform_indices = @transform_3, window_bounds = array<i64: 1, 16>}, {pipeline_mode = #tpu.pipeline_mode<synchronous>, transform_indices = @transform_4, window_bounds = array<i64: 3, 48, 32>}, {pipeline_mode = #tpu.pipeline_mode<synchronous>, transform_indices = @transform_5, window_bounds = array<i64: 1, 32>}, {pipeline_mode = #tpu.pipeline_mode<synchronous>, transform_indices = @transform_6, window_bounds = array<i64: 1, 32>}, {pipeline_mode = #tpu.pipeline_mode<synchronous>, transform_indices = @transform_7, window_bounds = array<i64: 2, 32, 36>}]} {
    %c0 = arith.constant 0 : index
    %c0_0 = arith.constant 0 : index
    %c0_1 = arith.constant 0 : index
    %c0_2 = arith.constant 0 : index
    %0 = vector.load %arg1[%c0, %c0_0, %c0_1, %c0_2] : memref<2x10x10x32xf32, #tpu.memory_space<vmem>>, vector<2x10x10x32xf32>
    %cst = arith.constant 0.000000e+00 : f32
    %1 = vector.broadcast %cst : f32 to vector<128x16xf32>
    %2 = vector.extract_strided_slice %0 {offsets = [0, 0, 0, 0], sizes = [2, 8, 8, 32], strides = [1, 1, 1, 1]} : vector<2x10x10x32xf32> to vector<2x8x8x32xf32>
    %3 = vector.shape_cast %2 : vector<2x8x8x32xf32> to vector<128x32xf32>
    %4 = vector.extract_strided_slice %0 {offsets = [0, 0, 1, 0], sizes = [2, 8, 8, 32], strides = [1, 1, 1, 1]} : vector<2x10x10x32xf32> to vector<2x8x8x32xf32>
    %5 = vector.shape_cast %4 : vector<2x8x8x32xf32> to vector<128x32xf32>
    %6 = vector.extract_strided_slice %0 {offsets = [0, 0, 2, 0], sizes = [2, 8, 8, 32], strides = [1, 1, 1, 1]} : vector<2x10x10x32xf32> to vector<2x8x8x32xf32>
    %7 = vector.shape_cast %6 : vector<2x8x8x32xf32> to vector<128x32xf32>
    %8 = tpu.concatenate %3, %5, %7 in 1 : vector<128x32xf32>, vector<128x32xf32>, vector<128x32xf32> -> vector<128x96xf32>
    %9 = arith.truncf %8 : vector<128x96xf32> to vector<128x96xbf16>
    %c0_3 = arith.constant 0 : index
    %c0_4 = arith.constant 0 : index
    %c0_5 = arith.constant 0 : index
    %10 = vector.load %arg2[%c0_3, %c0_4, %c0_5] : memref<3x96x16xf32, #tpu.memory_space<vmem>>, vector<1x96x16xf32>
    %11 = vector.shape_cast %10 : vector<1x96x16xf32> to vector<96x16xf32>
    %12 = arith.truncf %11 : vector<96x16xf32> to vector<96x16xbf16>
    %cst_6 = arith.constant dense<0.000000e+00> : vector<128x16xf32>
    %13 = tpu.matmul %9, %12, %cst_6 {dimension_numbers = #tpu.dot_dimension_numbers<[1], [0], [0], [1], [0, 0, 1, 1], [], []>} : vector<128x96xbf16>, vector<96x16xbf16>, vector<128x16xf32> -> vector<128x16xf32>
    %14 = arith.addf %1, %13 : vector<128x16xf32>
    %15 = vector.extract_strided_slice %0 {offsets = [0, 1, 0, 0], sizes = [2, 8, 8, 32], strides = [1, 1, 1, 1]} : vector<2x10x10x32xf32> to vector<2x8x8x32xf32>
    %16 = vector.shape_cast %15 : vector<2x8x8x32xf32> to vector<128x32xf32>
    %17 = vector.extract_strided_slice %0 {offsets = [0, 1, 1, 0], sizes = [2, 8, 8, 32], strides = [1, 1, 1, 1]} : vector<2x10x10x32xf32> to vector<2x8x8x32xf32>
    %18 = vector.shape_cast %17 : vector<2x8x8x32xf32> to vector<128x32xf32>
    %19 = vector.extract_strided_slice %0 {offsets = [0, 1, 2, 0], sizes = [2, 8, 8, 32], strides = [1, 1, 1, 1]} : vector<2x10x10x32xf32> to vector<2x8x8x32xf32>
    %20 = vector.shape_cast %19 : vector<2x8x8x32xf32> to vector<128x32xf32>
    %21 = tpu.concatenate %16, %18, %20 in 1 : vector<128x32xf32>, vector<128x32xf32>, vector<128x32xf32> -> vector<128x96xf32>
    %22 = arith.truncf %21 : vector<128x96xf32> to vector<128x96xbf16>
    %c1 = arith.constant 1 : index
    %c0_7 = arith.constant 0 : index
    %c0_8 = arith.constant 0 : index
    %23 = vector.load %arg2[%c1, %c0_7, %c0_8] : memref<3x96x16xf32, #tpu.memory_space<vmem>>, vector<1x96x16xf32>
    %24 = vector.shape_cast %23 : vector<1x96x16xf32> to vector<96x16xf32>
    %25 = arith.truncf %24 : vector<96x16xf32> to vector<96x16xbf16>
    %cst_9 = arith.constant dense<0.000000e+00> : vector<128x16xf32>
    %26 = tpu.matmul %22, %25, %cst_9 {dimension_numbers = #tpu.dot_dimension_numbers<[1], [0], [0], [1], [0, 0, 1, 1], [], []>} : vector<128x96xbf16>, vector<96x16xbf16>, vector<128x16xf32> -> vector<128x16xf32>
    %27 = arith.addf %14, %26 : vector<128x16xf32>
    %28 = vector.extract_strided_slice %0 {offsets = [0, 2, 0, 0], sizes = [2, 8, 8, 32], strides = [1, 1, 1, 1]} : vector<2x10x10x32xf32> to vector<2x8x8x32xf32>
    %29 = vector.shape_cast %28 : vector<2x8x8x32xf32> to vector<128x32xf32>
    %30 = vector.extract_strided_slice %0 {offsets = [0, 2, 1, 0], sizes = [2, 8, 8, 32], strides = [1, 1, 1, 1]} : vector<2x10x10x32xf32> to vector<2x8x8x32xf32>
    %31 = vector.shape_cast %30 : vector<2x8x8x32xf32> to vector<128x32xf32>
    %32 = vector.extract_strided_slice %0 {offsets = [0, 2, 2, 0], sizes = [2, 8, 8, 32], strides = [1, 1, 1, 1]} : vector<2x10x10x32xf32> to vector<2x8x8x32xf32>
    %33 = vector.shape_cast %32 : vector<2x8x8x32xf32> to vector<128x32xf32>
    %34 = tpu.concatenate %29, %31, %33 in 1 : vector<128x32xf32>, vector<128x32xf32>, vector<128x32xf32> -> vector<128x96xf32>
    %35 = arith.truncf %34 : vector<128x96xf32> to vector<128x96xbf16>
    %c2 = arith.constant 2 : index
    %c0_10 = arith.constant 0 : index
    %c0_11 = arith.constant 0 : index
    %36 = vector.load %arg2[%c2, %c0_10, %c0_11] : memref<3x96x16xf32, #tpu.memory_space<vmem>>, vector<1x96x16xf32>
    %37 = vector.shape_cast %36 : vector<1x96x16xf32> to vector<96x16xf32>
    %38 = arith.truncf %37 : vector<96x16xf32> to vector<96x16xbf16>
    %cst_12 = arith.constant dense<0.000000e+00> : vector<128x16xf32>
    %39 = tpu.matmul %35, %38, %cst_12 {dimension_numbers = #tpu.dot_dimension_numbers<[1], [0], [0], [1], [0, 0, 1, 1], [], []>} : vector<128x96xbf16>, vector<96x16xbf16>, vector<128x16xf32> -> vector<128x16xf32>
    %40 = arith.addf %27, %39 : vector<128x16xf32>
    %cst_13 = arith.constant dense<0.000000e+00> : vector<16xf32>
    %41 = vector.multi_reduction <add>, %40, %cst_13 [0] : vector<128x16xf32> to vector<16xf32>
    %42 = vector.shape_cast %41 : vector<16xf32> to vector<1x16xf32>
    %43 = arith.mulf %40, %40 : vector<128x16xf32>
    %cst_14 = arith.constant dense<0.000000e+00> : vector<16xf32>
    %44 = vector.multi_reduction <add>, %43, %cst_14 [0] : vector<128x16xf32> to vector<16xf32>
    %45 = vector.shape_cast %44 : vector<16xf32> to vector<1x16xf32>
    %cst_15 = arith.constant 7.812500e-03 : f32
    %46 = vector.broadcast %cst_15 : f32 to vector<1x16xf32>
    %47 = arith.mulf %42, %46 : vector<1x16xf32>
    %cst_16 = arith.constant 7.812500e-03 : f32
    %48 = vector.broadcast %cst_16 : f32 to vector<1x16xf32>
    %49 = arith.mulf %45, %48 : vector<1x16xf32>
    %50 = arith.mulf %47, %47 : vector<1x16xf32>
    %51 = arith.subf %49, %50 : vector<1x16xf32>
    %cst_17 = arith.constant 0.000000e+00 : f32
    %52 = vector.broadcast %cst_17 : f32 to vector<1x16xf32>
    %53 = arith.maximumf %51, %52 : vector<1x16xf32>
    %54 = vector.broadcast %47 : vector<1x16xf32> to vector<128x16xf32>
    %55 = arith.subf %40, %54 : vector<128x16xf32>
    %cst_18 = arith.constant 9.99999974E-6 : f32
    %56 = vector.broadcast %cst_18 : f32 to vector<1x16xf32>
    %57 = arith.addf %53, %56 : vector<1x16xf32>
    %58 = math.rsqrt %57 : vector<1x16xf32>
    %59 = vector.broadcast %58 : vector<1x16xf32> to vector<128x16xf32>
    %60 = arith.mulf %55, %59 : vector<128x16xf32>
    %c0_19 = arith.constant 0 : index
    %c0_20 = arith.constant 0 : index
    %61 = vector.load %arg3[%c0_19, %c0_20] : memref<1x16xf32, #tpu.memory_space<vmem>>, vector<1x16xf32>
    %62 = vector.broadcast %61 : vector<1x16xf32> to vector<128x16xf32>
    %63 = arith.mulf %60, %62 : vector<128x16xf32>
    %c0_21 = arith.constant 0 : index
    %c0_22 = arith.constant 0 : index
    %64 = vector.load %arg4[%c0_21, %c0_22] : memref<1x16xf32, #tpu.memory_space<vmem>>, vector<1x16xf32>
    %65 = vector.broadcast %64 : vector<1x16xf32> to vector<128x16xf32>
    %66 = arith.addf %63, %65 : vector<128x16xf32>
    %cst_23 = arith.constant 0.000000e+00 : f32
    %67 = vector.broadcast %cst_23 : f32 to vector<128x16xf32>
    %68 = arith.maximumf %66, %67 : vector<128x16xf32>
    %69 = vector.shape_cast %68 : vector<128x16xf32> to vector<2x8x8x16xf32>
    %cst_24 = arith.constant 0.000000e+00 : f32
    %70 = vector.broadcast %cst_24 : f32 to vector<72x32xf32>
    %71 = vector.extract_strided_slice %69 {offsets = [0, 0, 0, 0], sizes = [2, 6, 6, 16], strides = [1, 1, 1, 1]} : vector<2x8x8x16xf32> to vector<2x6x6x16xf32>
    %72 = vector.shape_cast %71 : vector<2x6x6x16xf32> to vector<72x16xf32>
    %73 = vector.extract_strided_slice %69 {offsets = [0, 0, 1, 0], sizes = [2, 6, 6, 16], strides = [1, 1, 1, 1]} : vector<2x8x8x16xf32> to vector<2x6x6x16xf32>
    %74 = vector.shape_cast %73 : vector<2x6x6x16xf32> to vector<72x16xf32>
    %75 = vector.extract_strided_slice %69 {offsets = [0, 0, 2, 0], sizes = [2, 6, 6, 16], strides = [1, 1, 1, 1]} : vector<2x8x8x16xf32> to vector<2x6x6x16xf32>
    %76 = vector.shape_cast %75 : vector<2x6x6x16xf32> to vector<72x16xf32>
    %77 = tpu.concatenate %72, %74, %76 in 1 : vector<72x16xf32>, vector<72x16xf32>, vector<72x16xf32> -> vector<72x48xf32>
    %78 = arith.truncf %77 : vector<72x48xf32> to vector<72x48xbf16>
    %c0_25 = arith.constant 0 : index
    %c0_26 = arith.constant 0 : index
    %c0_27 = arith.constant 0 : index
    %79 = vector.load %arg5[%c0_25, %c0_26, %c0_27] : memref<3x48x32xf32, #tpu.memory_space<vmem>>, vector<1x48x32xf32>
    %80 = vector.shape_cast %79 : vector<1x48x32xf32> to vector<48x32xf32>
    %81 = arith.truncf %80 : vector<48x32xf32> to vector<48x32xbf16>
    %cst_28 = arith.constant dense<0.000000e+00> : vector<72x32xf32>
    %82 = tpu.matmul %78, %81, %cst_28 {dimension_numbers = #tpu.dot_dimension_numbers<[1], [0], [0], [1], [0, 0, 1, 1], [], []>} : vector<72x48xbf16>, vector<48x32xbf16>, vector<72x32xf32> -> vector<72x32xf32>
    %83 = arith.addf %70, %82 : vector<72x32xf32>
    %84 = vector.extract_strided_slice %69 {offsets = [0, 1, 0, 0], sizes = [2, 6, 6, 16], strides = [1, 1, 1, 1]} : vector<2x8x8x16xf32> to vector<2x6x6x16xf32>
    %85 = vector.shape_cast %84 : vector<2x6x6x16xf32> to vector<72x16xf32>
    %86 = vector.extract_strided_slice %69 {offsets = [0, 1, 1, 0], sizes = [2, 6, 6, 16], strides = [1, 1, 1, 1]} : vector<2x8x8x16xf32> to vector<2x6x6x16xf32>
    %87 = vector.shape_cast %86 : vector<2x6x6x16xf32> to vector<72x16xf32>
    %88 = vector.extract_strided_slice %69 {offsets = [0, 1, 2, 0], sizes = [2, 6, 6, 16], strides = [1, 1, 1, 1]} : vector<2x8x8x16xf32> to vector<2x6x6x16xf32>
    %89 = vector.shape_cast %88 : vector<2x6x6x16xf32> to vector<72x16xf32>
    %90 = tpu.concatenate %85, %87, %89 in 1 : vector<72x16xf32>, vector<72x16xf32>, vector<72x16xf32> -> vector<72x48xf32>
    %91 = arith.truncf %90 : vector<72x48xf32> to vector<72x48xbf16>
    %c1_29 = arith.constant 1 : index
    %c0_30 = arith.constant 0 : index
    %c0_31 = arith.constant 0 : index
    %92 = vector.load %arg5[%c1_29, %c0_30, %c0_31] : memref<3x48x32xf32, #tpu.memory_space<vmem>>, vector<1x48x32xf32>
    %93 = vector.shape_cast %92 : vector<1x48x32xf32> to vector<48x32xf32>
    %94 = arith.truncf %93 : vector<48x32xf32> to vector<48x32xbf16>
    %cst_32 = arith.constant dense<0.000000e+00> : vector<72x32xf32>
    %95 = tpu.matmul %91, %94, %cst_32 {dimension_numbers = #tpu.dot_dimension_numbers<[1], [0], [0], [1], [0, 0, 1, 1], [], []>} : vector<72x48xbf16>, vector<48x32xbf16>, vector<72x32xf32> -> vector<72x32xf32>
    %96 = arith.addf %83, %95 : vector<72x32xf32>
    %97 = vector.extract_strided_slice %69 {offsets = [0, 2, 0, 0], sizes = [2, 6, 6, 16], strides = [1, 1, 1, 1]} : vector<2x8x8x16xf32> to vector<2x6x6x16xf32>
    %98 = vector.shape_cast %97 : vector<2x6x6x16xf32> to vector<72x16xf32>
    %99 = vector.extract_strided_slice %69 {offsets = [0, 2, 1, 0], sizes = [2, 6, 6, 16], strides = [1, 1, 1, 1]} : vector<2x8x8x16xf32> to vector<2x6x6x16xf32>
    %100 = vector.shape_cast %99 : vector<2x6x6x16xf32> to vector<72x16xf32>
    %101 = vector.extract_strided_slice %69 {offsets = [0, 2, 2, 0], sizes = [2, 6, 6, 16], strides = [1, 1, 1, 1]} : vector<2x8x8x16xf32> to vector<2x6x6x16xf32>
    %102 = vector.shape_cast %101 : vector<2x6x6x16xf32> to vector<72x16xf32>
    %103 = tpu.concatenate %98, %100, %102 in 1 : vector<72x16xf32>, vector<72x16xf32>, vector<72x16xf32> -> vector<72x48xf32>
    %104 = arith.truncf %103 : vector<72x48xf32> to vector<72x48xbf16>
    %c2_33 = arith.constant 2 : index
    %c0_34 = arith.constant 0 : index
    %c0_35 = arith.constant 0 : index
    %105 = vector.load %arg5[%c2_33, %c0_34, %c0_35] : memref<3x48x32xf32, #tpu.memory_space<vmem>>, vector<1x48x32xf32>
    %106 = vector.shape_cast %105 : vector<1x48x32xf32> to vector<48x32xf32>
    %107 = arith.truncf %106 : vector<48x32xf32> to vector<48x32xbf16>
    %cst_36 = arith.constant dense<0.000000e+00> : vector<72x32xf32>
    %108 = tpu.matmul %104, %107, %cst_36 {dimension_numbers = #tpu.dot_dimension_numbers<[1], [0], [0], [1], [0, 0, 1, 1], [], []>} : vector<72x48xbf16>, vector<48x32xbf16>, vector<72x32xf32> -> vector<72x32xf32>
    %109 = arith.addf %96, %108 : vector<72x32xf32>
    %cst_37 = arith.constant dense<0.000000e+00> : vector<32xf32>
    %110 = vector.multi_reduction <add>, %109, %cst_37 [0] : vector<72x32xf32> to vector<32xf32>
    %111 = vector.shape_cast %110 : vector<32xf32> to vector<1x32xf32>
    %112 = arith.mulf %109, %109 : vector<72x32xf32>
    %cst_38 = arith.constant dense<0.000000e+00> : vector<32xf32>
    %113 = vector.multi_reduction <add>, %112, %cst_38 [0] : vector<72x32xf32> to vector<32xf32>
    %114 = vector.shape_cast %113 : vector<32xf32> to vector<1x32xf32>
    %cst_39 = arith.constant 0.013888889 : f32
    %115 = vector.broadcast %cst_39 : f32 to vector<1x32xf32>
    %116 = arith.mulf %111, %115 : vector<1x32xf32>
    %cst_40 = arith.constant 0.013888889 : f32
    %117 = vector.broadcast %cst_40 : f32 to vector<1x32xf32>
    %118 = arith.mulf %114, %117 : vector<1x32xf32>
    %119 = arith.mulf %116, %116 : vector<1x32xf32>
    %120 = arith.subf %118, %119 : vector<1x32xf32>
    %cst_41 = arith.constant 0.000000e+00 : f32
    %121 = vector.broadcast %cst_41 : f32 to vector<1x32xf32>
    %122 = arith.maximumf %120, %121 : vector<1x32xf32>
    %123 = vector.broadcast %116 : vector<1x32xf32> to vector<72x32xf32>
    %124 = arith.subf %109, %123 : vector<72x32xf32>
    %cst_42 = arith.constant 9.99999974E-6 : f32
    %125 = vector.broadcast %cst_42 : f32 to vector<1x32xf32>
    %126 = arith.addf %122, %125 : vector<1x32xf32>
    %127 = math.rsqrt %126 : vector<1x32xf32>
    %128 = vector.broadcast %127 : vector<1x32xf32> to vector<72x32xf32>
    %129 = arith.mulf %124, %128 : vector<72x32xf32>
    %c0_43 = arith.constant 0 : index
    %c0_44 = arith.constant 0 : index
    %130 = vector.load %arg6[%c0_43, %c0_44] : memref<1x32xf32, #tpu.memory_space<vmem>>, vector<1x32xf32>
    %131 = vector.broadcast %130 : vector<1x32xf32> to vector<72x32xf32>
    %132 = arith.mulf %129, %131 : vector<72x32xf32>
    %c0_45 = arith.constant 0 : index
    %c0_46 = arith.constant 0 : index
    %133 = vector.load %arg7[%c0_45, %c0_46] : memref<1x32xf32, #tpu.memory_space<vmem>>, vector<1x32xf32>
    %134 = vector.broadcast %133 : vector<1x32xf32> to vector<72x32xf32>
    %135 = arith.addf %132, %134 : vector<72x32xf32>
    %cst_47 = arith.constant 0.000000e+00 : f32
    %136 = vector.broadcast %cst_47 : f32 to vector<72x32xf32>
    %137 = arith.maximumf %135, %136 : vector<72x32xf32>
    %138 = tpu.iota {dimensions = array<i32: 0>} : vector<32x32xi32>
    %139 = tpu.iota {dimensions = array<i32: 1>} : vector<32x32xi32>
    %140 = arith.cmpi eq, %138, %139 : vector<32x32xi32>
    %141 = arith.extui %140 : vector<32x32xi1> to vector<32x32xi32>
    %142 = arith.sitofp %141 : vector<32x32xi32> to vector<32x32xf32>
    %143 = vector.extract_strided_slice %137 {offsets = [0, 0], sizes = [36, 32], strides = [1, 1]} : vector<72x32xf32> to vector<36x32xf32>
    %cst_48 = arith.constant dense<0.000000e+00> : vector<32x36xf32>
    %144 = tpu.matmul %142, %143, %cst_48 {dimension_numbers = #tpu.dot_dimension_numbers<[1], [1], [0], [0], [0, 0, 1, 0], [], []>} : vector<32x32xf32>, vector<36x32xf32>, vector<32x36xf32> -> vector<32x36xf32>
    %c0_49 = arith.constant 0 : index
    %c0_50 = arith.constant 0 : index
    %c0_51 = arith.constant 0 : index
    %145 = vector.load %arg8[%c0_49, %c0_50, %c0_51] : memref<2x32x36xf32, #tpu.memory_space<vmem>>, vector<1x32x36xf32>
    %146 = vector.shape_cast %145 : vector<1x32x36xf32> to vector<32x36xf32>
    %147 = vector.shape_cast %144 : vector<32x36xf32> to vector<1x32x36xf32>
    tpu.vector_store %arg8[%c0_49, %c0_50, %c0_51], %147 {strides = array<i32>} : memref<2x32x36xf32, #tpu.memory_space<vmem>>, vector<1x32x36xf32>,
    %148 = vector.extract_strided_slice %137 {offsets = [36, 0], sizes = [36, 32], strides = [1, 1]} : vector<72x32xf32> to vector<36x32xf32>
    %cst_52 = arith.constant dense<0.000000e+00> : vector<32x36xf32>
    %149 = tpu.matmul %142, %148, %cst_52 {dimension_numbers = #tpu.dot_dimension_numbers<[1], [1], [0], [0], [0, 0, 1, 0], [], []>} : vector<32x32xf32>, vector<36x32xf32>, vector<32x36xf32> -> vector<32x36xf32>
    %c1_53 = arith.constant 1 : index
    %c0_54 = arith.constant 0 : index
    %c0_55 = arith.constant 0 : index
    %150 = vector.load %arg8[%c1_53, %c0_54, %c0_55] : memref<2x32x36xf32, #tpu.memory_space<vmem>>, vector<1x32x36xf32>
    %151 = vector.shape_cast %150 : vector<1x32x36xf32> to vector<32x36xf32>
    %152 = vector.shape_cast %149 : vector<32x36xf32> to vector<1x32x36xf32>
    tpu.vector_store %arg8[%c1_53, %c0_54, %c0_55], %152 {strides = array<i32>} : memref<2x32x36xf32, #tpu.memory_space<vmem>>, vector<1x32x36xf32>,
    return
  }
  func.func @transform_0(%arg0: i32) -> (i32, i32, i32, i32) {
    %c0_i32 = arith.constant 0 : i32
    %c0_i32_0 = arith.constant 0 : i32
    %c0_i32_1 = arith.constant 0 : i32
    %c0_i32_2 = arith.constant 0 : i32
    %c0_i32_3 = arith.constant 0 : i32
    return %c0_i32, %c0_i32_0, %c0_i32_1, %c0_i32_2 : i32, i32, i32, i32
  }
  func.func @transform_1(%arg0: i32) -> (i32, i32, i32) {
    %c0_i32 = arith.constant 0 : i32
    %c0_i32_0 = arith.constant 0 : i32
    %c0_i32_1 = arith.constant 0 : i32
    %c0_i32_2 = arith.constant 0 : i32
    return %c0_i32, %c0_i32_0, %c0_i32_1 : i32, i32, i32
  }
  func.func @transform_2(%arg0: i32) -> (i32, i32) {
    %c0_i32 = arith.constant 0 : i32
    %c0_i32_0 = arith.constant 0 : i32
    %c0_i32_1 = arith.constant 0 : i32
    return %c0_i32, %c0_i32_0 : i32, i32
  }
  func.func @transform_3(%arg0: i32) -> (i32, i32) {
    %c0_i32 = arith.constant 0 : i32
    %c0_i32_0 = arith.constant 0 : i32
    %c0_i32_1 = arith.constant 0 : i32
    return %c0_i32, %c0_i32_0 : i32, i32
  }
  func.func @transform_4(%arg0: i32) -> (i32, i32, i32) {
    %c0_i32 = arith.constant 0 : i32
    %c0_i32_0 = arith.constant 0 : i32
    %c0_i32_1 = arith.constant 0 : i32
    %c0_i32_2 = arith.constant 0 : i32
    return %c0_i32, %c0_i32_0, %c0_i32_1 : i32, i32, i32
  }
  func.func @transform_5(%arg0: i32) -> (i32, i32) {
    %c0_i32 = arith.constant 0 : i32
    %c0_i32_0 = arith.constant 0 : i32
    %c0_i32_1 = arith.constant 0 : i32
    return %c0_i32, %c0_i32_0 : i32, i32
  }
  func.func @transform_6(%arg0: i32) -> (i32, i32) {
    %c0_i32 = arith.constant 0 : i32
    %c0_i32_0 = arith.constant 0 : i32
    %c0_i32_1 = arith.constant 0 : i32
    return %c0_i32, %c0_i32_0 : i32, i32
  }
  func.func @transform_7(%arg0: i32) -> (i32, i32, i32) {
    %c0_i32 = arith.constant 0 : i32
    %c0_i32_0 = arith.constant 0 : i32
    %c0_i32_1 = arith.constant 0 : i32
    %c0_i32_2 = arith.constant 0 : i32
    return %c0_i32, %c0_i32_0, %c0_i32_1 : i32, i32, i32
  }
}

</mosaic_0001>

<llo_original>
// kernel: cnn_forward.3
$region0: #{cnn_forward.3}
  #allocation0 [shape = 'u32[]', space=smem, size = 0x4, offset = 0x4, fixed_abs, tag = 'smem constant byte address 0x4 - core index']
  #allocation1 [shape = 'u32[144,128]{1,0:T(1,128)}', space=vmem, size = 0x12000, scoped, tag = 'internal scratch']
  %s0 = inlined_call_operand.vmem [shape: f32[2,32], index: 0, kind: input, shape index: {}]
  %s1 = inlined_call_operand.vmem [shape: f32[2,36,32], index: 1, kind: input, shape index: {}]
  %s2 = inlined_call_operand.vmem [shape: f32[32,128], index: 2, kind: input, shape index: {}]
  %s3 = inlined_call_operand.vmem [shape: f32[1,128], index: 3, kind: input, shape index: {}]
  %s4 = inlined_call_operand.vmem [shape: f32[2,37,128], index: 4, kind: output, shape index: {}]
  %s5 = sld [smem:[#allocation0]]
  $region26: #{cnn_forward.3} parent=0
    _
  %s7 = ssub.s32 1, %s5
  %s8 = scalar_select 0, %s7, %s5
  // Predicated region
  $region2: #{cnn_forward.3} parent=0 // pred_check
    _
  $region3: #{cnn_forward.3} parent=0 // pred_check_branch
    %10 = sbr.rel (0) target = $region5
  $region4: #{cnn_forward.3} parent=0 // pred_region
    _
  $region5: #{cnn_forward.3} parent=0 // pred_fallthru
    _
  // Predicated region
  $region6: #{cnn_forward.3} parent=0 // pred_check
    _
  $region7: #{cnn_forward.3} parent=0 // pred_check_branch
    %12 = sbr.rel (0) target = $region9
  $region8: #{cnn_forward.3} parent=0 // pred_region
    _
  $region9: #{cnn_forward.3} parent=0 // pred_fallthru
    _
  // Predicated region
  $region10: #{cnn_forward.3} parent=0 // pred_check
    _
  $region11: #{cnn_forward.3} parent=0 // pred_check_branch
    %14 = sbr.rel (0) target = $region13
  $region12: #{cnn_forward.3} parent=0 // pred_region
    _
  $region13: #{cnn_forward.3} parent=0 // pred_fallthru
    _
  // Predicated region
  $region14: #{cnn_forward.3} parent=0 // pred_check
    _
  $region15: #{cnn_forward.3} parent=0 // pred_check_branch
    %16 = sbr.rel (0) target = $region17
  $region16: #{cnn_forward.3} parent=0 // pred_region
    _
  $region17: #{cnn_forward.3} parent=0 // pred_fallthru
    _
  %v18 = vld [vmem:[%s2] sm:$0xff]
  %v19 = vld [vmem:[%s2 + $0x8] sm:$0xff]
  %v20 = vld [vmem:[%s2 + $0x10] sm:$0xff]
  %v21 = vld [vmem:[%s2 + $0x18] sm:$0xff]
  %v22 = vpack.c.bf16 %v19, %v18
  %v23 = vpack.c.bf16 %v21, %v20
  %v24 = vld [vmem:[%s3] sm:$0x1]
  %v25 = vld [vmem:[%s1] sm:$0xff]
  %v26 = vld [vmem:[%s1 + $0x8] sm:$0xff]
  %v27 = vld [vmem:[%s1 + $0x10] sm:$0xff]
  %v28 = vld [vmem:[%s1 + $0x18] sm:$0xff]
  %v29 = vld [vmem:[%s1 + $0x20] sm:$0xf]
  %v30 = vld [vmem:[%s1 + $0x28] sm:$0xff]
  %v31 = vld [vmem:[%s1 + $0x30] sm:$0xff]
  %v32 = vld [vmem:[%s1 + $0x38] sm:$0xff]
  %v33 = vld [vmem:[%s1 + $0x40] sm:$0xff]
  %v34 = vld [vmem:[%s1 + $0x48] sm:$0xf]
  %v45 = vcombine.high %v25, %v25
  %v46 = vcombine.high %v26, %v26
  %v47 = vcombine.high %v27, %v27
  %v48 = vcombine.high %v28, %v28
  %v49 = vcombine.high %v30, %v30
  %v50 = vcombine.high %v31, %v31
  %v51 = vcombine.high %v32, %v32
  %v52 = vcombine.high %v33, %v33
  %v53 = vcombine.low %v25, %v45
  %v54 = vcombine.low %v26, %v46
  %v55 = vcombine.low %v27, %v47
  %v56 = vcombine.low %v28, %v48
  %v57 = vcombine.low %v29, %v30
  %v58 = vcombine.low %v49, %v31
  %v59 = vcombine.low %v50, %v32
  %v60 = vcombine.low %v51, %v33
  %v61 = vcombine.low %v52, %v34
  %v71 = vpack.c.bf16 %v54, %v53
  %v72 = vpack.c.bf16 %v56, %v55
  %v73 = vpack.c.bf16 %v58, %v57
  %v74 = vpack.c.bf16 %v60, %v59
  %v75 = vpack.c.bf16 %v61, %v61
  %v77 = vlaneseq
  %v78 = vshrl.u32 %v77, 7
  %v79 = vsub.s32 0, %v78
  %v80 = vrot.slane %v24, %v79
  %vm82 = vcmask 261120
  %v84 = vsel %vm82, %v71, 0
  %v87 = vsel %vm82, %v72, 0
  %v90 = vsel %vm82, %v73, 0
  %v93 = vsel %vm82, %v74, 0
  %v96 = vsel %vm82, %v75, 0
  %98 = vmatprep.subr.bf16.mxu0 0
  %99 = vmatpush1.bf16.msra.mxu0 %v22
  %100 = vmatprep.subr.bf16.mxu0 0
  %101 = vmatpush1.bf16.msra.mxu0 %v23
  %102 = vmatprep.subr.bf16.mxu0 0
  %103 = vmatpush1.bf16.msra.mxu0 0
  %104 = vmatprep.subr.bf16.mxu0 0
  %105 = vmatpush1.bf16.msra.mxu0 0
  %106 = vmatprep.subr.bf16.mxu0 0
  %107 = vmatpush1.bf16.msra.mxu0 0
  %108 = vmatprep.subr.bf16.mxu0 0
  %109 = vmatpush1.bf16.msra.mxu0 0
  %110 = vmatprep.subr.bf16.mxu0 0
  %111 = vmatpush1.bf16.msra.mxu0 0
  %112 = vmatprep.subr.bf16.mxu0 0
  %113 = vmatpush1.bf16.msra.mxu0 0
  %114 = vmatprep.subr.bf16.mxu0 0
  %115 = vmatpush1.bf16.msra.mxu0 0
  %116 = vmatprep.subr.bf16.mxu0 0
  %117 = vmatpush1.bf16.msra.mxu0 0
  %118 = vmatprep.subr.bf16.mxu0 0
  %119 = vmatpush1.bf16.msra.mxu0 0
  %120 = vmatprep.subr.bf16.mxu0 0
  %121 = vmatpush1.bf16.msra.mxu0 0
  %122 = vmatprep.subr.bf16.mxu0 0
  %123 = vmatpush1.bf16.msra.mxu0 0
  %124 = vmatprep.subr.bf16.mxu0 0
  %125 = vmatpush1.bf16.msra.mxu0 0
  %126 = vmatprep.subr.bf16.mxu0 0
  %127 = vmatpush1.bf16.msra.mxu0 0
  %128 = vmatprep.subr.bf16.mxu0 0
  %129 = vmatpush1.bf16.msra.mxu0 0
  %130 = vmatprep.mubr.bf16.mxu0 0
  %131 = vmatmul.mubr.bf16.gmra.mrb[0].mxu0 %v84
  %v132 = vpop.f32.mrb[0].mxu0
  %v133 = vadd.f32 %v80, %v132
  %v134 = vpop.f32.mrb[0].mxu0
  %v135 = vpop.f32.mrb[0].mxu0
  %v136 = vadd.f32 %v80, %v135
  %v137 = vpop.f32.mrb[0].mxu0
  %138 = vmatprep.mubr.bf16.mxu0 0
  %139 = vmatmul.mubr.bf16.gmra.mrb[0].mxu0 %v87
  %v140 = vpop.f32.mrb[0].mxu0
  %v141 = vadd.f32 %v80, %v140
  %v142 = vpop.f32.mrb[0].mxu0
  %v143 = vpop.f32.mrb[0].mxu0
  %v144 = vadd.f32 %v80, %v143
  %v145 = vpop.f32.mrb[0].mxu0
  %146 = vmatprep.mubr.bf16.mxu0 0
  %147 = vmatmul.mubr.bf16.gmra.mrb[0].mxu0 %v90
  %v148 = vpop.f32.mrb[0].mxu0
  %v149 = vadd.f32 %v80, %v148
  %v150 = vpop.f32.mrb[0].mxu0
  %v151 = vpop.f32.mrb[0].mxu0
  %v152 = vadd.f32 %v80, %v151
  %v153 = vpop.f32.mrb[0].mxu0
  %154 = vmatprep.mubr.bf16.mxu0 0
  %155 = vmatmul.mubr.bf16.gmra.mrb[0].mxu0 %v93
  %v156 = vpop.f32.mrb[0].mxu0
  %v157 = vadd.f32 %v80, %v156
  %v158 = vpop.f32.mrb[0].mxu0
  %v159 = vpop.f32.mrb[0].mxu0
  %v160 = vadd.f32 %v80, %v159
  %v161 = vpop.f32.mrb[0].mxu0
  %162 = vmatprep.mubr.bf16.mxu0 0
  %163 = vmatmul.mubr.bf16.gmra.mrb[0].mxu0 %v96
  %v164 = vpop.f32.mrb[0].mxu0
  %v165 = vadd.f32 %v80, %v164
  %v166 = vpop.f32.mrb[0].mxu0
  %v167 = vpop.f32.mrb[0].mxu0
  %v168 = vpop.f32.mrb[0].mxu0
  %169 = vdwg.mxu0
  %v170 = vld [vmem:[%s0] sm:$0x3]
  %v171 = vpack.c.bf16 %v170, %v170
  %v173 = vsel %vm82, %v171, 0
  %175 = vmatprep.subr.bf16.mxu0 0
  %176 = vmatpush1.bf16.msra.mxu0 %v22
  %177 = vmatprep.subr.bf16.mxu0 0
  %178 = vmatpush1.bf16.msra.mxu0 %v23
  %179 = vmatprep.subr.bf16.mxu0 0
  %180 = vmatpush1.bf16.msra.mxu0 0
  %181 = vmatprep.subr.bf16.mxu0 0
  %182 = vmatpush1.bf16.msra.mxu0 0
  %183 = vmatprep.subr.bf16.mxu0 0
  %184 = vmatpush1.bf16.msra.mxu0 0
  %185 = vmatprep.subr.bf16.mxu0 0
  %186 = vmatpush1.bf16.msra.mxu0 0
  %187 = vmatprep.subr.bf16.mxu0 0
  %188 = vmatpush1.bf16.msra.mxu0 0
  %189 = vmatprep.subr.bf16.mxu0 0
  %190 = vmatpush1.bf16.msra.mxu0 0
  %191 = vmatprep.subr.bf16.mxu0 0
  %192 = vmatpush1.bf16.msra.mxu0 0
  %193 = vmatprep.subr.bf16.mxu0 0
  %194 = vmatpush1.bf16.msra.mxu0 0
  %195 = vmatprep.subr.bf16.mxu0 0
  %196 = vmatpush1.bf16.msra.mxu0 0
  %197 = vmatprep.subr.bf16.mxu0 0
  %198 = vmatpush1.bf16.msra.mxu0 0
  %199 = vmatprep.subr.bf16.mxu0 0
  %200 = vmatpush1.bf16.msra.mxu0 0
  %201 = vmatprep.subr.bf16.mxu0 0
  %202 = vmatpush1.bf16.msra.mxu0 0
  %203 = vmatprep.subr.bf16.mxu0 0
  %204 = vmatpush1.bf16.msra.mxu0 0
  %205 = vmatprep.subr.bf16.mxu0 0
  %206 = vmatpush1.bf16.msra.mxu0 0
  %207 = vmatprep.mubr.bf16.mxu0 0
  %208 = vmatmul.mubr.bf16.gmra.mrb[0].mxu0 %v173
  %v209 = vpop.f32.mrb[0].mxu0
  %v210 = vadd.f32 %v80, %v209
  %v211 = vpop.f32.mrb[0].mxu0
  %v212 = vpop.f32.mrb[0].mxu0
  %v213 = vpop.f32.mrb[0].mxu0
  %214 = vdwg.mxu0
  %v217 = vunpack.c.l.s4 1966171168
  %v218 = vunpack.c.0.s8 %v217
  %v219 = vlaneseq
  %v220 = vshrl.u32 %v219, 7
  %v221 = vsub.s32 %v218, %v220
  %v222 = vrot.slane %v210, %v221
  %v223 = vcombine.high %v222, %v222
  %v225 = vunpack.c.l.s4 1966171168
  %v226 = vunpack.c.0.s8 %v225
  %v227 = vlaneseq
  %v228 = vshrl.u32 %v227, 7
  %v229 = vsub.s32 %v226, %v228
  %v230 = vrot.slane %v222, %v229
  %v232 = vunpack.c.l.s4 1966171168
  %v233 = vunpack.c.0.s8 %v232
  %v234 = vlaneseq
  %v235 = vshrl.u32 %v234, 7
  %v236 = vsub.s32 %v233, %v235
  %v237 = vrot.slane %v223, %v236
  %240 = vst [vmem:[%s4] sm:$0x1] %v230
  %241 = vst [vmem:[%s4 + $0x28] sm:$0x1] %v237
  %v251 = vcombine.high %v133, %v133
  %v252 = vcombine.high %v136, %v136
  %v253 = vcombine.high %v141, %v141
  %v254 = vcombine.high %v144, %v144
  %v255 = vcombine.high %v149, %v149
  %v256 = vcombine.high %v152, %v152
  %v257 = vcombine.high %v157, %v157
  %v258 = vcombine.high %v160, %v160
  %v259 = vcombine.high %v165, %v165
  %v261 = vcombine.low %v133, %v251
  %v262 = vcombine.low %v136, %v252
  %v263 = vcombine.low %v141, %v253
  %v264 = vcombine.low %v144, %v254
  %v265 = vcombine.low %v255, %v152
  %v266 = vcombine.low %v256, %v157
  %v267 = vcombine.low %v257, %v160
  %v268 = vcombine.low %v258, %v165
  %277 = vst [vmem:[%s4 + $0x1] sm:$0xff] %v261
  %278 = vst [vmem:[%s4 + $0x9] sm:$0xff] %v262
  %279 = vst [vmem:[%s4 + $0x11] sm:$0xff] %v263
  %280 = vst [vmem:[%s4 + $0x19] sm:$0xff] %v264
  %281 = vst [vmem:[%s4 + $0x21] sm:$0xf] %v149
  %282 = vst [vmem:[%s4 + $0x29] sm:$0xff] %v265
  %283 = vst [vmem:[%s4 + $0x31] sm:$0xff] %v266
  %284 = vst [vmem:[%s4 + $0x39] sm:$0xff] %v267
  %285 = vst [vmem:[%s4 + $0x41] sm:$0xff] %v268
  %286 = vst [vmem:[%s4 + $0x49] sm:$0xf] %v259
  // Predicated region
  $region18: #{cnn_forward.3} parent=0 // pred_check
    _
  $region19: #{cnn_forward.3} parent=0 // pred_check_branch
    %288 = sbr.rel (0) target = $region21
  $region20: #{cnn_forward.3} parent=0 // pred_region
    _
  $region21: #{cnn_forward.3} parent=0 // pred_fallthru
    _
  // Predicated region
  $region22: #{cnn_forward.3} parent=0 // pred_check
    _
  $region23: #{cnn_forward.3} parent=0 // pred_check_branch
    %290 = sbr.rel (0) target = $region25
  $region24: #{cnn_forward.3} parent=0 // pred_region
    _
  $region25: #{cnn_forward.3} parent=0 // pred_fallthru
    _

// kernel: cnn_forward.2
$region0: #{cnn_forward.2}
  #allocation0 [shape = 'u32[]', space=smem, size = 0x4, offset = 0x4, fixed_abs, tag = 'smem constant byte address 0x4 - core index']
  #allocation1 [shape = 'u32[144,128]{1,0:T(1,128)}', space=vmem, size = 0x12000, scoped, tag = 'internal scratch']
  %s0 = inlined_call_operand.vmem [shape: f32[2,10,10,32], index: 0, kind: input, shape index: {}]
  %s1 = inlined_call_operand.vmem [shape: f32[3,96,16], index: 1, kind: input, shape index: {}]
  %s2 = inlined_call_operand.vmem [shape: f32[1,16], index: 2, kind: input, shape index: {}]
  %s3 = inlined_call_operand.vmem [shape: f32[1,16], index: 3, kind: input, shape index: {}]
  %s4 = inlined_call_operand.vmem [shape: f32[3,48,32], index: 4, kind: input, shape index: {}]
  %s5 = inlined_call_operand.vmem [shape: f32[1,32], index: 5, kind: input, shape index: {}]
  %s6 = inlined_call_operand.vmem [shape: f32[1,32], index: 6, kind: input, shape index: {}]
  %s7 = inlined_call_operand.vmem [shape: f32[2,32,36], index: 7, kind: output, shape index: {}]
  %s8 = sld [smem:[#allocation0]]
  $region38: #{cnn_forward.2} parent=0
    _
  %s10 = ssub.s32 1, %s8
  %s11 = scalar_select 0, %s10, %s8
  // Predicated region
  $region2: #{cnn_forward.2} parent=0 // pred_check
    _
  $region3: #{cnn_forward.2} parent=0 // pred_check_branch
    %13 = sbr.rel (0) target = $region5
  $region4: #{cnn_forward.2} parent=0 // pred_region
    _
  $region5: #{cnn_forward.2} parent=0 // pred_fallthru
    _
  // Predicated region
  $region6: #{cnn_forward.2} parent=0 // pred_check
    _
  $region7: #{cnn_forward.2} parent=0 // pred_check_branch
    %15 = sbr.rel (0) target = $region9
  $region8: #{cnn_forward.2} parent=0 // pred_region
    _
  $region9: #{cnn_forward.2} parent=0 // pred_fallthru
    _
  // Predicated region
  $region10: #{cnn_forward.2} parent=0 // pred_check
    _
  $region11: #{cnn_forward.2} parent=0 // pred_check_branch
    %17 = sbr.rel (0) target = $region13
  $region12: #{cnn_forward.2} parent=0 // pred_region
    _
  $region13: #{cnn_forward.2} parent=0 // pred_fallthru
    _
  // Predicated region
  $region14: #{cnn_forward.2} parent=0 // pred_check
    _
  $region15: #{cnn_forward.2} parent=0 // pred_check_branch
    %19 = sbr.rel (0) target = $region17
  $region16: #{cnn_forward.2} parent=0 // pred_region
    _
  $region17: #{cnn_forward.2} parent=0 // pred_fallthru
    _
  // Predicated region
  $region18: #{cnn_forward.2} parent=0 // pred_check
    _
  $region19: #{cnn_forward.2} parent=0 // pred_check_branch
    %21 = sbr.rel (0) target = $region21
  $region20: #{cnn_forward.2} parent=0 // pred_region
    _
  $region21: #{cnn_forward.2} parent=0 // pred_fallthru
    _
  // Predicated region
  $region22: #{cnn_forward.2} parent=0 // pred_check
    _
  $region23: #{cnn_forward.2} parent=0 // pred_check_branch
    %23 = sbr.rel (0) target = $region25
  $region24: #{cnn_forward.2} parent=0 // pred_region
    _
  $region25: #{cnn_forward.2} parent=0 // pred_fallthru
    _
  // Predicated region
  $region26: #{cnn_forward.2} parent=0 // pred_check
    _
  $region27: #{cnn_forward.2} parent=0 // pred_check_branch
    %25 = sbr.rel (0) target = $region29
  $region28: #{cnn_forward.2} parent=0 // pred_region
    _
  $region29: #{cnn_forward.2} parent=0 // pred_fallthru
    _
  %v27 = vld [vmem:[%s0] sm:$0xff]
  %v28 = vld [vmem:[%s0 + $0x8] sm:$0x3]
  %v29 = vld [vmem:[%s0 + $0x10] sm:$0xff]
  %v30 = vld [vmem:[%s0 + $0x18] sm:$0x3]
  %v31 = vld [vmem:[%s0 + $0x20] sm:$0xff]
  %v32 = vld [vmem:[%s0 + $0x28] sm:$0x3]
  %v33 = vld [vmem:[%s0 + $0x30] sm:$0xff]
  %v34 = vld [vmem:[%s0 + $0x38] sm:$0x3]
  %v35 = vld [vmem:[%s0 + $0x40] sm:$0xff]
  %v36 = vld [vmem:[%s0 + $0x48] sm:$0x3]
  %v37 = vld [vmem:[%s0 + $0x50] sm:$0xff]
  %v38 = vld [vmem:[%s0 + $0x58] sm:$0x3]
  %v39 = vld [vmem:[%s0 + $0x60] sm:$0xff]
  %v40 = vld [vmem:[%s0 + $0x68] sm:$0x3]
  %v41 = vld [vmem:[%s0 + $0x70] sm:$0xff]
  %v42 = vld [vmem:[%s0 + $0x78] sm:$0x3]
  %v43 = vld [vmem:[%s0 + $0x80] sm:$0xff]
  %v44 = vld [vmem:[%s0 + $0x88] sm:$0x3]
  %v45 = vld [vmem:[%s0 + $0x90] sm:$0xff]
  %v46 = vld [vmem:[%s0 + $0x98] sm:$0x3]
  %v47 = vld [vmem:[%s0 + $0xa0] sm:$0xff]
  %v48 = vld [vmem:[%s0 + $0xa8] sm:$0x3]
  %v49 = vld [vmem:[%s0 + $0xb0] sm:$0xff]
  %v50 = vld [vmem:[%s0 + $0xb8] sm:$0x3]
  %v51 = vld [vmem:[%s0 + $0xc0] sm:$0xff]
  %v52 = vld [vmem:[%s0 + $0xc8] sm:$0x3]
  %v53 = vld [vmem:[%s0 + $0xd0] sm:$0xff]
  %v54 = vld [vmem:[%s0 + $0xd8] sm:$0x3]
  %v55 = vld [vmem:[%s0 + $0xe0] sm:$0xff]
  %v56 = vld [vmem:[%s0 + $0xe8] sm:$0x3]
  %v57 = vld [vmem:[%s0 + $0xf0] sm:$0xff]
  %v58 = vld [vmem:[%s0 + $0xf8] sm:$0x3]
  %v59 = vld [vmem:[%s0 + $0x100] sm:$0xff]
  %v60 = vld [vmem:[%s0 + $0x108] sm:$0x3]
  %v61 = vld [vmem:[%s0 + $0x110] sm:$0xff]
  %v62 = vld [vmem:[%s0 + $0x118] sm:$0x3]
  %v63 = vld [vmem:[%s0 + $0x120] sm:$0xff]
  %v64 = vld [vmem:[%s0 + $0x128] sm:$0x3]
  %v65 = vld [vmem:[%s0 + $0x130] sm:$0xff]
  %v66 = vld [vmem:[%s0 + $0x138] sm:$0x3]
  %vm99 = vcmask 1046528
  %v100 = vrot.slane %v27, 1
  %v101 = vrot.slane %v28, 1
  %v102 = vsel %vm99, %v100, %v101
  %v103 = vrot.slane %v29, 1
  %v104 = vrot.slane %v30, 1
  %v105 = vsel %vm99, %v103, %v104
  %v106 = vrot.slane %v31, 1
  %v107 = vrot.slane %v32, 1
  %v108 = vsel %vm99, %v106, %v107
  %v109 = vrot.slane %v33, 1
  %v110 = vrot.slane %v34, 1
  %v111 = vsel %vm99, %v109, %v110
  %v112 = vrot.slane %v35, 1
  %v113 = vrot.slane %v36, 1
  %v114 = vsel %vm99, %v112, %v113
  %v115 = vrot.slane %v37, 1
  %v116 = vrot.slane %v38, 1
  %v117 = vsel %vm99, %v115, %v116
  %v118 = vrot.slane %v39, 1
  %v119 = vrot.slane %v40, 1
  %v120 = vsel %vm99, %v118, %v119
  %v121 = vrot.slane %v41, 1
  %v122 = vrot.slane %v42, 1
  %v123 = vsel %vm99, %v121, %v122
  %v124 = vrot.slane %v47, 1
  %v125 = vrot.slane %v48, 1
  %v126 = vsel %vm99, %v124, %v125
  %v127 = vrot.slane %v49, 1
  %v128 = vrot.slane %v50, 1
  %v129 = vsel %vm99, %v127, %v128
  %v130 = vrot.slane %v51, 1
  %v131 = vrot.slane %v52, 1
  %v132 = vsel %vm99, %v130, %v131
  %v133 = vrot.slane %v53, 1
  %v134 = vrot.slane %v54, 1
  %v135 = vsel %vm99, %v133, %v134
  %v136 = vrot.slane %v55, 1
  %v137 = vrot.slane %v56, 1
  %v138 = vsel %vm99, %v136, %v137
  %v139 = vrot.slane %v57, 1
  %v140 = vrot.slane %v58, 1
  %v141 = vsel %vm99, %v139, %v140
  %v142 = vrot.slane %v59, 1
  %v143 = vrot.slane %v60, 1
  %v144 = vsel %vm99, %v142, %v143
  %v145 = vrot.slane %v61, 1
  %v146 = vrot.slane %v62, 1
  %v147 = vsel %vm99, %v145, %v146
  %vm148 = vcmask 1045504
  %v149 = vrot.slane %v27, 2
  %v150 = vrot.slane %v28, 2
  %v151 = vsel %vm148, %v149, %v150
  %v152 = vrot.slane %v29, 2
  %v153 = vrot.slane %v30, 2
  %v154 = vsel %vm148, %v152, %v153
  %v155 = vrot.slane %v31, 2
  %v156 = vrot.slane %v32, 2
  %v157 = vsel %vm148, %v155, %v156
  %v158 = vrot.slane %v33, 2
  %v159 = vrot.slane %v34, 2
  %v160 = vsel %vm148, %v158, %v159
  %v161 = vrot.slane %v35, 2
  %v162 = vrot.slane %v36, 2
  %v163 = vsel %vm148, %v161, %v162
  %v164 = vrot.slane %v37, 2
  %v165 = vrot.slane %v38, 2
  %v166 = vsel %vm148, %v164, %v165
  %v167 = vrot.slane %v39, 2
  %v168 = vrot.slane %v40, 2
  %v169 = vsel %vm148, %v167, %v168
  %v170 = vrot.slane %v41, 2
  %v171 = vrot.slane %v42, 2
  %v172 = vsel %vm148, %v170, %v171
  %v173 = vrot.slane %v47, 2
  %v174 = vrot.slane %v48, 2
  %v175 = vsel %vm148, %v173, %v174
  %v176 = vrot.slane %v49, 2
  %v177 = vrot.slane %v50, 2
  %v178 = vsel %vm148, %v176, %v177
  %v179 = vrot.slane %v51, 2
  %v180 = vrot.slane %v52, 2
  %v181 = vsel %vm148, %v179, %v180
  %v182 = vrot.slane %v53, 2
  %v183 = vrot.slane %v54, 2
  %v184 = vsel %vm148, %v182, %v183
  %v185 = vrot.slane %v55, 2
  %v186 = vrot.slane %v56, 2
  %v187 = vsel %vm148, %v185, %v186
  %v188 = vrot.slane %v57, 2
  %v189 = vrot.slane %v58, 2
  %v190 = vsel %vm148, %v188, %v189
  %v191 = vrot.slane %v59, 2
  %v192 = vrot.slane %v60, 2
  %v193 = vsel %vm148, %v191, %v192
  %v194 = vrot.slane %v61, 2
  %v195 = vrot.slane %v62, 2
  %v196 = vsel %vm148, %v194, %v195
  %197 = vrot.lane.b32.xlu0 %v102, 32
  %v198 = vpop.permute.xlu0 %197
  %199 = vrot.lane.b32.xlu0 %v105, 32
  %v200 = vpop.permute.xlu0 %199
  %201 = vrot.lane.b32.xlu0 %v108, 32
  %v202 = vpop.permute.xlu0 %201
  %203 = vrot.lane.b32.xlu0 %v111, 32
  %v204 = vpop.permute.xlu0 %203
  %205 = vrot.lane.b32.xlu0 %v114, 32
  %v206 = vpop.permute.xlu0 %205
  %207 = vrot.lane.b32.xlu0 %v117, 32
  %v208 = vpop.permute.xlu0 %207
  %209 = vrot.lane.b32.xlu0 %v120, 32
  %v210 = vpop.permute.xlu0 %209
  %211 = vrot.lane.b32.xlu0 %v123, 32
  %v212 = vpop.permute.xlu0 %211
  %213 = vrot.lane.b32.xlu0 %v126, 32
  %v214 = vpop.permute.xlu0 %213
  %215 = vrot.lane.b32.xlu0 %v129, 32
  %v216 = vpop.permute.xlu0 %215
  %217 = vrot.lane.b32.xlu0 %v132, 32
  %v218 = vpop.permute.xlu0 %217
  %219 = vrot.lane.b32.xlu0 %v135, 32
  %v220 = vpop.permute.xlu0 %219
  %221 = vrot.lane.b32.xlu0 %v138, 32
  %v222 = vpop.permute.xlu0 %221
  %223 = vrot.lane.b32.xlu0 %v141, 32
  %v224 = vpop.permute.xlu0 %223
  %225 = vrot.lane.b32.xlu0 %v144, 32
  %v226 = vpop.permute.xlu0 %225
  %227 = vrot.lane.b32.xlu0 %v147, 32
  %v228 = vpop.permute.xlu0 %227
  %245 = vrot.lane.b32.xlu0 %v151, 64
  %v246 = vpop.permute.xlu0 %245
  %247 = vrot.lane.b32.xlu0 %v154, 64
  %v248 = vpop.permute.xlu0 %247
  %249 = vrot.lane.b32.xlu0 %v157, 64
  %v250 = vpop.permute.xlu0 %249
  %251 = vrot.lane.b32.xlu0 %v160, 64
  %v252 = vpop.permute.xlu0 %251
  %253 = vrot.lane.b32.xlu0 %v163, 64
  %v254 = vpop.permute.xlu0 %253
  %255 = vrot.lane.b32.xlu0 %v166, 64
  %v256 = vpop.permute.xlu0 %255
  %257 = vrot.lane.b32.xlu0 %v169, 64
  %v258 = vpop.permute.xlu0 %257
  %259 = vrot.lane.b32.xlu0 %v172, 64
  %v260 = vpop.permute.xlu0 %259
  %261 = vrot.lane.b32.xlu0 %v175, 64
  %v262 = vpop.permute.xlu0 %261
  %263 = vrot.lane.b32.xlu0 %v178, 64
  %v264 = vpop.permute.xlu0 %263
  %265 = vrot.lane.b32.xlu0 %v181, 64
  %v266 = vpop.permute.xlu0 %265
  %267 = vrot.lane.b32.xlu0 %v184, 64
  %v268 = vpop.permute.xlu0 %267
  %269 = vrot.lane.b32.xlu0 %v187, 64
  %v270 = vpop.permute.xlu0 %269
  %271 = vrot.lane.b32.xlu0 %v190, 64
  %v272 = vpop.permute.xlu0 %271
  %273 = vrot.lane.b32.xlu0 %v193, 64
  %v274 = vpop.permute.xlu0 %273
  %275 = vrot.lane.b32.xlu0 %v196, 64
  %v276 = vpop.permute.xlu0 %275
  %vm293 = vcmask 261120
  %v294 = vsel %vm293, %v27, %v198
  %v295 = vsel %vm293, %v29, %v200
  %v296 = vsel %vm293, %v31, %v202
  %v297 = vsel %vm293, %v33, %v204
  %v298 = vsel %vm293, %v35, %v206
  %v299 = vsel %vm293, %v37, %v208
  %v300 = vsel %vm293, %v39, %v210
  %v301 = vsel %vm293, %v41, %v212
  %v302 = vsel %vm293, %v47, %v214
  %v303 = vsel %vm293, %v49, %v216
  %v304 = vsel %vm293, %v51, %v218
  %v305 = vsel %vm293, %v53, %v220
  %v306 = vsel %vm293, %v55, %v222
  %v307 = vsel %vm293, %v57, %v224
  %v308 = vsel %vm293, %v59, %v226
  %v309 = vsel %vm293, %v61, %v228
  %vm310 = vcmask 523264
  %v311 = vsel %vm310, %v294, %v246
  %v312 = vsel %vm310, %v295, %v248
  %v313 = vsel %vm310, %v296, %v250
  %v314 = vsel %vm310, %v297, %v252
  %v315 = vsel %vm310, %v298, %v254
  %v316 = vsel %vm310, %v299, %v256
  %v317 = vsel %vm310, %v300, %v258
  %v318 = vsel %vm310, %v301, %v260
  %v319 = vsel %vm310, %v302, %v262
  %v320 = vsel %vm310, %v303, %v264
  %v321 = vsel %vm310, %v304, %v266
  %v322 = vsel %vm310, %v305, %v268
  %v323 = vsel %vm310, %v306, %v270
  %v324 = vsel %vm310, %v307, %v272
  %v325 = vsel %vm310, %v308, %v274
  %v326 = vsel %vm310, %v309, %v276
  %v327 = vpack.c.bf16 %v312, %v311
  %v328 = vpack.c.bf16 %v314, %v313
  %v329 = vpack.c.bf16 %v316, %v315
  %v330 = vpack.c.bf16 %v318, %v317
  %v331 = vpack.c.bf16 %v320, %v319
  %v332 = vpack.c.bf16 %v322, %v321
  %v333 = vpack.c.bf16 %v324, %v323
  %v334 = vpack.c.bf16 %v326, %v325
  %v335 = vld [vmem:[%s1] sm:$0xff]
  %v336 = vld [vmem:[%s1 + $0x8] sm:$0xff]
  %v337 = vld [vmem:[%s1 + $0x10] sm:$0xff]
  %v338 = vld [vmem:[%s1 + $0x18] sm:$0xff]
  %v339 = vld [vmem:[%s1 + $0x20] sm:$0xff]
  %v340 = vld [vmem:[%s1 + $0x28] sm:$0xff]
  %v341 = vld [vmem:[%s1 + $0x30] sm:$0xff]
  %v342 = vld [vmem:[%s1 + $0x38] sm:$0xff]
  %v343 = vld [vmem:[%s1 + $0x40] sm:$0xff]
  %v344 = vld [vmem:[%s1 + $0x48] sm:$0xff]
  %v345 = vld [vmem:[%s1 + $0x50] sm:$0xff]
  %v346 = vld [vmem:[%s1 + $0x58] sm:$0xff]
  %v347 = vpack.c.bf16 %v336, %v335
  %v348 = vpack.c.bf16 %v338, %v337
  %v349 = vpack.c.bf16 %v340, %v339
  %v350 = vpack.c.bf16 %v342, %v341
  %v351 = vpack.c.bf16 %v344, %v343
  %v352 = vpack.c.bf16 %v346, %v345
  %v357 = vrot.slane %v43, 1
  %v358 = vrot.slane %v44, 1
  %v359 = vsel %vm99, %v357, %v358
  %v360 = vrot.slane %v63, 1
  %v361 = vrot.slane %v64, 1
  %v362 = vsel %vm99, %v360, %v361
  %v363 = vrot.slane %v43, 2
  %v364 = vrot.slane %v44, 2
  %v365 = vsel %vm148, %v363, %v364
  %v366 = vrot.slane %v63, 2
  %v367 = vrot.slane %v64, 2
  %v368 = vsel %vm148, %v366, %v367
  %369 = vrot.lane.b32.xlu0 %v359, 32
  %v370 = vpop.permute.xlu0 %369
  %371 = vrot.lane.b32.xlu0 %v362, 32
  %v372 = vpop.permute.xlu0 %371
  %375 = vrot.lane.b32.xlu0 %v365, 64
  %v376 = vpop.permute.xlu0 %375
  %377 = vrot.lane.b32.xlu0 %v368, 64
  %v378 = vpop.permute.xlu0 %377
  %v381 = vsel %vm293, %v43, %v370
  %v382 = vsel %vm293, %v63, %v372
  %v383 = vsel %vm310, %v381, %v376
  %v384 = vsel %vm310, %v382, %v378
  %v385 = vpack.c.bf16 %v313, %v312
  %v386 = vpack.c.bf16 %v315, %v314
  %v387 = vpack.c.bf16 %v317, %v316
  %v388 = vpack.c.bf16 %v383, %v318
  %v389 = vpack.c.bf16 %v321, %v320
  %v390 = vpack.c.bf16 %v323, %v322
  %v391 = vpack.c.bf16 %v325, %v324
  %v392 = vpack.c.bf16 %v384, %v326
  %s393 = scalar_lea.vmem %s1, 96
  %v394 = vld [vmem:[%s393] sm:$0xff]
  %v395 = vld [vmem:[%s393 + $0x8] sm:$0xff]
  %v396 = vld [vmem:[%s393 + $0x10] sm:$0xff]
  %v397 = vld [vmem:[%s393 + $0x18] sm:$0xff]
  %v398 = vld [vmem:[%s393 + $0x20] sm:$0xff]
  %v399 = vld [vmem:[%s393 + $0x28] sm:$0xff]
  %v400 = vld [vmem:[%s393 + $0x30] sm:$0xff]
  %v401 = vld [vmem:[%s393 + $0x38] sm:$0xff]
  %v402 = vld [vmem:[%s393 + $0x40] sm:$0xff]
  %v403 = vld [vmem:[%s393 + $0x48] sm:$0xff]
  %v404 = vld [vmem:[%s393 + $0x50] sm:$0xff]
  %v405 = vld [vmem:[%s393 + $0x58] sm:$0xff]
  %v406 = vpack.c.bf16 %v395, %v394
  %v407 = vpack.c.bf16 %v397, %v396
  %v408 = vpack.c.bf16 %v399, %v398
  %v409 = vpack.c.bf16 %v401, %v400
  %v410 = vpack.c.bf16 %v403, %v402
  %v411 = vpack.c.bf16 %v405, %v404
  %vm412 = vcmask 785408
  %v414 = vsel %vm412, %v385, 0
  %v417 = vsel %vm412, %v386, 0
  %v420 = vsel %vm412, %v387, 0
  %v423 = vsel %vm412, %v388, 0
  %v426 = vsel %vm412, %v389, 0
  %v429 = vsel %vm412, %v390, 0
  %v432 = vsel %vm412, %v391, 0
  %v435 = vsel %vm412, %v392, 0
  %437 = vmatprep.subr.bf16.mxu0 0
  %438 = vmatpush1.bf16.msra.mxu0 %v406
  %439 = vmatprep.subr.bf16.mxu0 0
  %440 = vmatpush1.bf16.msra.mxu0 %v407
  %441 = vmatprep.subr.bf16.mxu0 0
  %442 = vmatpush1.bf16.msra.mxu0 %v408
  %443 = vmatprep.subr.bf16.mxu0 0
  %444 = vmatpush1.bf16.msra.mxu0 %v409
  %445 = vmatprep.subr.bf16.mxu0 0
  %446 = vmatpush1.bf16.msra.mxu0 %v410
  %447 = vmatprep.subr.bf16.mxu0 0
  %448 = vmatpush1.bf16.msra.mxu0 %v411
  %449 = vmatprep.subr.bf16.mxu0 0
  %450 = vmatpush1.bf16.msra.mxu0 0
  %451 = vmatprep.subr.bf16.mxu0 0
  %452 = vmatpush1.bf16.msra.mxu0 0
  %453 = vmatprep.subr.bf16.mxu0 0
  %454 = vmatpush1.bf16.msra.mxu0 0
  %455 = vmatprep.subr.bf16.mxu0 0
  %456 = vmatpush1.bf16.msra.mxu0 0
  %457 = vmatprep.subr.bf16.mxu0 0
  %458 = vmatpush1.bf16.msra.mxu0 0
  %459 = vmatprep.subr.bf16.mxu0 0
  %460 = vmatpush1.bf16.msra.mxu0 0
  %461 = vmatprep.subr.bf16.mxu0 0
  %462 = vmatpush1.bf16.msra.mxu0 0
  %463 = vmatprep.subr.bf16.mxu0 0
  %464 = vmatpush1.bf16.msra.mxu0 0
  %465 = vmatprep.subr.bf16.mxu0 0
  %466 = vmatpush1.bf16.msra.mxu0 0
  %467 = vmatprep.subr.bf16.mxu0 0
  %468 = vmatpush1.bf16.msra.mxu0 0
  %469 = vmatprep.mubr.bf16.mxu0 0
  %470 = vmatmul.mubr.bf16.gmra.mrb[0].mxu0 %v414
  %v471 = vpop.f32.mrb[0].mxu0
  %v472 = vadd.f32 0.0, %v471
  %v473 = vpop.f32.mrb[0].mxu0
  %v474 = vpop.f32.mrb[0].mxu0
  %v475 = vadd.f32 0.0, %v474
  %v476 = vpop.f32.mrb[0].mxu0
  %477 = vmatprep.mubr.bf16.mxu0 0
  %478 = vmatmul.mubr.bf16.gmra.mrb[0].mxu0 %v417
  %v479 = vpop.f32.mrb[0].mxu0
  %v480 = vadd.f32 0.0, %v479
  %v481 = vpop.f32.mrb[0].mxu0
  %v482 = vpop.f32.mrb[0].mxu0
  %v483 = vadd.f32 0.0, %v482
  %v484 = vpop.f32.mrb[0].mxu0
  %485 = vmatprep.mubr.bf16.mxu0 0
  %486 = vmatmul.mubr.bf16.gmra.mrb[0].mxu0 %v420
  %v487 = vpop.f32.mrb[0].mxu0
  %v488 = vadd.f32 0.0, %v487
  %v489 = vpop.f32.mrb[0].mxu0
  %v490 = vpop.f32.mrb[0].mxu0
  %v491 = vadd.f32 0.0, %v490
  %v492 = vpop.f32.mrb[0].mxu0
  %493 = vmatprep.mubr.bf16.mxu0 0
  %494 = vmatmul.mubr.bf16.gmra.mrb[0].mxu0 %v423
  %v495 = vpop.f32.mrb[0].mxu0
  %v496 = vadd.f32 0.0, %v495
  %v497 = vpop.f32.mrb[0].mxu0
  %v498 = vpop.f32.mrb[0].mxu0
  %v499 = vadd.f32 0.0, %v498
  %v500 = vpop.f32.mrb[0].mxu0
  %501 = vmatprep.mubr.bf16.mxu0 0
  %502 = vmatmul.mubr.bf16.gmra.mrb[0].mxu0 %v426
  %v503 = vpop.f32.mrb[0].mxu0
  %v504 = vadd.f32 0.0, %v503
  %v505 = vpop.f32.mrb[0].mxu0
  %v506 = vpop.f32.mrb[0].mxu0
  %v507 = vadd.f32 0.0, %v506
  %v508 = vpop.f32.mrb[0].mxu0
  %509 = vmatprep.mubr.bf16.mxu0 0
  %510 = vmatmul.mubr.bf16.gmra.mrb[0].mxu0 %v429
  %v511 = vpop.f32.mrb[0].mxu0
  %v512 = vadd.f32 0.0, %v511
  %v513 = vpop.f32.mrb[0].mxu0
  %v514 = vpop.f32.mrb[0].mxu0
  %v515 = vadd.f32 0.0, %v514
  %v516 = vpop.f32.mrb[0].mxu0
  %517 = vmatprep.mubr.bf16.mxu0 0
  %518 = vmatmul.mubr.bf16.gmra.mrb[0].mxu0 %v432
  %v519 = vpop.f32.mrb[0].mxu0
  %v520 = vadd.f32 0.0, %v519
  %v521 = vpop.f32.mrb[0].mxu0
  %v522 = vpop.f32.mrb[0].mxu0
  %v523 = vadd.f32 0.0, %v522
  %v524 = vpop.f32.mrb[0].mxu0
  %525 = vmatprep.mubr.bf16.mxu0 0
  %526 = vmatmul.mubr.bf16.gmra.mrb[0].mxu0 %v435
  %v527 = vpop.f32.mrb[0].mxu0
  %v528 = vadd.f32 0.0, %v527
  %v529 = vpop.f32.mrb[0].mxu0
  %v530 = vpop.f32.mrb[0].mxu0
  %v531 = vadd.f32 0.0, %v530
  %v532 = vpop.f32.mrb[0].mxu0
  %533 = vdwg.mxu0
  %v535 = vsel %vm412, %v327, 0
  %v538 = vsel %vm412, %v328, 0
  %v541 = vsel %vm412, %v329, 0
  %v544 = vsel %vm412, %v330, 0
  %v547 = vsel %vm412, %v331, 0
  %v550 = vsel %vm412, %v332, 0
  %v553 = vsel %vm412, %v333, 0
  %v556 = vsel %vm412, %v334, 0
  %558 = vmatprep.subr.bf16.mxu0 0
  %559 = vmatpush1.bf16.msra.mxu0 %v347
  %560 = vmatprep.subr.bf16.mxu0 0
  %561 = vmatpush1.bf16.msra.mxu0 %v348
  %562 = vmatprep.subr.bf16.mxu0 0
  %563 = vmatpush1.bf16.msra.mxu0 %v349
  %564 = vmatprep.subr.bf16.mxu0 0
  %565 = vmatpush1.bf16.msra.mxu0 %v350
  %566 = vmatprep.subr.bf16.mxu0 0
  %567 = vmatpush1.bf16.msra.mxu0 %v351
  %568 = vmatprep.subr.bf16.mxu0 0
  %569 = vmatpush1.bf16.msra.mxu0 %v352
  %570 = vmatprep.subr.bf16.mxu0 0
  %571 = vmatpush1.bf16.msra.mxu0 0
  %572 = vmatprep.subr.bf16.mxu0 0
  %573 = vmatpush1.bf16.msra.mxu0 0
  %574 = vmatprep.subr.bf16.mxu0 0
  %575 = vmatpush1.bf16.msra.mxu0 0
  %576 = vmatprep.subr.bf16.mxu0 0
  %577 = vmatpush1.bf16.msra.mxu0 0
  %578 = vmatprep.subr.bf16.mxu0 0
  %579 = vmatpush1.bf16.msra.mxu0 0
  %580 = vmatprep.subr.bf16.mxu0 0
  %581 = vmatpush1.bf16.msra.mxu0 0
  %582 = vmatprep.subr.bf16.mxu0 0
  %583 = vmatpush1.bf16.msra.mxu0 0
  %584 = vmatprep.subr.bf16.mxu0 0
  %585 = vmatpush1.bf16.msra.mxu0 0
  %586 = vmatprep.subr.bf16.mxu0 0
  %587 = vmatpush1.bf16.msra.mxu0 0
  %588 = vmatprep.subr.bf16.mxu0 0
  %589 = vmatpush1.bf16.msra.mxu0 0
  %590 = vmatprep.mubr.bf16.mxu0 0
  %591 = vmatmul.mubr.bf16.gmra.mrb[0].mxu0 %v535
  %v592 = vpop.f32.mrb[0].mxu0
  %v593 = vadd.f32 %v472, %v592
  %v594 = vpop.f32.mrb[0].mxu0
  %v595 = vpop.f32.mrb[0].mxu0
  %v596 = vadd.f32 %v475, %v595
  %v597 = vpop.f32.mrb[0].mxu0
  %598 = vmatprep.mubr.bf16.mxu0 0
  %599 = vmatmul.mubr.bf16.gmra.mrb[0].mxu0 %v538
  %v600 = vpop.f32.mrb[0].mxu0
  %v601 = vadd.f32 %v480, %v600
  %v602 = vpop.f32.mrb[0].mxu0
  %v603 = vpop.f32.mrb[0].mxu0
  %v604 = vadd.f32 %v483, %v603
  %v605 = vpop.f32.mrb[0].mxu0
  %606 = vmatprep.mubr.bf16.mxu0 0
  %607 = vmatmul.mubr.bf16.gmra.mrb[0].mxu0 %v541
  %v608 = vpop.f32.mrb[0].mxu0
  %v609 = vadd.f32 %v488, %v608
  %v610 = vpop.f32.mrb[0].mxu0
  %v611 = vpop.f32.mrb[0].mxu0
  %v612 = vadd.f32 %v491, %v611
  %v613 = vpop.f32.mrb[0].mxu0
  %614 = vmatprep.mubr.bf16.mxu0 0
  %615 = vmatmul.mubr.bf16.gmra.mrb[0].mxu0 %v544
  %v616 = vpop.f32.mrb[0].mxu0
  %v617 = vadd.f32 %v496, %v616
  %v618 = vpop.f32.mrb[0].mxu0
  %v619 = vpop.f32.mrb[0].mxu0
  %v620 = vadd.f32 %v499, %v619
  %v621 = vpop.f32.mrb[0].mxu0
  %622 = vmatprep.mubr.bf16.mxu0 0
  %623 = vmatmul.mubr.bf16.gmra.mrb[0].mxu0 %v547
  %v624 = vpop.f32.mrb[0].mxu0
  %v625 = vadd.f32 %v504, %v624
  %v626 = vpop.f32.mrb[0].mxu0
  %v627 = vpop.f32.mrb[0].mxu0
  %v628 = vadd.f32 %v507, %v627
  %v629 = vpop.f32.mrb[0].mxu0
  %630 = vmatprep.mubr.bf16.mxu0 0
  %631 = vmatmul.mubr.bf16.gmra.mrb[0].mxu0 %v550
  %v632 = vpop.f32.mrb[0].mxu0
  %v633 = vadd.f32 %v512, %v632
  %v634 = vpop.f32.mrb[0].mxu0
  %v635 = vpop.f32.mrb[0].mxu0
  %v636 = vadd.f32 %v515, %v635
  %v637 = vpop.f32.mrb[0].mxu0
  %638 = vmatprep.mubr.bf16.mxu0 0
  %639 = vmatmul.mubr.bf16.gmra.mrb[0].mxu0 %v553
  %v640 = vpop.f32.mrb[0].mxu0
  %v641 = vadd.f32 %v520, %v640
  %v642 = vpop.f32.mrb[0].mxu0
  %v643 = vpop.f32.mrb[0].mxu0
  %v644 = vadd.f32 %v523, %v643
  %v645 = vpop.f32.mrb[0].mxu0
  %646 = vmatprep.mubr.bf16.mxu0 0
  %647 = vmatmul.mubr.bf16.gmra.mrb[0].mxu0 %v556
  %v648 = vpop.f32.mrb[0].mxu0
  %v649 = vadd.f32 %v528, %v648
  %v650 = vpop.f32.mrb[0].mxu0
  %v651 = vpop.f32.mrb[0].mxu0
  %v652 = vadd.f32 %v531, %v651
  %v653 = vpop.f32.mrb[0].mxu0
  %654 = vdwg.mxu0
  %v659 = vrot.slane %v45, 1
  %v660 = vrot.slane %v46, 1
  %v661 = vsel %vm99, %v659, %v660
  %v662 = vrot.slane %v65, 1
  %v663 = vrot.slane %v66, 1
  %v664 = vsel %vm99, %v662, %v663
  %v665 = vrot.slane %v45, 2
  %v666 = vrot.slane %v46, 2
  %v667 = vsel %vm148, %v665, %v666
  %v668 = vrot.slane %v65, 2
  %v669 = vrot.slane %v66, 2
  %v670 = vsel %vm148, %v668, %v669
  %671 = vrot.lane.b32.xlu0 %v661, 32
  %v672 = vpop.permute.xlu0 %671
  %673 = vrot.lane.b32.xlu0 %v664, 32
  %v674 = vpop.permute.xlu0 %673
  %677 = vrot.lane.b32.xlu0 %v667, 64
  %v678 = vpop.permute.xlu0 %677
  %679 = vrot.lane.b32.xlu0 %v670, 64
  %v680 = vpop.permute.xlu0 %679
  %v683 = vsel %vm293, %v45, %v672
  %v684 = vsel %vm293, %v65, %v674
  %v685 = vsel %vm310, %v683, %v678
  %v686 = vsel %vm310, %v684, %v680
  %v687 = vpack.c.bf16 %v685, %v383
  %v688 = vpack.c.bf16 %v686, %v384
  %s689 = scalar_lea.vmem %s1, 192
  %v690 = vld [vmem:[%s689] sm:$0xff]
  %v691 = vld [vmem:[%s689 + $0x8] sm:$0xff]
  %v692 = vld [vmem:[%s689 + $0x10] sm:$0xff]
  %v693 = vld [vmem:[%s689 + $0x18] sm:$0xff]
  %v694 = vld [vmem:[%s689 + $0x20] sm:$0xff]
  %v695 = vld [vmem:[%s689 + $0x28] sm:$0xff]
  %v696 = vld [vmem:[%s689 + $0x30] sm:$0xff]
  %v697 = vld [vmem:[%s689 + $0x38] sm:$0xff]
  %v698 = vld [vmem:[%s689 + $0x40] sm:$0xff]
  %v699 = vld [vmem:[%s689 + $0x48] sm:$0xff]
  %v700 = vld [vmem:[%s689 + $0x50] sm:$0xff]
  %v701 = vld [vmem:[%s689 + $0x58] sm:$0xff]
  %v702 = vpack.c.bf16 %v691, %v690
  %v703 = vpack.c.bf16 %v693, %v692
  %v704 = vpack.c.bf16 %v695, %v694
  %v705 = vpack.c.bf16 %v697, %v696
  %v706 = vpack.c.bf16 %v699, %v698
  %v707 = vpack.c.bf16 %v701, %v700
  %v709 = vsel %vm412, %v687, 0
  %v712 = vsel %vm412, %v688, 0
  %714 = vmatprep.subr.bf16.mxu0 0
  %715 = vmatpush1.bf16.msra.mxu0 %v702
  %716 = vmatprep.subr.bf16.mxu0 0
  %717 = vmatpush1.bf16.msra.mxu0 %v703
  %718 = vmatprep.subr.bf16.mxu0 0
  %719 = vmatpush1.bf16.msra.mxu0 %v704
  %720 = vmatprep.subr.bf16.mxu0 0
  %721 = vmatpush1.bf16.msra.mxu0 %v705
  %722 = vmatprep.subr.bf16.mxu0 0
  %723 = vmatpush1.bf16.msra.mxu0 %v706
  %724 = vmatprep.subr.bf16.mxu0 0
  %725 = vmatpush1.bf16.msra.mxu0 %v707
  %726 = vmatprep.subr.bf16.mxu0 0
  %727 = vmatpush1.bf16.msra.mxu0 0
  %728 = vmatprep.subr.bf16.mxu0 0
  %729 = vmatpush1.bf16.msra.mxu0 0
  %730 = vmatprep.subr.bf16.mxu0 0
  %731 = vmatpush1.bf16.msra.mxu0 0
  %732 = vmatprep.subr.bf16.mxu0 0
  %733 = vmatpush1.bf16.msra.mxu0 0
  %734 = vmatprep.subr.bf16.mxu0 0
  %735 = vmatpush1.bf16.msra.mxu0 0
  %736 = vmatprep.subr.bf16.mxu0 0
  %737 = vmatpush1.bf16.msra.mxu0 0
  %738 = vmatprep.subr.bf16.mxu0 0
  %739 = vmatpush1.bf16.msra.mxu0 0
  %740 = vmatprep.subr.bf16.mxu0 0
  %741 = vmatpush1.bf16.msra.mxu0 0
  %742 = vmatprep.subr.bf16.mxu0 0
  %743 = vmatpush1.bf16.msra.mxu0 0
  %744 = vmatprep.subr.bf16.mxu0 0
  %745 = vmatpush1.bf16.msra.mxu0 0
  %746 = vmatprep.mubr.bf16.mxu0 0
  %747 = vmatmul.mubr.bf16.gmra.mrb[0].mxu0 %v538
  %v748 = vpop.f32.mrb[0].mxu0
  %v749 = vadd.f32 0.0, %v748
  %v750 = vpop.f32.mrb[0].mxu0
  %v751 = vpop.f32.mrb[0].mxu0
  %v752 = vadd.f32 0.0, %v751
  %v753 = vpop.f32.mrb[0].mxu0
  %754 = vmatprep.mubr.bf16.mxu0 0
  %755 = vmatmul.mubr.bf16.gmra.mrb[0].mxu0 %v541
  %v756 = vpop.f32.mrb[0].mxu0
  %v757 = vadd.f32 0.0, %v756
  %v758 = vpop.f32.mrb[0].mxu0
  %v759 = vpop.f32.mrb[0].mxu0
  %v760 = vadd.f32 0.0, %v759
  %v761 = vpop.f32.mrb[0].mxu0
  %762 = vmatprep.mubr.bf16.mxu0 0
  %763 = vmatmul.mubr.bf16.gmra.mrb[0].mxu0 %v544
  %v764 = vpop.f32.mrb[0].mxu0
  %v765 = vadd.f32 0.0, %v764
  %v766 = vpop.f32.mrb[0].mxu0
  %v767 = vpop.f32.mrb[0].mxu0
  %v768 = vadd.f32 0.0, %v767
  %v769 = vpop.f32.mrb[0].mxu0
  %770 = vmatprep.mubr.bf16.mxu0 0
  %771 = vmatmul.mubr.bf16.gmra.mrb[0].mxu0 %v709
  %v772 = vpop.f32.mrb[0].mxu0
  %v773 = vadd.f32 0.0, %v772
  %v774 = vpop.f32.mrb[0].mxu0
  %v775 = vpop.f32.mrb[0].mxu0
  %v776 = vadd.f32 0.0, %v775
  %v777 = vpop.f32.mrb[0].mxu0
  %778 = vmatprep.mubr.bf16.mxu0 0
  %779 = vmatmul.mubr.bf16.gmra.mrb[0].mxu0 %v550
  %v780 = vpop.f32.mrb[0].mxu0
  %v781 = vadd.f32 0.0, %v780
  %v782 = vpop.f32.mrb[0].mxu0
  %v783 = vpop.f32.mrb[0].mxu0
  %v784 = vadd.f32 0.0, %v783
  %v785 = vpop.f32.mrb[0].mxu0
  %786 = vmatprep.mubr.bf16.mxu0 0
  %787 = vmatmul.mubr.bf16.gmra.mrb[0].mxu0 %v553
  %v788 = vpop.f32.mrb[0].mxu0
  %v789 = vadd.f32 0.0, %v788
  %v790 = vpop.f32.mrb[0].mxu0
  %v791 = vpop.f32.mrb[0].mxu0
  %v792 = vadd.f32 0.0, %v791
  %v793 = vpop.f32.mrb[0].mxu0
  %794 = vmatprep.mubr.bf16.mxu0 0
  %795 = vmatmul.mubr.bf16.gmra.mrb[0].mxu0 %v556
  %v796 = vpop.f32.mrb[0].mxu0
  %v797 = vadd.f32 0.0, %v796
  %v798 = vpop.f32.mrb[0].mxu0
  %v799 = vpop.f32.mrb[0].mxu0
  %v800 = vadd.f32 0.0, %v799
  %v801 = vpop.f32.mrb[0].mxu0
  %802 = vmatprep.mubr.bf16.mxu0 0
  %803 = vmatmul.mubr.bf16.gmra.mrb[0].mxu0 %v712
  %v804 = vpop.f32.mrb[0].mxu0
  %v805 = vadd.f32 0.0, %v804
  %v806 = vpop.f32.mrb[0].mxu0
  %v807 = vpop.f32.mrb[0].mxu0
  %v808 = vadd.f32 0.0, %v807
  %v809 = vpop.f32.mrb[0].mxu0
  %810 = vdwg.mxu0
  %v811 = vadd.f32 %v593, %v749
  %v812 = vadd.f32 %v596, %v752
  %v813 = vadd.f32 %v601, %v757
  %v814 = vadd.f32 %v604, %v760
  %v815 = vadd.f32 %v609, %v765
  %v816 = vadd.f32 %v612, %v768
  %v817 = vadd.f32 %v617, %v773
  %v818 = vadd.f32 %v620, %v776
  %v819 = vadd.f32 %v625, %v781
  %v820 = vadd.f32 %v628, %v784
  %v821 = vadd.f32 %v633, %v789
  %v822 = vadd.f32 %v636, %v792
  %v823 = vadd.f32 %v641, %v797
  %v824 = vadd.f32 %v644, %v800
  %v825 = vadd.f32 %v649, %v805
  %v826 = vadd.f32 %v652, %v808
  %vm827 = vcmask 130048
  %v828 = vsel %vm827, %v811, 0.0
  %v829 = vsel %vm827, %v812, 0.0
  %v830 = vadd.f32 %v828, %v829
  %v831 = vsel %vm827, %v813, 0.0
  %v832 = vadd.f32 %v830, %v831
  %v833 = vsel %vm827, %v814, 0.0
  %v834 = vadd.f32 %v832, %v833
  %v835 = vsel %vm827, %v815, 0.0
  %v836 = vadd.f32 %v834, %v835
  %v837 = vsel %vm827, %v816, 0.0
  %v838 = vadd.f32 %v836, %v837
  %v839 = vsel %vm827, %v817, 0.0
  %v840 = vadd.f32 %v838, %v839
  %v841 = vsel %vm827, %v818, 0.0
  %v842 = vadd.f32 %v840, %v841
  %v843 = vsel %vm827, %v819, 0.0
  %v844 = vadd.f32 %v842, %v843
  %v845 = vsel %vm827, %v820, 0.0
  %v846 = vadd.f32 %v844, %v845
  %v847 = vsel %vm827, %v821, 0.0
  %v848 = vadd.f32 %v846, %v847
  %v849 = vsel %vm827, %v822, 0.0
  %v850 = vadd.f32 %v848, %v849
  %v851 = vsel %vm827, %v823, 0.0
  %v852 = vadd.f32 %v850, %v851
  %v853 = vsel %vm827, %v824, 0.0
  %v854 = vadd.f32 %v852, %v853
  %v855 = vsel %vm827, %v825, 0.0
  %v856 = vadd.f32 %v854, %v855
  %v857 = vsel %vm827, %v826, 0.0
  %v858 = vadd.f32 %v856, %v857
  %v859 = vrot.slane %v858, 4
  %v860 = vadd.f32 %v858, %v859
  %v861 = vrot.slane %v860, 2
  %v862 = vadd.f32 %v860, %v861
  %v863 = vrot.slane %v862, 1
  %v864 = vadd.f32 %v862, %v863
  %v865 = vmul.f32 %v811, %v811
  %v866 = vmul.f32 %v812, %v812
  %v867 = vmul.f32 %v813, %v813
  %v868 = vmul.f32 %v814, %v814
  %v869 = vmul.f32 %v815, %v815
  %v870 = vmul.f32 %v816, %v816
  %v871 = vmul.f32 %v817, %v817
  %v872 = vmul.f32 %v818, %v818
  %v873 = vmul.f32 %v819, %v819
  %v874 = vmul.f32 %v820, %v820
  %v875 = vmul.f32 %v821, %v821
  %v876 = vmul.f32 %v822, %v822
  %v877 = vmul.f32 %v823, %v823
  %v878 = vmul.f32 %v824, %v824
  %v879 = vmul.f32 %v825, %v825
  %v880 = vmul.f32 %v826, %v826
  %v881 = vsel %vm827, %v865, 0.0
  %v882 = vsel %vm827, %v866, 0.0
  %v883 = vadd.f32 %v881, %v882
  %v884 = vsel %vm827, %v867, 0.0
  %v885 = vadd.f32 %v883, %v884
  %v886 = vsel %vm827, %v868, 0.0
  %v887 = vadd.f32 %v885, %v886
  %v888 = vsel %vm827, %v869, 0.0
  %v889 = vadd.f32 %v887, %v888
  %v890 = vsel %vm827, %v870, 0.0
  %v891 = vadd.f32 %v889, %v890
  %v892 = vsel %vm827, %v871, 0.0
  %v893 = vadd.f32 %v891, %v892
  %v894 = vsel %vm827, %v872, 0.0
  %v895 = vadd.f32 %v893, %v894
  %v896 = vsel %vm827, %v873, 0.0
  %v897 = vadd.f32 %v895, %v896
  %v898 = vsel %vm827, %v874, 0.0
  %v899 = vadd.f32 %v897, %v898
  %v900 = vsel %vm827, %v875, 0.0
  %v901 = vadd.f32 %v899, %v900
  %v902 = vsel %vm827, %v876, 0.0
  %v903 = vadd.f32 %v901, %v902
  %v904 = vsel %vm827, %v877, 0.0
  %v905 = vadd.f32 %v903, %v904
  %v906 = vsel %vm827, %v878, 0.0
  %v907 = vadd.f32 %v905, %v906
  %v908 = vsel %vm827, %v879, 0.0
  %v909 = vadd.f32 %v907, %v908
  %v910 = vsel %vm827, %v880, 0.0
  %v911 = vadd.f32 %v909, %v910
  %v912 = vrot.slane %v911, 4
  %v913 = vadd.f32 %v911, %v912
  %v914 = vrot.slane %v913, 2
  %v915 = vadd.f32 %v913, %v914
  %v916 = vrot.slane %v915, 1
  %v917 = vadd.f32 %v915, %v916
  %v918 = vmul.f32 %v864, 0.0078125
  %v919 = vmul.f32 %v917, 0.0078125
  %v920 = vmul.f32 %v918, %v918
  %v921 = vsub.f32 %v919, %v920
  %v922 = vmax.f32 %v921, 0.0
  %v923 = vsub.f32 %v811, %v918
  %v924 = vsub.f32 %v812, %v918
  %v925 = vsub.f32 %v813, %v918
  %v926 = vsub.f32 %v814, %v918
  %v927 = vsub.f32 %v815, %v918
  %v928 = vsub.f32 %v816, %v918
  %v929 = vsub.f32 %v817, %v918
  %v930 = vsub.f32 %v818, %v918
  %v931 = vsub.f32 %v819, %v918
  %v932 = vsub.f32 %v820, %v918
  %v933 = vsub.f32 %v821, %v918
  %v934 = vsub.f32 %v822, %v918
  %v935 = vsub.f32 %v823, %v918
  %v936 = vsub.f32 %v824, %v918
  %v937 = vsub.f32 %v825, %v918
  %v938 = vsub.f32 %v826, %v918
  %v939 = vadd.f32 %v922, 1e-05
  %v940 = vrsqrt.pop %v939
  %v941 = vmul.f32 %v923, %v940
  %v942 = vmul.f32 %v924, %v940
  %v943 = vmul.f32 %v925, %v940
  %v944 = vmul.f32 %v926, %v940
  %v945 = vmul.f32 %v927, %v940
  %v946 = vmul.f32 %v928, %v940
  %v947 = vmul.f32 %v929, %v940
  %v948 = vmul.f32 %v930, %v940
  %v949 = vmul.f32 %v931, %v940
  %v950 = vmul.f32 %v932, %v940
  %v951 = vmul.f32 %v933, %v940
  %v952 = vmul.f32 %v934, %v940
  %v953 = vmul.f32 %v935, %v940
  %v954 = vmul.f32 %v936, %v940
  %v955 = vmul.f32 %v937, %v940
  %v956 = vmul.f32 %v938, %v940
  %v957 = vld [vmem:[%s2] sm:$0x1]
  %v959 = vlaneseq
  %v960 = vshrl.u32 %v959, 7
  %v961 = vsub.s32 0, %v960
  %v962 = vrot.slane %v957, %v961
  %v964 = vmul.f32 %v941, %v962
  %v965 = vmul.f32 %v942, %v962
  %v966 = vmul.f32 %v943, %v962
  %v967 = vmul.f32 %v944, %v962
  %v968 = vmul.f32 %v945, %v962
  %v969 = vmul.f32 %v946, %v962
  %v970 = vmul.f32 %v947, %v962
  %v971 = vmul.f32 %v948, %v962
  %v972 = vmul.f32 %v949, %v962
  %v973 = vmul.f32 %v950, %v962
  %v974 = vmul.f32 %v951, %v962
  %v975 = vmul.f32 %v952, %v962
  %v976 = vmul.f32 %v953, %v962
  %v977 = vmul.f32 %v954, %v962
  %v978 = vmul.f32 %v955, %v962
  %v979 = vmul.f32 %v956, %v962
  %v980 = vld [vmem:[%s3] sm:$0x1]
  %v982 = vlaneseq
  %v983 = vshrl.u32 %v982, 7
  %v984 = vsub.s32 0, %v983
  %v985 = vrot.slane %v980, %v984
  %v987 = vadd.f32 %v964, %v985
  %v988 = vadd.f32 %v965, %v985
  %v989 = vadd.f32 %v966, %v985
  %v990 = vadd.f32 %v967, %v985
  %v991 = vadd.f32 %v968, %v985
  %v992 = vadd.f32 %v969, %v985
  %v993 = vadd.f32 %v970, %v985
  %v994 = vadd.f32 %v971, %v985
  %v995 = vadd.f32 %v972, %v985
  %v996 = vadd.f32 %v973, %v985
  %v997 = vadd.f32 %v974, %v985
  %v998 = vadd.f32 %v975, %v985
  %v999 = vadd.f32 %v976, %v985
  %v1000 = vadd.f32 %v977, %v985
  %v1001 = vadd.f32 %v978, %v985
  %v1002 = vadd.f32 %v979, %v985
  %v1003 = vmax.f32 %v987, 0.0
  %v1004 = vmax.f32 %v988, 0.0
  %v1005 = vmax.f32 %v989, 0.0
  %v1006 = vmax.f32 %v990, 0.0
  %v1007 = vmax.f32 %v991, 0.0
  %v1008 = vmax.f32 %v992, 0.0
  %v1009 = vmax.f32 %v993, 0.0
  %v1010 = vmax.f32 %v994, 0.0
  %v1011 = vmax.f32 %v995, 0.0
  %v1012 = vmax.f32 %v996, 0.0
  %v1013 = vmax.f32 %v997, 0.0
  %v1014 = vmax.f32 %v998, 0.0
  %v1015 = vmax.f32 %v999, 0.0
  %v1016 = vmax.f32 %v1000, 0.0
  %v1017 = vmax.f32 %v1001, 0.0
  %v1018 = vmax.f32 %v1002, 0.0
  %v1031 = vcombine.high %v1003, %v1003
  %v1033 = vunpack.c.l.s4 1983009808
  %v1034 = vunpack.c.0.s8 %v1033
  %v1035 = vlaneseq
  %v1036 = vshrl.u32 %v1035, 7
  %v1037 = vsub.s32 %v1034, %v1036
  %v1038 = vrot.slane %v1003, %v1037
  %v1040 = vunpack.c.l.s4 1983009808
  %v1041 = vunpack.c.0.s8 %v1040
  %v1042 = vlaneseq
  %v1043 = vshrl.u32 %v1042, 7
  %v1044 = vsub.s32 %v1041, %v1043
  %v1045 = vrot.slane %v1031, %v1044
  %v1046 = vcombine.high %v1038, %v1038
  %v1047 = vcombine.high %v1004, %v1004
  %v1049 = vunpack.c.l.s4 1983009808
  %v1050 = vunpack.c.0.s8 %v1049
  %v1051 = vlaneseq
  %v1052 = vshrl.u32 %v1051, 7
  %v1053 = vsub.s32 %v1050, %v1052
  %v1054 = vrot.slane %v1004, %v1053
  %v1056 = vunpack.c.l.s4 1983009808
  %v1057 = vunpack.c.0.s8 %v1056
  %v1058 = vlaneseq
  %v1059 = vshrl.u32 %v1058, 7
  %v1060 = vsub.s32 %v1057, %v1059
  %v1061 = vrot.slane %v1047, %v1060
  %v1062 = vcombine.high %v1054, %v1054
  %v1063 = vcombine.high %v1005, %v1005
  %v1065 = vunpack.c.l.s4 1983009808
  %v1066 = vunpack.c.0.s8 %v1065
  %v1067 = vlaneseq
  %v1068 = vshrl.u32 %v1067, 7
  %v1069 = vsub.s32 %v1066, %v1068
  %v1070 = vrot.slane %v1005, %v1069
  %v1072 = vunpack.c.l.s4 1983009808
  %v1073 = vunpack.c.0.s8 %v1072
  %v1074 = vlaneseq
  %v1075 = vshrl.u32 %v1074, 7
  %v1076 = vsub.s32 %v1073, %v1075
  %v1077 = vrot.slane %v1063, %v1076
  %v1078 = vcombine.high %v1070, %v1070
  %v1079 = vcombine.high %v1006, %v1006
  %v1081 = vunpack.c.l.s4 1983009808
  %v1082 = vunpack.c.0.s8 %v1081
  %v1083 = vlaneseq
  %v1084 = vshrl.u32 %v1083, 7
  %v1085 = vsub.s32 %v1082, %v1084
  %v1086 = vrot.slane %v1006, %v1085
  %v1088 = vunpack.c.l.s4 1983009808
  %v1089 = vunpack.c.0.s8 %v1088
  %v1090 = vlaneseq
  %v1091 = vshrl.u32 %v1090, 7
  %v1092 = vsub.s32 %v1089, %v1091
  %v1093 = vrot.slane %v1079, %v1092
  %v1094 = vcombine.high %v1086, %v1086
  %v1095 = vcombine.high %v1007, %v1007
  %v1097 = vunpack.c.l.s4 1983009808
  %v1098 = vunpack.c.0.s8 %v1097
  %v1099 = vlaneseq
  %v1100 = vshrl.u32 %v1099, 7
  %v1101 = vsub.s32 %v1098, %v1100
  %v1102 = vrot.slane %v1007, %v1101
  %v1104 = vunpack.c.l.s4 1983009808
  %v1105 = vunpack.c.0.s8 %v1104
  %v1106 = vlaneseq
  %v1107 = vshrl.u32 %v1106, 7
  %v1108 = vsub.s32 %v1105, %v1107
  %v1109 = vrot.slane %v1095, %v1108
  %v1110 = vcombine.high %v1102, %v1102
  %v1111 = vcombine.high %v1008, %v1008
  %v1113 = vunpack.c.l.s4 1983009808
  %v1114 = vunpack.c.0.s8 %v1113
  %v1115 = vlaneseq
  %v1116 = vshrl.u32 %v1115, 7
  %v1117 = vsub.s32 %v1114, %v1116
  %v1118 = vrot.slane %v1008, %v1117
  %v1120 = vunpack.c.l.s4 1983009808
  %v1121 = vunpack.c.0.s8 %v1120
  %v1122 = vlaneseq
  %v1123 = vshrl.u32 %v1122, 7
  %v1124 = vsub.s32 %v1121, %v1123
  %v1125 = vrot.slane %v1111, %v1124
  %v1126 = vcombine.high %v1118, %v1118
  %v1127 = vcombine.high %v1011, %v1011
  %v1129 = vunpack.c.l.s4 1983009808
  %v1130 = vunpack.c.0.s8 %v1129
  %v1131 = vlaneseq
  %v1132 = vshrl.u32 %v1131, 7
  %v1133 = vsub.s32 %v1130, %v1132
  %v1134 = vrot.slane %v1011, %v1133
  %v1136 = vunpack.c.l.s4 1983009808
  %v1137 = vunpack.c.0.s8 %v1136
  %v1138 = vlaneseq
  %v1139 = vshrl.u32 %v1138, 7
  %v1140 = vsub.s32 %v1137, %v1139
  %v1141 = vrot.slane %v1127, %v1140
  %v1142 = vcombine.high %v1134, %v1134
  %v1143 = vcombine.high %v1012, %v1012
  %v1145 = vunpack.c.l.s4 1983009808
  %v1146 = vunpack.c.0.s8 %v1145
  %v1147 = vlaneseq
  %v1148 = vshrl.u32 %v1147, 7
  %v1149 = vsub.s32 %v1146, %v1148
  %v1150 = vrot.slane %v1012, %v1149
  %v1152 = vunpack.c.l.s4 1983009808
  %v1153 = vunpack.c.0.s8 %v1152
  %v1154 = vlaneseq
  %v1155 = vshrl.u32 %v1154, 7
  %v1156 = vsub.s32 %v1153, %v1155
  %v1157 = vrot.slane %v1143, %v1156
  %v1158 = vcombine.high %v1150, %v1150
  %v1159 = vcombine.high %v1013, %v1013
  %v1161 = vunpack.c.l.s4 1983009808
  %v1162 = vunpack.c.0.s8 %v1161
  %v1163 = vlaneseq
  %v1164 = vshrl.u32 %v1163, 7
  %v1165 = vsub.s32 %v1162, %v1164
  %v1166 = vrot.slane %v1013, %v1165
  %v1168 = vunpack.c.l.s4 1983009808
  %v1169 = vunpack.c.0.s8 %v1168
  %v1170 = vlaneseq
  %v1171 = vshrl.u32 %v1170, 7
  %v1172 = vsub.s32 %v1169, %v1171
  %v1173 = vrot.slane %v1159, %v1172
  %v1174 = vcombine.high %v1166, %v1166
  %v1175 = vcombine.high %v1014, %v1014
  %v1177 = vunpack.c.l.s4 1983009808
  %v1178 = vunpack.c.0.s8 %v1177
  %v1179 = vlaneseq
  %v1180 = vshrl.u32 %v1179, 7
  %v1181 = vsub.s32 %v1178, %v1180
  %v1182 = vrot.slane %v1014, %v1181
  %v1184 = vunpack.c.l.s4 1983009808
  %v1185 = vunpack.c.0.s8 %v1184
  %v1186 = vlaneseq
  %v1187 = vshrl.u32 %v1186, 7
  %v1188 = vsub.s32 %v1185, %v1187
  %v1189 = vrot.slane %v1175, %v1188
  %v1190 = vcombine.high %v1182, %v1182
  %v1191 = vcombine.high %v1015, %v1015
  %v1193 = vunpack.c.l.s4 1983009808
  %v1194 = vunpack.c.0.s8 %v1193
  %v1195 = vlaneseq
  %v1196 = vshrl.u32 %v1195, 7
  %v1197 = vsub.s32 %v1194, %v1196
  %v1198 = vrot.slane %v1015, %v1197
  %v1200 = vunpack.c.l.s4 1983009808
  %v1201 = vunpack.c.0.s8 %v1200
  %v1202 = vlaneseq
  %v1203 = vshrl.u32 %v1202, 7
  %v1204 = vsub.s32 %v1201, %v1203
  %v1205 = vrot.slane %v1191, %v1204
  %v1206 = vcombine.high %v1198, %v1198
  %v1207 = vcombine.high %v1016, %v1016
  %v1209 = vunpack.c.l.s4 1983009808
  %v1210 = vunpack.c.0.s8 %v1209
  %v1211 = vlaneseq
  %v1212 = vshrl.u32 %v1211, 7
  %v1213 = vsub.s32 %v1210, %v1212
  %v1214 = vrot.slane %v1016, %v1213
  %v1216 = vunpack.c.l.s4 1983009808
  %v1217 = vunpack.c.0.s8 %v1216
  %v1218 = vlaneseq
  %v1219 = vshrl.u32 %v1218, 7
  %v1220 = vsub.s32 %v1217, %v1219
  %v1221 = vrot.slane %v1207, %v1220
  %v1222 = vcombine.high %v1214, %v1214
  %v1223 = vcombine.high %v1045, %v1045
  %v1224 = vcombine.high %v1061, %v1061
  %v1225 = vcombine.high %v1077, %v1077
  %v1226 = vcombine.high %v1093, %v1093
  %v1227 = vcombine.high %v1109, %v1109
  %v1228 = vcombine.high %v1125, %v1125
  %v1229 = vcombine.high %v1141, %v1141
  %v1230 = vcombine.high %v1157, %v1157
  %v1231 = vcombine.high %v1173, %v1173
  %v1232 = vcombine.high %v1189, %v1189
  %v1233 = vcombine.high %v1205, %v1205
  %v1234 = vcombine.high %v1221, %v1221
  %vm1235 = vcmask 1040384
  %vm1236 = vcmask 1042434
  %vm1237 = vmor %vm1235, %vm1236
  %vm1238 = vcmask 1044484
  %vm1239 = vmor %vm1237, %vm1238
  %vm1240 = vcmask 1046534
  %vm1241 = vmor %vm1239, %vm1240
  %v1242 = vrot.slane %v1038, 7
  %v1243 = vrot.slane %v1242, 2
  %v1244 = vrot.slane %v1046, 7
  %v1245 = vsel %vm1241, %v1243, %v1244
  %v1246 = vrot.slane %v1244, 2
  %v1247 = vrot.slane %v1045, 7
  %v1248 = vsel %vm1241, %v1246, %v1247
  %v1249 = vrot.slane %v1247, 2
  %v1250 = vrot.slane %v1223, 7
  %v1251 = vsel %vm1241, %v1249, %v1250
  %v1252 = vrot.slane %v1054, 7
  %v1253 = vrot.slane %v1252, 2
  %v1254 = vrot.slane %v1062, 7
  %v1255 = vsel %vm1241, %v1253, %v1254
  %v1256 = vrot.slane %v1254, 2
  %v1257 = vrot.slane %v1061, 7
  %v1258 = vsel %vm1241, %v1256, %v1257
  %v1259 = vrot.slane %v1257, 2
  %v1260 = vrot.slane %v1224, 7
  %v1261 = vsel %vm1241, %v1259, %v1260
  %v1262 = vrot.slane %v1070, 7
  %v1263 = vrot.slane %v1262, 2
  %v1264 = vrot.slane %v1078, 7
  %v1265 = vsel %vm1241, %v1263, %v1264
  %v1266 = vrot.slane %v1264, 2
  %v1267 = vrot.slane %v1077, 7
  %v1268 = vsel %vm1241, %v1266, %v1267
  %v1269 = vrot.slane %v1267, 2
  %v1270 = vrot.slane %v1225, 7
  %v1271 = vsel %vm1241, %v1269, %v1270
  %v1272 = vrot.slane %v1086, 7
  %v1273 = vrot.slane %v1272, 2
  %v1274 = vrot.slane %v1094, 7
  %v1275 = vsel %vm1241, %v1273, %v1274
  %v1276 = vrot.slane %v1274, 2
  %v1277 = vrot.slane %v1093, 7
  %v1278 = vsel %vm1241, %v1276, %v1277
  %v1279 = vrot.slane %v1277, 2
  %v1280 = vrot.slane %v1226, 7
  %v1281 = vsel %vm1241, %v1279, %v1280
  %v1282 = vrot.slane %v1102, 7
  %v1283 = vrot.slane %v1282, 2
  %v1284 = vrot.slane %v1110, 7
  %v1285 = vsel %vm1241, %v1283, %v1284
  %v1286 = vrot.slane %v1284, 2
  %v1287 = vrot.slane %v1109, 7
  %v1288 = vsel %vm1241, %v1286, %v1287
  %v1289 = vrot.slane %v1287, 2
  %v1290 = vrot.slane %v1227, 7
  %v1291 = vsel %vm1241, %v1289, %v1290
  %v1292 = vrot.slane %v1118, 7
  %v1293 = vrot.slane %v1292, 2
  %v1294 = vrot.slane %v1126, 7
  %v1295 = vsel %vm1241, %v1293, %v1294
  %v1296 = vrot.slane %v1294, 2
  %v1297 = vrot.slane %v1125, 7
  %v1298 = vsel %vm1241, %v1296, %v1297
  %v1299 = vrot.slane %v1297, 2
  %v1300 = vrot.slane %v1228, 7
  %v1301 = vsel %vm1241, %v1299, %v1300
  %v1302 = vrot.slane %v1134, 7
  %v1303 = vrot.slane %v1302, 2
  %v1304 = vrot.slane %v1142, 7
  %v1305 = vsel %vm1241, %v1303, %v1304
  %v1306 = vrot.slane %v1304, 2
  %v1307 = vrot.slane %v1141, 7
  %v1308 = vsel %vm1241, %v1306, %v1307
  %v1309 = vrot.slane %v1307, 2
  %v1310 = vrot.slane %v1229, 7
  %v1311 = vsel %vm1241, %v1309, %v1310
  %v1312 = vrot.slane %v1150, 7
  %v1313 = vrot.slane %v1312, 2
  %v1314 = vrot.slane %v1158, 7
  %v1315 = vsel %vm1241, %v1313, %v1314
  %v1316 = vrot.slane %v1314, 2
  %v1317 = vrot.slane %v1157, 7
  %v1318 = vsel %vm1241, %v1316, %v1317
  %v1319 = vrot.slane %v1317, 2
  %v1320 = vrot.slane %v1230, 7
  %v1321 = vsel %vm1241, %v1319, %v1320
  %v1322 = vrot.slane %v1166, 7
  %v1323 = vrot.slane %v1322, 2
  %v1324 = vrot.slane %v1174, 7
  %v1325 = vsel %vm1241, %v1323, %v1324
  %v1326 = vrot.slane %v1324, 2
  %v1327 = vrot.slane %v1173, 7
  %v1328 = vsel %vm1241, %v1326, %v1327
  %v1329 = vrot.slane %v1327, 2
  %v1330 = vrot.slane %v1231, 7
  %v1331 = vsel %vm1241, %v1329, %v1330
  %v1332 = vrot.slane %v1182, 7
  %v1333 = vrot.slane %v1332, 2
  %v1334 = vrot.slane %v1190, 7
  %v1335 = vsel %vm1241, %v1333, %v1334
  %v1336 = vrot.slane %v1334, 2
  %v1337 = vrot.slane %v1189, 7
  %v1338 = vsel %vm1241, %v1336, %v1337
  %v1339 = vrot.slane %v1337, 2
  %v1340 = vrot.slane %v1232, 7
  %v1341 = vsel %vm1241, %v1339, %v1340
  %v1342 = vrot.slane %v1198, 7
  %v1343 = vrot.slane %v1342, 2
  %v1344 = vrot.slane %v1206, 7
  %v1345 = vsel %vm1241, %v1343, %v1344
  %v1346 = vrot.slane %v1344, 2
  %v1347 = vrot.slane %v1205, 7
  %v1348 = vsel %vm1241, %v1346, %v1347
  %v1349 = vrot.slane %v1347, 2
  %v1350 = vrot.slane %v1233, 7
  %v1351 = vsel %vm1241, %v1349, %v1350
  %v1352 = vrot.slane %v1214, 7
  %v1353 = vrot.slane %v1352, 2
  %v1354 = vrot.slane %v1222, 7
  %v1355 = vsel %vm1241, %v1353, %v1354
  %v1356 = vrot.slane %v1354, 2
  %v1357 = vrot.slane %v1221, 7
  %v1358 = vsel %vm1241, %v1356, %v1357
  %v1359 = vrot.slane %v1357, 2
  %v1360 = vrot.slane %v1234, 7
  %v1361 = vsel %vm1241, %v1359, %v1360
  %v1362 = vcombine.low %v1038, %v1046
  %v1363 = vcombine.low %v1045, %v1054
  %v1365 = vunpack.c.l.s4 1983009808
  %v1366 = vunpack.c.0.s8 %v1365
  %v1367 = vlaneseq
  %v1368 = vshrl.u32 %v1367, 7
  %v1369 = vsub.s32 %v1366, %v1368
  %v1370 = vrot.slane %v1362, %v1369
  %v1372 = vunpack.c.l.s4 1983009808
  %v1373 = vunpack.c.0.s8 %v1372
  %v1374 = vlaneseq
  %v1375 = vshrl.u32 %v1374, 7
  %v1376 = vsub.s32 %v1373, %v1375
  %v1377 = vrot.slane %v1363, %v1376
  %v1378 = vcombine.low %v1370, %v1377
  %v1379 = vcombine.low %v1062, %v1061
  %v1380 = vcombine.low %v1070, %v1078
  %v1382 = vunpack.c.l.s4 1983009808
  %v1383 = vunpack.c.0.s8 %v1382
  %v1384 = vlaneseq
  %v1385 = vshrl.u32 %v1384, 7
  %v1386 = vsub.s32 %v1383, %v1385
  %v1387 = vrot.slane %v1379, %v1386
  %v1389 = vunpack.c.l.s4 1983009808
  %v1390 = vunpack.c.0.s8 %v1389
  %v1391 = vlaneseq
  %v1392 = vshrl.u32 %v1391, 7
  %v1393 = vsub.s32 %v1390, %v1392
  %v1394 = vrot.slane %v1380, %v1393
  %v1395 = vcombine.low %v1387, %v1394
  %v1396 = vcombine.low %v1077, %v1086
  %v1397 = vcombine.low %v1094, %v1093
  %v1399 = vunpack.c.l.s4 1983009808
  %v1400 = vunpack.c.0.s8 %v1399
  %v1401 = vlaneseq
  %v1402 = vshrl.u32 %v1401, 7
  %v1403 = vsub.s32 %v1400, %v1402
  %v1404 = vrot.slane %v1396, %v1403
  %v1406 = vunpack.c.l.s4 1983009808
  %v1407 = vunpack.c.0.s8 %v1406
  %v1408 = vlaneseq
  %v1409 = vshrl.u32 %v1408, 7
  %v1410 = vsub.s32 %v1407, %v1409
  %v1411 = vrot.slane %v1397, %v1410
  %v1412 = vcombine.low %v1404, %v1411
  %v1413 = vcombine.low %v1102, %v1110
  %v1414 = vcombine.low %v1109, %v1118
  %v1416 = vunpack.c.l.s4 1983009808
  %v1417 = vunpack.c.0.s8 %v1416
  %v1418 = vlaneseq
  %v1419 = vshrl.u32 %v1418, 7
  %v1420 = vsub.s32 %v1417, %v1419
  %v1421 = vrot.slane %v1413, %v1420
  %v1423 = vunpack.c.l.s4 1983009808
  %v1424 = vunpack.c.0.s8 %v1423
  %v1425 = vlaneseq
  %v1426 = vshrl.u32 %v1425, 7
  %v1427 = vsub.s32 %v1424, %v1426
  %v1428 = vrot.slane %v1414, %v1427
  %v1429 = vcombine.low %v1421, %v1428
  %v1430 = vcombine.low %v1126, %v1125
  %v1431 = vcombine.low %v1134, %v1142
  %v1433 = vunpack.c.l.s4 1983009808
  %v1434 = vunpack.c.0.s8 %v1433
  %v1435 = vlaneseq
  %v1436 = vshrl.u32 %v1435, 7
  %v1437 = vsub.s32 %v1434, %v1436
  %v1438 = vrot.slane %v1430, %v1437
  %v1440 = vunpack.c.l.s4 1983009808
  %v1441 = vunpack.c.0.s8 %v1440
  %v1442 = vlaneseq
  %v1443 = vshrl.u32 %v1442, 7
  %v1444 = vsub.s32 %v1441, %v1443
  %v1445 = vrot.slane %v1431, %v1444
  %v1446 = vcombine.low %v1438, %v1445
  %v1447 = vcombine.low %v1141, %v1150
  %v1448 = vcombine.low %v1158, %v1157
  %v1450 = vunpack.c.l.s4 1983009808
  %v1451 = vunpack.c.0.s8 %v1450
  %v1452 = vlaneseq
  %v1453 = vshrl.u32 %v1452, 7
  %v1454 = vsub.s32 %v1451, %v1453
  %v1455 = vrot.slane %v1447, %v1454
  %v1457 = vunpack.c.l.s4 1983009808
  %v1458 = vunpack.c.0.s8 %v1457
  %v1459 = vlaneseq
  %v1460 = vshrl.u32 %v1459, 7
  %v1461 = vsub.s32 %v1458, %v1460
  %v1462 = vrot.slane %v1448, %v1461
  %v1463 = vcombine.low %v1455, %v1462
  %v1464 = vcombine.low %v1166, %v1174
  %v1465 = vcombine.low %v1173, %v1182
  %v1467 = vunpack.c.l.s4 1983009808
  %v1468 = vunpack.c.0.s8 %v1467
  %v1469 = vlaneseq
  %v1470 = vshrl.u32 %v1469, 7
  %v1471 = vsub.s32 %v1468, %v1470
  %v1472 = vrot.slane %v1464, %v1471
  %v1474 = vunpack.c.l.s4 1983009808
  %v1475 = vunpack.c.0.s8 %v1474
  %v1476 = vlaneseq
  %v1477 = vshrl.u32 %v1476, 7
  %v1478 = vsub.s32 %v1475, %v1477
  %v1479 = vrot.slane %v1465, %v1478
  %v1480 = vcombine.low %v1472, %v1479
  %v1481 = vcombine.low %v1190, %v1189
  %v1482 = vcombine.low %v1198, %v1206
  %v1484 = vunpack.c.l.s4 1983009808
  %v1485 = vunpack.c.0.s8 %v1484
  %v1486 = vlaneseq
  %v1487 = vshrl.u32 %v1486, 7
  %v1488 = vsub.s32 %v1485, %v1487
  %v1489 = vrot.slane %v1481, %v1488
  %v1491 = vunpack.c.l.s4 1983009808
  %v1492 = vunpack.c.0.s8 %v1491
  %v1493 = vlaneseq
  %v1494 = vshrl.u32 %v1493, 7
  %v1495 = vsub.s32 %v1492, %v1494
  %v1496 = vrot.slane %v1482, %v1495
  %v1497 = vcombine.low %v1489, %v1496
  %v1498 = vcombine.low %v1205, %v1214
  %v1499 = vcombine.low %v1222, %v1221
  %v1501 = vunpack.c.l.s4 1983009808
  %v1502 = vunpack.c.0.s8 %v1501
  %v1503 = vlaneseq
  %v1504 = vshrl.u32 %v1503, 7
  %v1505 = vsub.s32 %v1502, %v1504
  %v1506 = vrot.slane %v1498, %v1505
  %v1508 = vunpack.c.l.s4 1983009808
  %v1509 = vunpack.c.0.s8 %v1508
  %v1510 = vlaneseq
  %v1511 = vshrl.u32 %v1510, 7
  %v1512 = vsub.s32 %v1509, %v1511
  %v1513 = vrot.slane %v1499, %v1512
  %v1514 = vcombine.low %v1506, %v1513
  %v1524 = vcombine.low %v1245, %v1248
  %v1525 = vcombine.low %v1251, %v1255
  %v1527 = vunpack.c.l.s4 1983009808
  %v1528 = vunpack.c.0.s8 %v1527
  %v1529 = vlaneseq
  %v1530 = vshrl.u32 %v1529, 7
  %v1531 = vsub.s32 %v1528, %v1530
  %v1532 = vrot.slane %v1524, %v1531
  %v1534 = vunpack.c.l.s4 1983009808
  %v1535 = vunpack.c.0.s8 %v1534
  %v1536 = vlaneseq
  %v1537 = vshrl.u32 %v1536, 7
  %v1538 = vsub.s32 %v1535, %v1537
  %v1539 = vrot.slane %v1525, %v1538
  %v1540 = vcombine.low %v1532, %v1539
  %v1541 = vcombine.low %v1258, %v1261
  %v1542 = vcombine.low %v1265, %v1268
  %v1544 = vunpack.c.l.s4 1983009808
  %v1545 = vunpack.c.0.s8 %v1544
  %v1546 = vlaneseq
  %v1547 = vshrl.u32 %v1546, 7
  %v1548 = vsub.s32 %v1545, %v1547
  %v1549 = vrot.slane %v1541, %v1548
  %v1551 = vunpack.c.l.s4 1983009808
  %v1552 = vunpack.c.0.s8 %v1551
  %v1553 = vlaneseq
  %v1554 = vshrl.u32 %v1553, 7
  %v1555 = vsub.s32 %v1552, %v1554
  %v1556 = vrot.slane %v1542, %v1555
  %v1557 = vcombine.low %v1549, %v1556
  %v1558 = vcombine.low %v1271, %v1275
  %v1559 = vcombine.low %v1278, %v1281
  %v1561 = vunpack.c.l.s4 1983009808
  %v1562 = vunpack.c.0.s8 %v1561
  %v1563 = vlaneseq
  %v1564 = vshrl.u32 %v1563, 7
  %v1565 = vsub.s32 %v1562, %v1564
  %v1566 = vrot.slane %v1558, %v1565
  %v1568 = vunpack.c.l.s4 1983009808
  %v1569 = vunpack.c.0.s8 %v1568
  %v1570 = vlaneseq
  %v1571 = vshrl.u32 %v1570, 7
  %v1572 = vsub.s32 %v1569, %v1571
  %v1573 = vrot.slane %v1559, %v1572
  %v1574 = vcombine.low %v1566, %v1573
  %v1575 = vcombine.low %v1285, %v1288
  %v1576 = vcombine.low %v1291, %v1295
  %v1578 = vunpack.c.l.s4 1983009808
  %v1579 = vunpack.c.0.s8 %v1578
  %v1580 = vlaneseq
  %v1581 = vshrl.u32 %v1580, 7
  %v1582 = vsub.s32 %v1579, %v1581
  %v1583 = vrot.slane %v1575, %v1582
  %v1585 = vunpack.c.l.s4 1983009808
  %v1586 = vunpack.c.0.s8 %v1585
  %v1587 = vlaneseq
  %v1588 = vshrl.u32 %v1587, 7
  %v1589 = vsub.s32 %v1586, %v1588
  %v1590 = vrot.slane %v1576, %v1589
  %v1591 = vcombine.low %v1583, %v1590
  %v1592 = vcombine.low %v1298, %v1301
  %v1593 = vcombine.low %v1305, %v1308
  %v1595 = vunpack.c.l.s4 1983009808
  %v1596 = vunpack.c.0.s8 %v1595
  %v1597 = vlaneseq
  %v1598 = vshrl.u32 %v1597, 7
  %v1599 = vsub.s32 %v1596, %v1598
  %v1600 = vrot.slane %v1592, %v1599
  %v1602 = vunpack.c.l.s4 1983009808
  %v1603 = vunpack.c.0.s8 %v1602
  %v1604 = vlaneseq
  %v1605 = vshrl.u32 %v1604, 7
  %v1606 = vsub.s32 %v1603, %v1605
  %v1607 = vrot.slane %v1593, %v1606
  %v1608 = vcombine.low %v1600, %v1607
  %v1609 = vcombine.low %v1311, %v1315
  %v1610 = vcombine.low %v1318, %v1321
  %v1612 = vunpack.c.l.s4 1983009808
  %v1613 = vunpack.c.0.s8 %v1612
  %v1614 = vlaneseq
  %v1615 = vshrl.u32 %v1614, 7
  %v1616 = vsub.s32 %v1613, %v1615
  %v1617 = vrot.slane %v1609, %v1616
  %v1619 = vunpack.c.l.s4 1983009808
  %v1620 = vunpack.c.0.s8 %v1619
  %v1621 = vlaneseq
  %v1622 = vshrl.u32 %v1621, 7
  %v1623 = vsub.s32 %v1620, %v1622
  %v1624 = vrot.slane %v1610, %v1623
  %v1625 = vcombine.low %v1617, %v1624
  %v1626 = vcombine.low %v1325, %v1328
  %v1627 = vcombine.low %v1331, %v1335
  %v1629 = vunpack.c.l.s4 1983009808
  %v1630 = vunpack.c.0.s8 %v1629
  %v1631 = vlaneseq
  %v1632 = vshrl.u32 %v1631, 7
  %v1633 = vsub.s32 %v1630, %v1632
  %v1634 = vrot.slane %v1626, %v1633
  %v1636 = vunpack.c.l.s4 1983009808
  %v1637 = vunpack.c.0.s8 %v1636
  %v1638 = vlaneseq
  %v1639 = vshrl.u32 %v1638, 7
  %v1640 = vsub.s32 %v1637, %v1639
  %v1641 = vrot.slane %v1627, %v1640
  %v1642 = vcombine.low %v1634, %v1641
  %v1643 = vcombine.low %v1338, %v1341
  %v1644 = vcombine.low %v1345, %v1348
  %v1646 = vunpack.c.l.s4 1983009808
  %v1647 = vunpack.c.0.s8 %v1646
  %v1648 = vlaneseq
  %v1649 = vshrl.u32 %v1648, 7
  %v1650 = vsub.s32 %v1647, %v1649
  %v1651 = vrot.slane %v1643, %v1650
  %v1653 = vunpack.c.l.s4 1983009808
  %v1654 = vunpack.c.0.s8 %v1653
  %v1655 = vlaneseq
  %v1656 = vshrl.u32 %v1655, 7
  %v1657 = vsub.s32 %v1654, %v1656
  %v1658 = vrot.slane %v1644, %v1657
  %v1659 = vcombine.low %v1651, %v1658
  %v1660 = vcombine.low %v1351, %v1355
  %v1661 = vcombine.low %v1358, %v1361
  %v1663 = vunpack.c.l.s4 1983009808
  %v1664 = vunpack.c.0.s8 %v1663
  %v1665 = vlaneseq
  %v1666 = vshrl.u32 %v1665, 7
  %v1667 = vsub.s32 %v1664, %v1666
  %v1668 = vrot.slane %v1660, %v1667
  %v1670 = vunpack.c.l.s4 1983009808
  %v1671 = vunpack.c.0.s8 %v1670
  %v1672 = vlaneseq
  %v1673 = vshrl.u32 %v1672, 7
  %v1674 = vsub.s32 %v1671, %v1673
  %v1675 = vrot.slane %v1661, %v1674
  %v1676 = vcombine.low %v1668, %v1675
  %1677 = vrot.lane.b32.xlu0 %v1540, 16
  %v1678 = vpop.permute.xlu0 %1677
  %1679 = vrot.lane.b32.xlu0 %v1557, 16
  %v1680 = vpop.permute.xlu0 %1679
  %1681 = vrot.lane.b32.xlu0 %v1574, 16
  %v1682 = vpop.permute.xlu0 %1681
  %1683 = vrot.lane.b32.xlu0 %v1591, 16
  %v1684 = vpop.permute.xlu0 %1683
  %1685 = vrot.lane.b32.xlu0 %v1608, 16
  %v1686 = vpop.permute.xlu0 %1685
  %1687 = vrot.lane.b32.xlu0 %v1625, 16
  %v1688 = vpop.permute.xlu0 %1687
  %1689 = vrot.lane.b32.xlu0 %v1642, 16
  %v1690 = vpop.permute.xlu0 %1689
  %1691 = vrot.lane.b32.xlu0 %v1659, 16
  %v1692 = vpop.permute.xlu0 %1691
  %1693 = vrot.lane.b32.xlu0 %v1676, 16
  %v1694 = vpop.permute.xlu0 %1693
  %v1704 = vcombine.low %v1046, %v1045
  %v1705 = vcombine.low %v1223, %v1062
  %v1707 = vunpack.c.l.s4 1983009808
  %v1708 = vunpack.c.0.s8 %v1707
  %v1709 = vlaneseq
  %v1710 = vshrl.u32 %v1709, 7
  %v1711 = vsub.s32 %v1708, %v1710
  %v1712 = vrot.slane %v1704, %v1711
  %v1714 = vunpack.c.l.s4 1983009808
  %v1715 = vunpack.c.0.s8 %v1714
  %v1716 = vlaneseq
  %v1717 = vshrl.u32 %v1716, 7
  %v1718 = vsub.s32 %v1715, %v1717
  %v1719 = vrot.slane %v1705, %v1718
  %v1720 = vcombine.low %v1712, %v1719
  %v1721 = vcombine.low %v1061, %v1224
  %v1722 = vcombine.low %v1078, %v1077
  %v1724 = vunpack.c.l.s4 1983009808
  %v1725 = vunpack.c.0.s8 %v1724
  %v1726 = vlaneseq
  %v1727 = vshrl.u32 %v1726, 7
  %v1728 = vsub.s32 %v1725, %v1727
  %v1729 = vrot.slane %v1721, %v1728
  %v1731 = vunpack.c.l.s4 1983009808
  %v1732 = vunpack.c.0.s8 %v1731
  %v1733 = vlaneseq
  %v1734 = vshrl.u32 %v1733, 7
  %v1735 = vsub.s32 %v1732, %v1734
  %v1736 = vrot.slane %v1722, %v1735
  %v1737 = vcombine.low %v1729, %v1736
  %v1738 = vcombine.low %v1225, %v1094
  %v1739 = vcombine.low %v1093, %v1226
  %v1741 = vunpack.c.l.s4 1983009808
  %v1742 = vunpack.c.0.s8 %v1741
  %v1743 = vlaneseq
  %v1744 = vshrl.u32 %v1743, 7
  %v1745 = vsub.s32 %v1742, %v1744
  %v1746 = vrot.slane %v1738, %v1745
  %v1748 = vunpack.c.l.s4 1983009808
  %v1749 = vunpack.c.0.s8 %v1748
  %v1750 = vlaneseq
  %v1751 = vshrl.u32 %v1750, 7
  %v1752 = vsub.s32 %v1749, %v1751
  %v1753 = vrot.slane %v1739, %v1752
  %v1754 = vcombine.low %v1746, %v1753
  %v1755 = vcombine.low %v1110, %v1109
  %v1756 = vcombine.low %v1227, %v1126
  %v1758 = vunpack.c.l.s4 1983009808
  %v1759 = vunpack.c.0.s8 %v1758
  %v1760 = vlaneseq
  %v1761 = vshrl.u32 %v1760, 7
  %v1762 = vsub.s32 %v1759, %v1761
  %v1763 = vrot.slane %v1755, %v1762
  %v1765 = vunpack.c.l.s4 1983009808
  %v1766 = vunpack.c.0.s8 %v1765
  %v1767 = vlaneseq
  %v1768 = vshrl.u32 %v1767, 7
  %v1769 = vsub.s32 %v1766, %v1768
  %v1770 = vrot.slane %v1756, %v1769
  %v1771 = vcombine.low %v1763, %v1770
  %v1772 = vcombine.low %v1125, %v1228
  %v1773 = vcombine.low %v1142, %v1141
  %v1775 = vunpack.c.l.s4 1983009808
  %v1776 = vunpack.c.0.s8 %v1775
  %v1777 = vlaneseq
  %v1778 = vshrl.u32 %v1777, 7
  %v1779 = vsub.s32 %v1776, %v1778
  %v1780 = vrot.slane %v1772, %v1779
  %v1782 = vunpack.c.l.s4 1983009808
  %v1783 = vunpack.c.0.s8 %v1782
  %v1784 = vlaneseq
  %v1785 = vshrl.u32 %v1784, 7
  %v1786 = vsub.s32 %v1783, %v1785
  %v1787 = vrot.slane %v1773, %v1786
  %v1788 = vcombine.low %v1780, %v1787
  %v1789 = vcombine.low %v1229, %v1158
  %v1790 = vcombine.low %v1157, %v1230
  %v1792 = vunpack.c.l.s4 1983009808
  %v1793 = vunpack.c.0.s8 %v1792
  %v1794 = vlaneseq
  %v1795 = vshrl.u32 %v1794, 7
  %v1796 = vsub.s32 %v1793, %v1795
  %v1797 = vrot.slane %v1789, %v1796
  %v1799 = vunpack.c.l.s4 1983009808
  %v1800 = vunpack.c.0.s8 %v1799
  %v1801 = vlaneseq
  %v1802 = vshrl.u32 %v1801, 7
  %v1803 = vsub.s32 %v1800, %v1802
  %v1804 = vrot.slane %v1790, %v1803
  %v1805 = vcombine.low %v1797, %v1804
  %v1806 = vcombine.low %v1174, %v1173
  %v1807 = vcombine.low %v1231, %v1190
  %v1809 = vunpack.c.l.s4 1983009808
  %v1810 = vunpack.c.0.s8 %v1809
  %v1811 = vlaneseq
  %v1812 = vshrl.u32 %v1811, 7
  %v1813 = vsub.s32 %v1810, %v1812
  %v1814 = vrot.slane %v1806, %v1813
  %v1816 = vunpack.c.l.s4 1983009808
  %v1817 = vunpack.c.0.s8 %v1816
  %v1818 = vlaneseq
  %v1819 = vshrl.u32 %v1818, 7
  %v1820 = vsub.s32 %v1817, %v1819
  %v1821 = vrot.slane %v1807, %v1820
  %v1822 = vcombine.low %v1814, %v1821
  %v1823 = vcombine.low %v1189, %v1232
  %v1824 = vcombine.low %v1206, %v1205
  %v1826 = vunpack.c.l.s4 1983009808
  %v1827 = vunpack.c.0.s8 %v1826
  %v1828 = vlaneseq
  %v1829 = vshrl.u32 %v1828, 7
  %v1830 = vsub.s32 %v1827, %v1829
  %v1831 = vrot.slane %v1823, %v1830
  %v1833 = vunpack.c.l.s4 1983009808
  %v1834 = vunpack.c.0.s8 %v1833
  %v1835 = vlaneseq
  %v1836 = vshrl.u32 %v1835, 7
  %v1837 = vsub.s32 %v1834, %v1836
  %v1838 = vrot.slane %v1824, %v1837
  %v1839 = vcombine.low %v1831, %v1838
  %v1840 = vcombine.low %v1233, %v1222
  %v1841 = vcombine.low %v1221, %v1234
  %v1843 = vunpack.c.l.s4 1983009808
  %v1844 = vunpack.c.0.s8 %v1843
  %v1845 = vlaneseq
  %v1846 = vshrl.u32 %v1845, 7
  %v1847 = vsub.s32 %v1844, %v1846
  %v1848 = vrot.slane %v1840, %v1847
  %v1850 = vunpack.c.l.s4 1983009808
  %v1851 = vunpack.c.0.s8 %v1850
  %v1852 = vlaneseq
  %v1853 = vshrl.u32 %v1852, 7
  %v1854 = vsub.s32 %v1851, %v1853
  %v1855 = vrot.slane %v1841, %v1854
  %v1856 = vcombine.low %v1848, %v1855
  %1857 = vrot.lane.b32.xlu0 %v1720, 32
  %v1858 = vpop.permute.xlu0 %1857
  %1859 = vrot.lane.b32.xlu0 %v1737, 32
  %v1860 = vpop.permute.xlu0 %1859
  %1861 = vrot.lane.b32.xlu0 %v1754, 32
  %v1862 = vpop.permute.xlu0 %1861
  %1863 = vrot.lane.b32.xlu0 %v1771, 32
  %v1864 = vpop.permute.xlu0 %1863
  %1865 = vrot.lane.b32.xlu0 %v1788, 32
  %v1866 = vpop.permute.xlu0 %1865
  %1867 = vrot.lane.b32.xlu0 %v1805, 32
  %v1868 = vpop.permute.xlu0 %1867
  %1869 = vrot.lane.b32.xlu0 %v1822, 32
  %v1870 = vpop.permute.xlu0 %1869
  %1871 = vrot.lane.b32.xlu0 %v1839, 32
  %v1872 = vpop.permute.xlu0 %1871
  %1873 = vrot.lane.b32.xlu0 %v1856, 32
  %v1874 = vpop.permute.xlu0 %1873
  %v1884 = vsel %vm827, %v1378, %v1678
  %v1885 = vsel %vm827, %v1395, %v1680
  %v1886 = vsel %vm827, %v1412, %v1682
  %v1887 = vsel %vm827, %v1429, %v1684
  %v1888 = vsel %vm827, %v1446, %v1686
  %v1889 = vsel %vm827, %v1463, %v1688
  %v1890 = vsel %vm827, %v1480, %v1690
  %v1891 = vsel %vm827, %v1497, %v1692
  %v1892 = vsel %vm827, %v1514, %v1694
  %v1893 = vsel %vm293, %v1884, %v1858
  %v1894 = vsel %vm293, %v1885, %v1860
  %v1895 = vsel %vm293, %v1886, %v1862
  %v1896 = vsel %vm293, %v1887, %v1864
  %v1897 = vsel %vm293, %v1888, %v1866
  %v1898 = vsel %vm293, %v1889, %v1868
  %v1899 = vsel %vm293, %v1890, %v1870
  %v1900 = vsel %vm293, %v1891, %v1872
  %v1901 = vsel %vm293, %v1892, %v1874
  %v1902 = vpack.c.bf16 %v1894, %v1893
  %v1903 = vpack.c.bf16 %v1896, %v1895
  %v1904 = vpack.c.bf16 %v1898, %v1897
  %v1905 = vpack.c.bf16 %v1900, %v1899
  %v1906 = vpack.c.bf16 %v1901, %v1901
  %v1907 = vld [vmem:[%s4] sm:$0xff]
  %v1908 = vld [vmem:[%s4 + $0x8] sm:$0xff]
  %v1909 = vld [vmem:[%s4 + $0x10] sm:$0xff]
  %v1910 = vld [vmem:[%s4 + $0x18] sm:$0xff]
  %v1911 = vld [vmem:[%s4 + $0x20] sm:$0xff]
  %v1912 = vld [vmem:[%s4 + $0x28] sm:$0xff]
  %v1913 = vpack.c.bf16 %v1908, %v1907
  %v1914 = vpack.c.bf16 %v1910, %v1909
  %v1915 = vpack.c.bf16 %v1912, %v1911
  %v1918 = vcombine.high %v1009, %v1009
  %v1920 = vunpack.c.l.s4 1983009808
  %v1921 = vunpack.c.0.s8 %v1920
  %v1922 = vlaneseq
  %v1923 = vshrl.u32 %v1922, 7
  %v1924 = vsub.s32 %v1921, %v1923
  %v1925 = vrot.slane %v1009, %v1924
  %v1927 = vunpack.c.l.s4 1983009808
  %v1928 = vunpack.c.0.s8 %v1927
  %v1929 = vlaneseq
  %v1930 = vshrl.u32 %v1929, 7
  %v1931 = vsub.s32 %v1928, %v1930
  %v1932 = vrot.slane %v1918, %v1931
  %v1933 = vcombine.high %v1925, %v1925
  %v1934 = vcombine.high %v1017, %v1017
  %v1936 = vunpack.c.l.s4 1983009808
  %v1937 = vunpack.c.0.s8 %v1936
  %v1938 = vlaneseq
  %v1939 = vshrl.u32 %v1938, 7
  %v1940 = vsub.s32 %v1937, %v1939
  %v1941 = vrot.slane %v1017, %v1940
  %v1943 = vunpack.c.l.s4 1983009808
  %v1944 = vunpack.c.0.s8 %v1943
  %v1945 = vlaneseq
  %v1946 = vshrl.u32 %v1945, 7
  %v1947 = vsub.s32 %v1944, %v1946
  %v1948 = vrot.slane %v1934, %v1947
  %v1949 = vcombine.high %v1941, %v1941
  %v1950 = vcombine.high %v1932, %v1932
  %v1951 = vcombine.high %v1948, %v1948
  %v1952 = vrot.slane %v1925, 7
  %v1953 = vrot.slane %v1952, 2
  %v1954 = vrot.slane %v1933, 7
  %v1955 = vsel %vm1241, %v1953, %v1954
  %v1956 = vrot.slane %v1954, 2
  %v1957 = vrot.slane %v1932, 7
  %v1958 = vsel %vm1241, %v1956, %v1957
  %v1959 = vrot.slane %v1957, 2
  %v1960 = vrot.slane %v1950, 7
  %v1961 = vsel %vm1241, %v1959, %v1960
  %v1962 = vrot.slane %v1941, 7
  %v1963 = vrot.slane %v1962, 2
  %v1964 = vrot.slane %v1949, 7
  %v1965 = vsel %vm1241, %v1963, %v1964
  %v1966 = vrot.slane %v1964, 2
  %v1967 = vrot.slane %v1948, 7
  %v1968 = vsel %vm1241, %v1966, %v1967
  %v1969 = vrot.slane %v1967, 2
  %v1970 = vrot.slane %v1951, 7
  %v1971 = vsel %vm1241, %v1969, %v1970
  %v1972 = vcombine.low %v1054, %v1062
  %v1973 = vcombine.low %v1061, %v1070
  %v1975 = vunpack.c.l.s4 1983009808
  %v1976 = vunpack.c.0.s8 %v1975
  %v1977 = vlaneseq
  %v1978 = vshrl.u32 %v1977, 7
  %v1979 = vsub.s32 %v1976, %v1978
  %v1980 = vrot.slane %v1972, %v1979
  %v1982 = vunpack.c.l.s4 1983009808
  %v1983 = vunpack.c.0.s8 %v1982
  %v1984 = vlaneseq
  %v1985 = vshrl.u32 %v1984, 7
  %v1986 = vsub.s32 %v1983, %v1985
  %v1987 = vrot.slane %v1973, %v1986
  %v1988 = vcombine.low %v1980, %v1987
  %v1989 = vcombine.low %v1086, %v1094
  %v1991 = vunpack.c.l.s4 1983009808
  %v1992 = vunpack.c.0.s8 %v1991
  %v1993 = vlaneseq
  %v1994 = vshrl.u32 %v1993, 7
  %v1995 = vsub.s32 %v1992, %v1994
  %v1996 = vrot.slane %v1989, %v1995
  %v1997 = vcombine.low %v1736, %v1996
  %v1998 = vcombine.low %v1093, %v1102
  %v2000 = vunpack.c.l.s4 1983009808
  %v2001 = vunpack.c.0.s8 %v2000
  %v2002 = vlaneseq
  %v2003 = vshrl.u32 %v2002, 7
  %v2004 = vsub.s32 %v2001, %v2003
  %v2005 = vrot.slane %v1998, %v2004
  %v2006 = vcombine.low %v2005, %v1763
  %v2007 = vcombine.low %v1118, %v1126
  %v2008 = vcombine.low %v1125, %v1925
  %v2010 = vunpack.c.l.s4 1983009808
  %v2011 = vunpack.c.0.s8 %v2010
  %v2012 = vlaneseq
  %v2013 = vshrl.u32 %v2012, 7
  %v2014 = vsub.s32 %v2011, %v2013
  %v2015 = vrot.slane %v2007, %v2014
  %v2017 = vunpack.c.l.s4 1983009808
  %v2018 = vunpack.c.0.s8 %v2017
  %v2019 = vlaneseq
  %v2020 = vshrl.u32 %v2019, 7
  %v2021 = vsub.s32 %v2018, %v2020
  %v2022 = vrot.slane %v2008, %v2021
  %v2023 = vcombine.low %v2015, %v2022
  %v2024 = vcombine.low %v1933, %v1932
  %v2025 = vcombine.low %v1150, %v1158
  %v2027 = vunpack.c.l.s4 1983009808
  %v2028 = vunpack.c.0.s8 %v2027
  %v2029 = vlaneseq
  %v2030 = vshrl.u32 %v2029, 7
  %v2031 = vsub.s32 %v2028, %v2030
  %v2032 = vrot.slane %v2024, %v2031
  %v2034 = vunpack.c.l.s4 1983009808
  %v2035 = vunpack.c.0.s8 %v2034
  %v2036 = vlaneseq
  %v2037 = vshrl.u32 %v2036, 7
  %v2038 = vsub.s32 %v2035, %v2037
  %v2039 = vrot.slane %v2025, %v2038
  %v2040 = vcombine.low %v2032, %v2039
  %v2041 = vcombine.low %v1157, %v1166
  %v2043 = vunpack.c.l.s4 1983009808
  %v2044 = vunpack.c.0.s8 %v2043
  %v2045 = vlaneseq
  %v2046 = vshrl.u32 %v2045, 7
  %v2047 = vsub.s32 %v2044, %v2046
  %v2048 = vrot.slane %v2041, %v2047
  %v2049 = vcombine.low %v2048, %v1814
  %v2050 = vcombine.low %v1182, %v1190
  %v2051 = vcombine.low %v1189, %v1198
  %v2053 = vunpack.c.l.s4 1983009808
  %v2054 = vunpack.c.0.s8 %v2053
  %v2055 = vlaneseq
  %v2056 = vshrl.u32 %v2055, 7
  %v2057 = vsub.s32 %v2054, %v2056
  %v2058 = vrot.slane %v2050, %v2057
  %v2060 = vunpack.c.l.s4 1983009808
  %v2061 = vunpack.c.0.s8 %v2060
  %v2062 = vlaneseq
  %v2063 = vshrl.u32 %v2062, 7
  %v2064 = vsub.s32 %v2061, %v2063
  %v2065 = vrot.slane %v2051, %v2064
  %v2066 = vcombine.low %v2058, %v2065
  %v2067 = vcombine.low %v1214, %v1222
  %v2069 = vunpack.c.l.s4 1983009808
  %v2070 = vunpack.c.0.s8 %v2069
  %v2071 = vlaneseq
  %v2072 = vshrl.u32 %v2071, 7
  %v2073 = vsub.s32 %v2070, %v2072
  %v2074 = vrot.slane %v2067, %v2073
  %v2075 = vcombine.low %v1838, %v2074
  %v2076 = vcombine.low %v1221, %v1941
  %v2077 = vcombine.low %v1949, %v1948
  %v2079 = vunpack.c.l.s4 1983009808
  %v2080 = vunpack.c.0.s8 %v2079
  %v2081 = vlaneseq
  %v2082 = vshrl.u32 %v2081, 7
  %v2083 = vsub.s32 %v2080, %v2082
  %v2084 = vrot.slane %v2076, %v2083
  %v2086 = vunpack.c.l.s4 1983009808
  %v2087 = vunpack.c.0.s8 %v2086
  %v2088 = vlaneseq
  %v2089 = vshrl.u32 %v2088, 7
  %v2090 = vsub.s32 %v2087, %v2089
  %v2091 = vrot.slane %v2077, %v2090
  %v2092 = vcombine.low %v2084, %v2091
  %v2102 = vcombine.low %v1255, %v1258
  %v2103 = vcombine.low %v1261, %v1265
  %v2105 = vunpack.c.l.s4 1983009808
  %v2106 = vunpack.c.0.s8 %v2105
  %v2107 = vlaneseq
  %v2108 = vshrl.u32 %v2107, 7
  %v2109 = vsub.s32 %v2106, %v2108
  %v2110 = vrot.slane %v2102, %v2109
  %v2112 = vunpack.c.l.s4 1983009808
  %v2113 = vunpack.c.0.s8 %v2112
  %v2114 = vlaneseq
  %v2115 = vshrl.u32 %v2114, 7
  %v2116 = vsub.s32 %v2113, %v2115
  %v2117 = vrot.slane %v2103, %v2116
  %v2118 = vcombine.low %v2110, %v2117
  %v2119 = vcombine.low %v1268, %v1271
  %v2120 = vcombine.low %v1275, %v1278
  %v2122 = vunpack.c.l.s4 1983009808
  %v2123 = vunpack.c.0.s8 %v2122
  %v2124 = vlaneseq
  %v2125 = vshrl.u32 %v2124, 7
  %v2126 = vsub.s32 %v2123, %v2125
  %v2127 = vrot.slane %v2119, %v2126
  %v2129 = vunpack.c.l.s4 1983009808
  %v2130 = vunpack.c.0.s8 %v2129
  %v2131 = vlaneseq
  %v2132 = vshrl.u32 %v2131, 7
  %v2133 = vsub.s32 %v2130, %v2132
  %v2134 = vrot.slane %v2120, %v2133
  %v2135 = vcombine.low %v2127, %v2134
  %v2136 = vcombine.low %v1281, %v1285
  %v2137 = vcombine.low %v1288, %v1291
  %v2139 = vunpack.c.l.s4 1983009808
  %v2140 = vunpack.c.0.s8 %v2139
  %v2141 = vlaneseq
  %v2142 = vshrl.u32 %v2141, 7
  %v2143 = vsub.s32 %v2140, %v2142
  %v2144 = vrot.slane %v2136, %v2143
  %v2146 = vunpack.c.l.s4 1983009808
  %v2147 = vunpack.c.0.s8 %v2146
  %v2148 = vlaneseq
  %v2149 = vshrl.u32 %v2148, 7
  %v2150 = vsub.s32 %v2147, %v2149
  %v2151 = vrot.slane %v2137, %v2150
  %v2152 = vcombine.low %v2144, %v2151
  %v2153 = vcombine.low %v1295, %v1298
  %v2154 = vcombine.low %v1301, %v1955
  %v2156 = vunpack.c.l.s4 1983009808
  %v2157 = vunpack.c.0.s8 %v2156
  %v2158 = vlaneseq
  %v2159 = vshrl.u32 %v2158, 7
  %v2160 = vsub.s32 %v2157, %v2159
  %v2161 = vrot.slane %v2153, %v2160
  %v2163 = vunpack.c.l.s4 1983009808
  %v2164 = vunpack.c.0.s8 %v2163
  %v2165 = vlaneseq
  %v2166 = vshrl.u32 %v2165, 7
  %v2167 = vsub.s32 %v2164, %v2166
  %v2168 = vrot.slane %v2154, %v2167
  %v2169 = vcombine.low %v2161, %v2168
  %v2170 = vcombine.low %v1958, %v1961
  %v2171 = vcombine.low %v1315, %v1318
  %v2173 = vunpack.c.l.s4 1983009808
  %v2174 = vunpack.c.0.s8 %v2173
  %v2175 = vlaneseq
  %v2176 = vshrl.u32 %v2175, 7
  %v2177 = vsub.s32 %v2174, %v2176
  %v2178 = vrot.slane %v2170, %v2177
  %v2180 = vunpack.c.l.s4 1983009808
  %v2181 = vunpack.c.0.s8 %v2180
  %v2182 = vlaneseq
  %v2183 = vshrl.u32 %v2182, 7
  %v2184 = vsub.s32 %v2181, %v2183
  %v2185 = vrot.slane %v2171, %v2184
  %v2186 = vcombine.low %v2178, %v2185
  %v2187 = vcombine.low %v1321, %v1325
  %v2188 = vcombine.low %v1328, %v1331
  %v2190 = vunpack.c.l.s4 1983009808
  %v2191 = vunpack.c.0.s8 %v2190
  %v2192 = vlaneseq
  %v2193 = vshrl.u32 %v2192, 7
  %v2194 = vsub.s32 %v2191, %v2193
  %v2195 = vrot.slane %v2187, %v2194
  %v2197 = vunpack.c.l.s4 1983009808
  %v2198 = vunpack.c.0.s8 %v2197
  %v2199 = vlaneseq
  %v2200 = vshrl.u32 %v2199, 7
  %v2201 = vsub.s32 %v2198, %v2200
  %v2202 = vrot.slane %v2188, %v2201
  %v2203 = vcombine.low %v2195, %v2202
  %v2204 = vcombine.low %v1335, %v1338
  %v2205 = vcombine.low %v1341, %v1345
  %v2207 = vunpack.c.l.s4 1983009808
  %v2208 = vunpack.c.0.s8 %v2207
  %v2209 = vlaneseq
  %v2210 = vshrl.u32 %v2209, 7
  %v2211 = vsub.s32 %v2208, %v2210
  %v2212 = vrot.slane %v2204, %v2211
  %v2214 = vunpack.c.l.s4 1983009808
  %v2215 = vunpack.c.0.s8 %v2214
  %v2216 = vlaneseq
  %v2217 = vshrl.u32 %v2216, 7
  %v2218 = vsub.s32 %v2215, %v2217
  %v2219 = vrot.slane %v2205, %v2218
  %v2220 = vcombine.low %v2212, %v2219
  %v2221 = vcombine.low %v1348, %v1351
  %v2222 = vcombine.low %v1355, %v1358
  %v2224 = vunpack.c.l.s4 1983009808
  %v2225 = vunpack.c.0.s8 %v2224
  %v2226 = vlaneseq
  %v2227 = vshrl.u32 %v2226, 7
  %v2228 = vsub.s32 %v2225, %v2227
  %v2229 = vrot.slane %v2221, %v2228
  %v2231 = vunpack.c.l.s4 1983009808
  %v2232 = vunpack.c.0.s8 %v2231
  %v2233 = vlaneseq
  %v2234 = vshrl.u32 %v2233, 7
  %v2235 = vsub.s32 %v2232, %v2234
  %v2236 = vrot.slane %v2222, %v2235
  %v2237 = vcombine.low %v2229, %v2236
  %v2238 = vcombine.low %v1361, %v1965
  %v2239 = vcombine.low %v1968, %v1971
  %v2241 = vunpack.c.l.s4 1983009808
  %v2242 = vunpack.c.0.s8 %v2241
  %v2243 = vlaneseq
  %v2244 = vshrl.u32 %v2243, 7
  %v2245 = vsub.s32 %v2242, %v2244
  %v2246 = vrot.slane %v2238, %v2245
  %v2248 = vunpack.c.l.s4 1983009808
  %v2249 = vunpack.c.0.s8 %v2248
  %v2250 = vlaneseq
  %v2251 = vshrl.u32 %v2250, 7
  %v2252 = vsub.s32 %v2249, %v2251
  %v2253 = vrot.slane %v2239, %v2252
  %v2254 = vcombine.low %v2246, %v2253
  %2255 = vrot.lane.b32.xlu0 %v2118, 16
  %v2256 = vpop.permute.xlu0 %2255
  %2257 = vrot.lane.b32.xlu0 %v2135, 16
  %v2258 = vpop.permute.xlu0 %2257
  %2259 = vrot.lane.b32.xlu0 %v2152, 16
  %v2260 = vpop.permute.xlu0 %2259
  %2261 = vrot.lane.b32.xlu0 %v2169, 16
  %v2262 = vpop.permute.xlu0 %2261
  %2263 = vrot.lane.b32.xlu0 %v2186, 16
  %v2264 = vpop.permute.xlu0 %2263
  %2265 = vrot.lane.b32.xlu0 %v2203, 16
  %v2266 = vpop.permute.xlu0 %2265
  %2267 = vrot.lane.b32.xlu0 %v2220, 16
  %v2268 = vpop.permute.xlu0 %2267
  %2269 = vrot.lane.b32.xlu0 %v2237, 16
  %v2270 = vpop.permute.xlu0 %2269
  %2271 = vrot.lane.b32.xlu0 %v2254, 16
  %v2272 = vpop.permute.xlu0 %2271
  %v2282 = vcombine.low %v1224, %v1078
  %v2284 = vunpack.c.l.s4 1983009808
  %v2285 = vunpack.c.0.s8 %v2284
  %v2286 = vlaneseq
  %v2287 = vshrl.u32 %v2286, 7
  %v2288 = vsub.s32 %v2285, %v2287
  %v2289 = vrot.slane %v2282, %v2288
  %v2290 = vcombine.low %v1387, %v2289
  %v2291 = vcombine.low %v1077, %v1225
  %v2293 = vunpack.c.l.s4 1983009808
  %v2294 = vunpack.c.0.s8 %v2293
  %v2295 = vlaneseq
  %v2296 = vshrl.u32 %v2295, 7
  %v2297 = vsub.s32 %v2294, %v2296
  %v2298 = vrot.slane %v2291, %v2297
  %v2299 = vcombine.low %v2298, %v1411
  %v2300 = vcombine.low %v1226, %v1110
  %v2301 = vcombine.low %v1109, %v1227
  %v2303 = vunpack.c.l.s4 1983009808
  %v2304 = vunpack.c.0.s8 %v2303
  %v2305 = vlaneseq
  %v2306 = vshrl.u32 %v2305, 7
  %v2307 = vsub.s32 %v2304, %v2306
  %v2308 = vrot.slane %v2300, %v2307
  %v2310 = vunpack.c.l.s4 1983009808
  %v2311 = vunpack.c.0.s8 %v2310
  %v2312 = vlaneseq
  %v2313 = vshrl.u32 %v2312, 7
  %v2314 = vsub.s32 %v2311, %v2313
  %v2315 = vrot.slane %v2301, %v2314
  %v2316 = vcombine.low %v2308, %v2315
  %v2317 = vcombine.low %v1228, %v1933
  %v2319 = vunpack.c.l.s4 1983009808
  %v2320 = vunpack.c.0.s8 %v2319
  %v2321 = vlaneseq
  %v2322 = vshrl.u32 %v2321, 7
  %v2323 = vsub.s32 %v2320, %v2322
  %v2324 = vrot.slane %v2317, %v2323
  %v2325 = vcombine.low %v1438, %v2324
  %v2326 = vcombine.low %v1932, %v1950
  %v2328 = vunpack.c.l.s4 1983009808
  %v2329 = vunpack.c.0.s8 %v2328
  %v2330 = vlaneseq
  %v2331 = vshrl.u32 %v2330, 7
  %v2332 = vsub.s32 %v2329, %v2331
  %v2333 = vrot.slane %v2326, %v2332
  %v2334 = vcombine.low %v2333, %v1462
  %v2335 = vcombine.low %v1230, %v1174
  %v2336 = vcombine.low %v1173, %v1231
  %v2338 = vunpack.c.l.s4 1983009808
  %v2339 = vunpack.c.0.s8 %v2338
  %v2340 = vlaneseq
  %v2341 = vshrl.u32 %v2340, 7
  %v2342 = vsub.s32 %v2339, %v2341
  %v2343 = vrot.slane %v2335, %v2342
  %v2345 = vunpack.c.l.s4 1983009808
  %v2346 = vunpack.c.0.s8 %v2345
  %v2347 = vlaneseq
  %v2348 = vshrl.u32 %v2347, 7
  %v2349 = vsub.s32 %v2346, %v2348
  %v2350 = vrot.slane %v2336, %v2349
  %v2351 = vcombine.low %v2343, %v2350
  %v2352 = vcombine.low %v1232, %v1206
  %v2354 = vunpack.c.l.s4 1983009808
  %v2355 = vunpack.c.0.s8 %v2354
  %v2356 = vlaneseq
  %v2357 = vshrl.u32 %v2356, 7
  %v2358 = vsub.s32 %v2355, %v2357
  %v2359 = vrot.slane %v2352, %v2358
  %v2360 = vcombine.low %v1489, %v2359
  %v2361 = vcombine.low %v1205, %v1233
  %v2363 = vunpack.c.l.s4 1983009808
  %v2364 = vunpack.c.0.s8 %v2363
  %v2365 = vlaneseq
  %v2366 = vshrl.u32 %v2365, 7
  %v2367 = vsub.s32 %v2364, %v2366
  %v2368 = vrot.slane %v2361, %v2367
  %v2369 = vcombine.low %v2368, %v1513
  %v2370 = vcombine.low %v1234, %v1949
  %v2371 = vcombine.low %v1948, %v1951
  %v2373 = vunpack.c.l.s4 1983009808
  %v2374 = vunpack.c.0.s8 %v2373
  %v2375 = vlaneseq
  %v2376 = vshrl.u32 %v2375, 7
  %v2377 = vsub.s32 %v2374, %v2376
  %v2378 = vrot.slane %v2370, %v2377
  %v2380 = vunpack.c.l.s4 1983009808
  %v2381 = vunpack.c.0.s8 %v2380
  %v2382 = vlaneseq
  %v2383 = vshrl.u32 %v2382, 7
  %v2384 = vsub.s32 %v2381, %v2383
  %v2385 = vrot.slane %v2371, %v2384
  %v2386 = vcombine.low %v2378, %v2385
  %2387 = vrot.lane.b32.xlu0 %v2290, 32
  %v2388 = vpop.permute.xlu0 %2387
  %2389 = vrot.lane.b32.xlu0 %v2299, 32
  %v2390 = vpop.permute.xlu0 %2389
  %2391 = vrot.lane.b32.xlu0 %v2316, 32
  %v2392 = vpop.permute.xlu0 %2391
  %2393 = vrot.lane.b32.xlu0 %v2325, 32
  %v2394 = vpop.permute.xlu0 %2393
  %2395 = vrot.lane.b32.xlu0 %v2334, 32
  %v2396 = vpop.permute.xlu0 %2395
  %2397 = vrot.lane.b32.xlu0 %v2351, 32
  %v2398 = vpop.permute.xlu0 %2397
  %2399 = vrot.lane.b32.xlu0 %v2360, 32
  %v2400 = vpop.permute.xlu0 %2399
  %2401 = vrot.lane.b32.xlu0 %v2369, 32
  %v2402 = vpop.permute.xlu0 %2401
  %2403 = vrot.lane.b32.xlu0 %v2386, 32
  %v2404 = vpop.permute.xlu0 %2403
  %v2414 = vsel %vm827, %v1988, %v2256
  %v2415 = vsel %vm827, %v1997, %v2258
  %v2416 = vsel %vm827, %v2006, %v2260
  %v2417 = vsel %vm827, %v2023, %v2262
  %v2418 = vsel %vm827, %v2040, %v2264
  %v2419 = vsel %vm827, %v2049, %v2266
  %v2420 = vsel %vm827, %v2066, %v2268
  %v2421 = vsel %vm827, %v2075, %v2270
  %v2422 = vsel %vm827, %v2092, %v2272
  %v2423 = vsel %vm293, %v2414, %v2388
  %v2424 = vsel %vm293, %v2415, %v2390
  %v2425 = vsel %vm293, %v2416, %v2392
  %v2426 = vsel %vm293, %v2417, %v2394
  %v2427 = vsel %vm293, %v2418, %v2396
  %v2428 = vsel %vm293, %v2419, %v2398
  %v2429 = vsel %vm293, %v2420, %v2400
  %v2430 = vsel %vm293, %v2421, %v2402
  %v2431 = vsel %vm293, %v2422, %v2404
  %v2432 = vpack.c.bf16 %v2424, %v2423
  %v2433 = vpack.c.bf16 %v2426, %v2425
  %v2434 = vpack.c.bf16 %v2428, %v2427
  %v2435 = vpack.c.bf16 %v2430, %v2429
  %v2436 = vpack.c.bf16 %v2431, %v2431
  %s2437 = scalar_lea.vmem %s4, 48
  %v2438 = vld [vmem:[%s2437] sm:$0xff]
  %v2439 = vld [vmem:[%s2437 + $0x8] sm:$0xff]
  %v2440 = vld [vmem:[%s2437 + $0x10] sm:$0xff]
  %v2441 = vld [vmem:[%s2437 + $0x18] sm:$0xff]
  %v2442 = vld [vmem:[%s2437 + $0x20] sm:$0xff]
  %v2443 = vld [vmem:[%s2437 + $0x28] sm:$0xff]
  %v2444 = vpack.c.bf16 %v2439, %v2438
  %v2445 = vpack.c.bf16 %v2441, %v2440
  %v2446 = vpack.c.bf16 %v2443, %v2442
  %vm2447 = vcmask 392192
  %v2449 = vsel %vm2447, %v2432, 0
  %v2452 = vsel %vm2447, %v2433, 0
  %v2455 = vsel %vm2447, %v2434, 0
  %v2458 = vsel %vm2447, %v2435, 0
  %v2461 = vsel %vm2447, %v2436, 0
  %2463 = vmatprep.subr.bf16.mxu0 0
  %2464 = vmatpush1.bf16.msra.mxu0 %v2444
  %2465 = vmatprep.subr.bf16.mxu0 0
  %2466 = vmatpush1.bf16.msra.mxu0 %v2445
  %2467 = vmatprep.subr.bf16.mxu0 0
  %2468 = vmatpush1.bf16.msra.mxu0 %v2446
  %2469 = vmatprep.subr.bf16.mxu0 0
  %2470 = vmatpush1.bf16.msra.mxu0 0
  %2471 = vmatprep.subr.bf16.mxu0 0
  %2472 = vmatpush1.bf16.msra.mxu0 0
  %2473 = vmatprep.subr.bf16.mxu0 0
  %2474 = vmatpush1.bf16.msra.mxu0 0
  %2475 = vmatprep.subr.bf16.mxu0 0
  %2476 = vmatpush1.bf16.msra.mxu0 0
  %2477 = vmatprep.subr.bf16.mxu0 0
  %2478 = vmatpush1.bf16.msra.mxu0 0
  %2479 = vmatprep.subr.bf16.mxu0 0
  %2480 = vmatpush1.bf16.msra.mxu0 0
  %2481 = vmatprep.subr.bf16.mxu0 0
  %2482 = vmatpush1.bf16.msra.mxu0 0
  %2483 = vmatprep.subr.bf16.mxu0 0
  %2484 = vmatpush1.bf16.msra.mxu0 0
  %2485 = vmatprep.subr.bf16.mxu0 0
  %2486 = vmatpush1.bf16.msra.mxu0 0
  %2487 = vmatprep.subr.bf16.mxu0 0
  %2488 = vmatpush1.bf16.msra.mxu0 0
  %2489 = vmatprep.subr.bf16.mxu0 0
  %2490 = vmatpush1.bf16.msra.mxu0 0
  %2491 = vmatprep.subr.bf16.mxu0 0
  %2492 = vmatpush1.bf16.msra.mxu0 0
  %2493 = vmatprep.subr.bf16.mxu0 0
  %2494 = vmatpush1.bf16.msra.mxu0 0
  %2495 = vmatprep.mubr.bf16.mxu0 0
  %2496 = vmatmul.mubr.bf16.gmra.mrb[0].mxu0 %v2449
  %v2497 = vpop.f32.mrb[0].mxu0
  %v2498 = vadd.f32 0.0, %v2497
  %v2499 = vpop.f32.mrb[0].mxu0
  %v2500 = vpop.f32.mrb[0].mxu0
  %v2501 = vadd.f32 0.0, %v2500
  %v2502 = vpop.f32.mrb[0].mxu0
  %2503 = vmatprep.mubr.bf16.mxu0 0
  %2504 = vmatmul.mubr.bf16.gmra.mrb[0].mxu0 %v2452
  %v2505 = vpop.f32.mrb[0].mxu0
  %v2506 = vadd.f32 0.0, %v2505
  %v2507 = vpop.f32.mrb[0].mxu0
  %v2508 = vpop.f32.mrb[0].mxu0
  %v2509 = vadd.f32 0.0, %v2508
  %v2510 = vpop.f32.mrb[0].mxu0
  %2511 = vmatprep.mubr.bf16.mxu0 0
  %2512 = vmatmul.mubr.bf16.gmra.mrb[0].mxu0 %v2455
  %v2513 = vpop.f32.mrb[0].mxu0
  %v2514 = vadd.f32 0.0, %v2513
  %v2515 = vpop.f32.mrb[0].mxu0
  %v2516 = vpop.f32.mrb[0].mxu0
  %v2517 = vadd.f32 0.0, %v2516
  %v2518 = vpop.f32.mrb[0].mxu0
  %2519 = vmatprep.mubr.bf16.mxu0 0
  %2520 = vmatmul.mubr.bf16.gmra.mrb[0].mxu0 %v2458
  %v2521 = vpop.f32.mrb[0].mxu0
  %v2522 = vadd.f32 0.0, %v2521
  %v2523 = vpop.f32.mrb[0].mxu0
  %v2524 = vpop.f32.mrb[0].mxu0
  %v2525 = vadd.f32 0.0, %v2524
  %v2526 = vpop.f32.mrb[0].mxu0
  %2527 = vmatprep.mubr.bf16.mxu0 0
  %2528 = vmatmul.mubr.bf16.gmra.mrb[0].mxu0 %v2461
  %v2529 = vpop.f32.mrb[0].mxu0
  %v2530 = vadd.f32 0.0, %v2529
  %v2531 = vpop.f32.mrb[0].mxu0
  %v2532 = vpop.f32.mrb[0].mxu0
  %v2533 = vpop.f32.mrb[0].mxu0
  %2534 = vdwg.mxu0
  %v2536 = vsel %vm2447, %v1902, 0
  %v2539 = vsel %vm2447, %v1903, 0
  %v2542 = vsel %vm2447, %v1904, 0
  %v2545 = vsel %vm2447, %v1905, 0
  %v2548 = vsel %vm2447, %v1906, 0
  %2550 = vmatprep.subr.bf16.mxu0 0
  %2551 = vmatpush1.bf16.msra.mxu0 %v1913
  %2552 = vmatprep.subr.bf16.mxu0 0
  %2553 = vmatpush1.bf16.msra.mxu0 %v1914
  %2554 = vmatprep.subr.bf16.mxu0 0
  %2555 = vmatpush1.bf16.msra.mxu0 %v1915
  %2556 = vmatprep.subr.bf16.mxu0 0
  %2557 = vmatpush1.bf16.msra.mxu0 0
  %2558 = vmatprep.subr.bf16.mxu0 0
  %2559 = vmatpush1.bf16.msra.mxu0 0
  %2560 = vmatprep.subr.bf16.mxu0 0
  %2561 = vmatpush1.bf16.msra.mxu0 0
  %2562 = vmatprep.subr.bf16.mxu0 0
  %2563 = vmatpush1.bf16.msra.mxu0 0
  %2564 = vmatprep.subr.bf16.mxu0 0
  %2565 = vmatpush1.bf16.msra.mxu0 0
  %2566 = vmatprep.subr.bf16.mxu0 0
  %2567 = vmatpush1.bf16.msra.mxu0 0
  %2568 = vmatprep.subr.bf16.mxu0 0
  %2569 = vmatpush1.bf16.msra.mxu0 0
  %2570 = vmatprep.subr.bf16.mxu0 0
  %2571 = vmatpush1.bf16.msra.mxu0 0
  %2572 = vmatprep.subr.bf16.mxu0 0
  %2573 = vmatpush1.bf16.msra.mxu0 0
  %2574 = vmatprep.subr.bf16.mxu0 0
  %2575 = vmatpush1.bf16.msra.mxu0 0
  %2576 = vmatprep.subr.bf16.mxu0 0
  %2577 = vmatpush1.bf16.msra.mxu0 0
  %2578 = vmatprep.subr.bf16.mxu0 0
  %2579 = vmatpush1.bf16.msra.mxu0 0
  %2580 = vmatprep.subr.bf16.mxu0 0
  %2581 = vmatpush1.bf16.msra.mxu0 0
  %2582 = vmatprep.mubr.bf16.mxu0 0
  %2583 = vmatmul.mubr.bf16.gmra.mrb[0].mxu0 %v2536
  %v2584 = vpop.f32.mrb[0].mxu0
  %v2585 = vadd.f32 %v2498, %v2584
  %v2586 = vpop.f32.mrb[0].mxu0
  %v2587 = vpop.f32.mrb[0].mxu0
  %v2588 = vadd.f32 %v2501, %v2587
  %v2589 = vpop.f32.mrb[0].mxu0
  %2590 = vmatprep.mubr.bf16.mxu0 0
  %2591 = vmatmul.mubr.bf16.gmra.mrb[0].mxu0 %v2539
  %v2592 = vpop.f32.mrb[0].mxu0
  %v2593 = vadd.f32 %v2506, %v2592
  %v2594 = vpop.f32.mrb[0].mxu0
  %v2595 = vpop.f32.mrb[0].mxu0
  %v2596 = vadd.f32 %v2509, %v2595
  %v2597 = vpop.f32.mrb[0].mxu0
  %2598 = vmatprep.mubr.bf16.mxu0 0
  %2599 = vmatmul.mubr.bf16.gmra.mrb[0].mxu0 %v2542
  %v2600 = vpop.f32.mrb[0].mxu0
  %v2601 = vadd.f32 %v2514, %v2600
  %v2602 = vpop.f32.mrb[0].mxu0
  %v2603 = vpop.f32.mrb[0].mxu0
  %v2604 = vadd.f32 %v2517, %v2603
  %v2605 = vpop.f32.mrb[0].mxu0
  %2606 = vmatprep.mubr.bf16.mxu0 0
  %2607 = vmatmul.mubr.bf16.gmra.mrb[0].mxu0 %v2545
  %v2608 = vpop.f32.mrb[0].mxu0
  %v2609 = vadd.f32 %v2522, %v2608
  %v2610 = vpop.f32.mrb[0].mxu0
  %v2611 = vpop.f32.mrb[0].mxu0
  %v2612 = vadd.f32 %v2525, %v2611
  %v2613 = vpop.f32.mrb[0].mxu0
  %2614 = vmatprep.mubr.bf16.mxu0 0
  %2615 = vmatmul.mubr.bf16.gmra.mrb[0].mxu0 %v2548
  %v2616 = vpop.f32.mrb[0].mxu0
  %v2617 = vadd.f32 %v2530, %v2616
  %v2618 = vpop.f32.mrb[0].mxu0
  %v2619 = vpop.f32.mrb[0].mxu0
  %v2620 = vpop.f32.mrb[0].mxu0
  %2621 = vdwg.mxu0
  %v2624 = vcombine.high %v1010, %v1010
  %v2626 = vunpack.c.l.s4 1983009808
  %v2627 = vunpack.c.0.s8 %v2626
  %v2628 = vlaneseq
  %v2629 = vshrl.u32 %v2628, 7
  %v2630 = vsub.s32 %v2627, %v2629
  %v2631 = vrot.slane %v1010, %v2630
  %v2633 = vunpack.c.l.s4 1983009808
  %v2634 = vunpack.c.0.s8 %v2633
  %v2635 = vlaneseq
  %v2636 = vshrl.u32 %v2635, 7
  %v2637 = vsub.s32 %v2634, %v2636
  %v2638 = vrot.slane %v2624, %v2637
  %v2639 = vcombine.high %v2631, %v2631
  %v2640 = vcombine.high %v1018, %v1018
  %v2642 = vunpack.c.l.s4 1983009808
  %v2643 = vunpack.c.0.s8 %v2642
  %v2644 = vlaneseq
  %v2645 = vshrl.u32 %v2644, 7
  %v2646 = vsub.s32 %v2643, %v2645
  %v2647 = vrot.slane %v1018, %v2646
  %v2649 = vunpack.c.l.s4 1983009808
  %v2650 = vunpack.c.0.s8 %v2649
  %v2651 = vlaneseq
  %v2652 = vshrl.u32 %v2651, 7
  %v2653 = vsub.s32 %v2650, %v2652
  %v2654 = vrot.slane %v2640, %v2653
  %v2655 = vcombine.high %v2647, %v2647
  %v2656 = vcombine.high %v2638, %v2638
  %v2657 = vcombine.high %v2654, %v2654
  %v2658 = vrot.slane %v2631, 7
  %v2659 = vrot.slane %v2658, 2
  %v2660 = vrot.slane %v2639, 7
  %v2661 = vsel %vm1241, %v2659, %v2660
  %v2662 = vrot.slane %v2660, 2
  %v2663 = vrot.slane %v2638, 7
  %v2664 = vsel %vm1241, %v2662, %v2663
  %v2665 = vrot.slane %v2663, 2
  %v2666 = vrot.slane %v2656, 7
  %v2667 = vsel %vm1241, %v2665, %v2666
  %v2668 = vrot.slane %v2647, 7
  %v2669 = vrot.slane %v2668, 2
  %v2670 = vrot.slane %v2655, 7
  %v2671 = vsel %vm1241, %v2669, %v2670
  %v2672 = vrot.slane %v2670, 2
  %v2673 = vrot.slane %v2654, 7
  %v2674 = vsel %vm1241, %v2672, %v2673
  %v2675 = vrot.slane %v2673, 2
  %v2676 = vrot.slane %v2657, 7
  %v2677 = vsel %vm1241, %v2675, %v2676
  %v2678 = vcombine.low %v1394, %v1404
  %v2679 = vcombine.low %v1411, %v1421
  %v2680 = vcombine.low %v1428, %v1438
  %v2681 = vcombine.low %v1925, %v1933
  %v2682 = vcombine.low %v1932, %v2631
  %v2684 = vunpack.c.l.s4 1983009808
  %v2685 = vunpack.c.0.s8 %v2684
  %v2686 = vlaneseq
  %v2687 = vshrl.u32 %v2686, 7
  %v2688 = vsub.s32 %v2685, %v2687
  %v2689 = vrot.slane %v2681, %v2688
  %v2691 = vunpack.c.l.s4 1983009808
  %v2692 = vunpack.c.0.s8 %v2691
  %v2693 = vlaneseq
  %v2694 = vshrl.u32 %v2693, 7
  %v2695 = vsub.s32 %v2692, %v2694
  %v2696 = vrot.slane %v2682, %v2695
  %v2697 = vcombine.low %v2689, %v2696
  %v2698 = vcombine.low %v2639, %v2638
  %v2700 = vunpack.c.l.s4 1983009808
  %v2701 = vunpack.c.0.s8 %v2700
  %v2702 = vlaneseq
  %v2703 = vshrl.u32 %v2702, 7
  %v2704 = vsub.s32 %v2701, %v2703
  %v2705 = vrot.slane %v2698, %v2704
  %v2706 = vcombine.low %v2705, %v1472
  %v2707 = vcombine.low %v1479, %v1489
  %v2708 = vcombine.low %v1496, %v1506
  %v2709 = vcombine.low %v1941, %v1949
  %v2711 = vunpack.c.l.s4 1983009808
  %v2712 = vunpack.c.0.s8 %v2711
  %v2713 = vlaneseq
  %v2714 = vshrl.u32 %v2713, 7
  %v2715 = vsub.s32 %v2712, %v2714
  %v2716 = vrot.slane %v2709, %v2715
  %v2717 = vcombine.low %v1513, %v2716
  %v2718 = vcombine.low %v1948, %v2647
  %v2719 = vcombine.low %v2655, %v2654
  %v2721 = vunpack.c.l.s4 1983009808
  %v2722 = vunpack.c.0.s8 %v2721
  %v2723 = vlaneseq
  %v2724 = vshrl.u32 %v2723, 7
  %v2725 = vsub.s32 %v2722, %v2724
  %v2726 = vrot.slane %v2718, %v2725
  %v2728 = vunpack.c.l.s4 1983009808
  %v2729 = vunpack.c.0.s8 %v2728
  %v2730 = vlaneseq
  %v2731 = vshrl.u32 %v2730, 7
  %v2732 = vsub.s32 %v2729, %v2731
  %v2733 = vrot.slane %v2719, %v2732
  %v2734 = vcombine.low %v2726, %v2733
  %v2744 = vcombine.low %v1556, %v1566
  %v2745 = vcombine.low %v1573, %v1583
  %v2746 = vcombine.low %v1590, %v1600
  %v2747 = vcombine.low %v1955, %v1958
  %v2748 = vcombine.low %v1961, %v2661
  %v2750 = vunpack.c.l.s4 1983009808
  %v2751 = vunpack.c.0.s8 %v2750
  %v2752 = vlaneseq
  %v2753 = vshrl.u32 %v2752, 7
  %v2754 = vsub.s32 %v2751, %v2753
  %v2755 = vrot.slane %v2747, %v2754
  %v2757 = vunpack.c.l.s4 1983009808
  %v2758 = vunpack.c.0.s8 %v2757
  %v2759 = vlaneseq
  %v2760 = vshrl.u32 %v2759, 7
  %v2761 = vsub.s32 %v2758, %v2760
  %v2762 = vrot.slane %v2748, %v2761
  %v2763 = vcombine.low %v2755, %v2762
  %v2764 = vcombine.low %v2664, %v2667
  %v2766 = vunpack.c.l.s4 1983009808
  %v2767 = vunpack.c.0.s8 %v2766
  %v2768 = vlaneseq
  %v2769 = vshrl.u32 %v2768, 7
  %v2770 = vsub.s32 %v2767, %v2769
  %v2771 = vrot.slane %v2764, %v2770
  %v2772 = vcombine.low %v2771, %v1634
  %v2773 = vcombine.low %v1641, %v1651
  %v2774 = vcombine.low %v1658, %v1668
  %v2775 = vcombine.low %v1965, %v1968
  %v2777 = vunpack.c.l.s4 1983009808
  %v2778 = vunpack.c.0.s8 %v2777
  %v2779 = vlaneseq
  %v2780 = vshrl.u32 %v2779, 7
  %v2781 = vsub.s32 %v2778, %v2780
  %v2782 = vrot.slane %v2775, %v2781
  %v2783 = vcombine.low %v1675, %v2782
  %v2784 = vcombine.low %v1971, %v2671
  %v2785 = vcombine.low %v2674, %v2677
  %v2787 = vunpack.c.l.s4 1983009808
  %v2788 = vunpack.c.0.s8 %v2787
  %v2789 = vlaneseq
  %v2790 = vshrl.u32 %v2789, 7
  %v2791 = vsub.s32 %v2788, %v2790
  %v2792 = vrot.slane %v2784, %v2791
  %v2794 = vunpack.c.l.s4 1983009808
  %v2795 = vunpack.c.0.s8 %v2794
  %v2796 = vlaneseq
  %v2797 = vshrl.u32 %v2796, 7
  %v2798 = vsub.s32 %v2795, %v2797
  %v2799 = vrot.slane %v2785, %v2798
  %v2800 = vcombine.low %v2792, %v2799
  %2801 = vrot.lane.b32.xlu0 %v2744, 16
  %v2802 = vpop.permute.xlu0 %2801
  %2803 = vrot.lane.b32.xlu0 %v2745, 16
  %v2804 = vpop.permute.xlu0 %2803
  %2805 = vrot.lane.b32.xlu0 %v2746, 16
  %v2806 = vpop.permute.xlu0 %2805
  %2807 = vrot.lane.b32.xlu0 %v2763, 16
  %v2808 = vpop.permute.xlu0 %2807
  %2809 = vrot.lane.b32.xlu0 %v2772, 16
  %v2810 = vpop.permute.xlu0 %2809
  %2811 = vrot.lane.b32.xlu0 %v2773, 16
  %v2812 = vpop.permute.xlu0 %2811
  %2813 = vrot.lane.b32.xlu0 %v2774, 16
  %v2814 = vpop.permute.xlu0 %2813
  %2815 = vrot.lane.b32.xlu0 %v2783, 16
  %v2816 = vpop.permute.xlu0 %2815
  %2817 = vrot.lane.b32.xlu0 %v2800, 16
  %v2818 = vpop.permute.xlu0 %2817
  %v2828 = vcombine.low %v1736, %v1746
  %v2829 = vcombine.low %v1753, %v1763
  %v2830 = vcombine.low %v1770, %v1780
  %v2831 = vcombine.low %v1950, %v2639
  %v2833 = vunpack.c.l.s4 1983009808
  %v2834 = vunpack.c.0.s8 %v2833
  %v2835 = vlaneseq
  %v2836 = vshrl.u32 %v2835, 7
  %v2837 = vsub.s32 %v2834, %v2836
  %v2838 = vrot.slane %v2831, %v2837
  %v2839 = vcombine.low %v2032, %v2838
  %v2840 = vcombine.low %v2638, %v2656
  %v2842 = vunpack.c.l.s4 1983009808
  %v2843 = vunpack.c.0.s8 %v2842
  %v2844 = vlaneseq
  %v2845 = vshrl.u32 %v2844, 7
  %v2846 = vsub.s32 %v2843, %v2845
  %v2847 = vrot.slane %v2840, %v2846
  %v2848 = vcombine.low %v2847, %v1814
  %v2849 = vcombine.low %v1821, %v1831
  %v2850 = vcombine.low %v1838, %v1848
  %v2851 = vcombine.low %v1855, %v2091
  %v2852 = vcombine.low %v1951, %v2655
  %v2853 = vcombine.low %v2654, %v2657
  %v2855 = vunpack.c.l.s4 1983009808
  %v2856 = vunpack.c.0.s8 %v2855
  %v2857 = vlaneseq
  %v2858 = vshrl.u32 %v2857, 7
  %v2859 = vsub.s32 %v2856, %v2858
  %v2860 = vrot.slane %v2852, %v2859
  %v2862 = vunpack.c.l.s4 1983009808
  %v2863 = vunpack.c.0.s8 %v2862
  %v2864 = vlaneseq
  %v2865 = vshrl.u32 %v2864, 7
  %v2866 = vsub.s32 %v2863, %v2865
  %v2867 = vrot.slane %v2853, %v2866
  %v2868 = vcombine.low %v2860, %v2867
  %2869 = vrot.lane.b32.xlu0 %v2828, 32
  %v2870 = vpop.permute.xlu0 %2869
  %2871 = vrot.lane.b32.xlu0 %v2829, 32
  %v2872 = vpop.permute.xlu0 %2871
  %2873 = vrot.lane.b32.xlu0 %v2830, 32
  %v2874 = vpop.permute.xlu0 %2873
  %2875 = vrot.lane.b32.xlu0 %v2839, 32
  %v2876 = vpop.permute.xlu0 %2875
  %2877 = vrot.lane.b32.xlu0 %v2848, 32
  %v2878 = vpop.permute.xlu0 %2877
  %2879 = vrot.lane.b32.xlu0 %v2849, 32
  %v2880 = vpop.permute.xlu0 %2879
  %2881 = vrot.lane.b32.xlu0 %v2850, 32
  %v2882 = vpop.permute.xlu0 %2881
  %2883 = vrot.lane.b32.xlu0 %v2851, 32
  %v2884 = vpop.permute.xlu0 %2883
  %2885 = vrot.lane.b32.xlu0 %v2868, 32
  %v2886 = vpop.permute.xlu0 %2885
  %v2896 = vsel %vm827, %v2678, %v2802
  %v2897 = vsel %vm827, %v2679, %v2804
  %v2898 = vsel %vm827, %v2680, %v2806
  %v2899 = vsel %vm827, %v2697, %v2808
  %v2900 = vsel %vm827, %v2706, %v2810
  %v2901 = vsel %vm827, %v2707, %v2812
  %v2902 = vsel %vm827, %v2708, %v2814
  %v2903 = vsel %vm827, %v2717, %v2816
  %v2904 = vsel %vm827, %v2734, %v2818
  %v2905 = vsel %vm293, %v2896, %v2870
  %v2906 = vsel %vm293, %v2897, %v2872
  %v2907 = vsel %vm293, %v2898, %v2874
  %v2908 = vsel %vm293, %v2899, %v2876
  %v2909 = vsel %vm293, %v2900, %v2878
  %v2910 = vsel %vm293, %v2901, %v2880
  %v2911 = vsel %vm293, %v2902, %v2882
  %v2912 = vsel %vm293, %v2903, %v2884
  %v2913 = vsel %vm293, %v2904, %v2886
  %v2914 = vpack.c.bf16 %v2906, %v2905
  %v2915 = vpack.c.bf16 %v2908, %v2907
  %v2916 = vpack.c.bf16 %v2910, %v2909
  %v2917 = vpack.c.bf16 %v2912, %v2911
  %v2918 = vpack.c.bf16 %v2913, %v2913
  %s2919 = scalar_lea.vmem %s4, 96
  %v2920 = vld [vmem:[%s2919] sm:$0xff]
  %v2921 = vld [vmem:[%s2919 + $0x8] sm:$0xff]
  %v2922 = vld [vmem:[%s2919 + $0x10] sm:$0xff]
  %v2923 = vld [vmem:[%s2919 + $0x18] sm:$0xff]
  %v2924 = vld [vmem:[%s2919 + $0x20] sm:$0xff]
  %v2925 = vld [vmem:[%s2919 + $0x28] sm:$0xff]
  %v2926 = vpack.c.bf16 %v2921, %v2920
  %v2927 = vpack.c.bf16 %v2923, %v2922
  %v2928 = vpack.c.bf16 %v2925, %v2924
  %v2930 = vsel %vm2447, %v2914, 0
  %v2933 = vsel %vm2447, %v2915, 0
  %v2936 = vsel %vm2447, %v2916, 0
  %v2939 = vsel %vm2447, %v2917, 0
  %v2942 = vsel %vm2447, %v2918, 0
  %2944 = vmatprep.subr.bf16.mxu0 0
  %2945 = vmatpush1.bf16.msra.mxu0 %v2926
  %2946 = vmatprep.subr.bf16.mxu0 0
  %2947 = vmatpush1.bf16.msra.mxu0 %v2927
  %2948 = vmatprep.subr.bf16.mxu0 0
  %2949 = vmatpush1.bf16.msra.mxu0 %v2928
  %2950 = vmatprep.subr.bf16.mxu0 0
  %2951 = vmatpush1.bf16.msra.mxu0 0
  %2952 = vmatprep.subr.bf16.mxu0 0
  %2953 = vmatpush1.bf16.msra.mxu0 0
  %2954 = vmatprep.subr.bf16.mxu0 0
  %2955 = vmatpush1.bf16.msra.mxu0 0
  %2956 = vmatprep.subr.bf16.mxu0 0
  %2957 = vmatpush1.bf16.msra.mxu0 0
  %2958 = vmatprep.subr.bf16.mxu0 0
  %2959 = vmatpush1.bf16.msra.mxu0 0
  %2960 = vmatprep.subr.bf16.mxu0 0
  %2961 = vmatpush1.bf16.msra.mxu0 0
  %2962 = vmatprep.subr.bf16.mxu0 0
  %2963 = vmatpush1.bf16.msra.mxu0 0
  %2964 = vmatprep.subr.bf16.mxu0 0
  %2965 = vmatpush1.bf16.msra.mxu0 0
  %2966 = vmatprep.subr.bf16.mxu0 0
  %2967 = vmatpush1.bf16.msra.mxu0 0
  %2968 = vmatprep.subr.bf16.mxu0 0
  %2969 = vmatpush1.bf16.msra.mxu0 0
  %2970 = vmatprep.subr.bf16.mxu0 0
  %2971 = vmatpush1.bf16.msra.mxu0 0
  %2972 = vmatprep.subr.bf16.mxu0 0
  %2973 = vmatpush1.bf16.msra.mxu0 0
  %2974 = vmatprep.subr.bf16.mxu0 0
  %2975 = vmatpush1.bf16.msra.mxu0 0
  %2976 = vmatprep.mubr.bf16.mxu0 0
  %2977 = vmatmul.mubr.bf16.gmra.mrb[0].mxu0 %v2930
  %v2978 = vpop.f32.mrb[0].mxu0
  %v2979 = vadd.f32 0.0, %v2978
  %v2980 = vpop.f32.mrb[0].mxu0
  %v2981 = vpop.f32.mrb[0].mxu0
  %v2982 = vadd.f32 0.0, %v2981
  %v2983 = vpop.f32.mrb[0].mxu0
  %2984 = vmatprep.mubr.bf16.mxu0 0
  %2985 = vmatmul.mubr.bf16.gmra.mrb[0].mxu0 %v2933
  %v2986 = vpop.f32.mrb[0].mxu0
  %v2987 = vadd.f32 0.0, %v2986
  %v2988 = vpop.f32.mrb[0].mxu0
  %v2989 = vpop.f32.mrb[0].mxu0
  %v2990 = vadd.f32 0.0, %v2989
  %v2991 = vpop.f32.mrb[0].mxu0
  %2992 = vmatprep.mubr.bf16.mxu0 0
  %2993 = vmatmul.mubr.bf16.gmra.mrb[0].mxu0 %v2936
  %v2994 = vpop.f32.mrb[0].mxu0
  %v2995 = vadd.f32 0.0, %v2994
  %v2996 = vpop.f32.mrb[0].mxu0
  %v2997 = vpop.f32.mrb[0].mxu0
  %v2998 = vadd.f32 0.0, %v2997
  %v2999 = vpop.f32.mrb[0].mxu0
  %3000 = vmatprep.mubr.bf16.mxu0 0
  %3001 = vmatmul.mubr.bf16.gmra.mrb[0].mxu0 %v2939
  %v3002 = vpop.f32.mrb[0].mxu0
  %v3003 = vadd.f32 0.0, %v3002
  %v3004 = vpop.f32.mrb[0].mxu0
  %v3005 = vpop.f32.mrb[0].mxu0
  %v3006 = vadd.f32 0.0, %v3005
  %v3007 = vpop.f32.mrb[0].mxu0
  %3008 = vmatprep.mubr.bf16.mxu0 0
  %3009 = vmatmul.mubr.bf16.gmra.mrb[0].mxu0 %v2942
  %v3010 = vpop.f32.mrb[0].mxu0
  %v3011 = vadd.f32 0.0, %v3010
  %v3012 = vpop.f32.mrb[0].mxu0
  %v3013 = vpop.f32.mrb[0].mxu0
  %v3014 = vpop.f32.mrb[0].mxu0
  %3015 = vdwg.mxu0
  %v3016 = vadd.f32 %v2585, %v2979
  %v3017 = vadd.f32 %v2588, %v2982
  %v3018 = vadd.f32 %v2593, %v2987
  %v3019 = vadd.f32 %v2596, %v2990
  %v3020 = vadd.f32 %v2601, %v2995
  %v3021 = vadd.f32 %v2604, %v2998
  %v3022 = vadd.f32 %v2609, %v3003
  %v3023 = vadd.f32 %v2612, %v3006
  %v3024 = vadd.f32 %v2617, %v3011
  %v3025 = vsel %vm293, %v3016, 0.0
  %v3026 = vsel %vm293, %v3017, 0.0
  %v3027 = vadd.f32 %v3025, %v3026
  %v3028 = vsel %vm293, %v3018, 0.0
  %v3029 = vadd.f32 %v3027, %v3028
  %v3030 = vsel %vm293, %v3019, 0.0
  %v3031 = vadd.f32 %v3029, %v3030
  %v3032 = vsel %vm293, %v3020, 0.0
  %v3033 = vadd.f32 %v3031, %v3032
  %v3034 = vsel %vm293, %v3021, 0.0
  %v3035 = vadd.f32 %v3033, %v3034
  %v3036 = vsel %vm293, %v3022, 0.0
  %v3037 = vadd.f32 %v3035, %v3036
  %v3038 = vsel %vm293, %v3023, 0.0
  %v3039 = vadd.f32 %v3037, %v3038
  %v3040 = vsel %vm293, %v3024, 0.0
  %v3041 = vadd.f32 %v3039, %v3040
  %v3042 = vrot.slane %v3041, 4
  %v3043 = vadd.f32 %v3041, %v3042
  %v3044 = vrot.slane %v3043, 2
  %v3045 = vadd.f32 %v3043, %v3044
  %v3046 = vrot.slane %v3045, 1
  %v3047 = vadd.f32 %v3045, %v3046
  %v3048 = vmul.f32 %v3016, %v3016
  %v3049 = vmul.f32 %v3017, %v3017
  %v3050 = vmul.f32 %v3018, %v3018
  %v3051 = vmul.f32 %v3019, %v3019
  %v3052 = vmul.f32 %v3020, %v3020
  %v3053 = vmul.f32 %v3021, %v3021
  %v3054 = vmul.f32 %v3022, %v3022
  %v3055 = vmul.f32 %v3023, %v3023
  %v3056 = vmul.f32 %v3024, %v3024
  %v3057 = vsel %vm293, %v3048, 0.0
  %v3058 = vsel %vm293, %v3049, 0.0
  %v3059 = vadd.f32 %v3057, %v3058
  %v3060 = vsel %vm293, %v3050, 0.0
  %v3061 = vadd.f32 %v3059, %v3060
  %v3062 = vsel %vm293, %v3051, 0.0
  %v3063 = vadd.f32 %v3061, %v3062
  %v3064 = vsel %vm293, %v3052, 0.0
  %v3065 = vadd.f32 %v3063, %v3064
  %v3066 = vsel %vm293, %v3053, 0.0
  %v3067 = vadd.f32 %v3065, %v3066
  %v3068 = vsel %vm293, %v3054, 0.0
  %v3069 = vadd.f32 %v3067, %v3068
  %v3070 = vsel %vm293, %v3055, 0.0
  %v3071 = vadd.f32 %v3069, %v3070
  %v3072 = vsel %vm293, %v3056, 0.0
  %v3073 = vadd.f32 %v3071, %v3072
  %v3074 = vrot.slane %v3073, 4
  %v3075 = vadd.f32 %v3073, %v3074
  %v3076 = vrot.slane %v3075, 2
  %v3077 = vadd.f32 %v3075, %v3076
  %v3078 = vrot.slane %v3077, 1
  %v3079 = vadd.f32 %v3077, %v3078
  %v3080 = vmul.f32 %v3047, 0.013888889
  %v3081 = vmul.f32 %v3079, 0.013888889
  %v3082 = vmul.f32 %v3080, %v3080
  %v3083 = vsub.f32 %v3081, %v3082
  %v3084 = vmax.f32 %v3083, 0.0
  %v3085 = vsub.f32 %v3016, %v3080
  %v3086 = vsub.f32 %v3017, %v3080
  %v3087 = vsub.f32 %v3018, %v3080
  %v3088 = vsub.f32 %v3019, %v3080
  %v3089 = vsub.f32 %v3020, %v3080
  %v3090 = vsub.f32 %v3021, %v3080
  %v3091 = vsub.f32 %v3022, %v3080
  %v3092 = vsub.f32 %v3023, %v3080
  %v3093 = vsub.f32 %v3024, %v3080
  %v3094 = vadd.f32 %v3084, 1e-05
  %v3095 = vrsqrt.pop %v3094
  %v3096 = vmul.f32 %v3085, %v3095
  %v3097 = vmul.f32 %v3086, %v3095
  %v3098 = vmul.f32 %v3087, %v3095
  %v3099 = vmul.f32 %v3088, %v3095
  %v3100 = vmul.f32 %v3089, %v3095
  %v3101 = vmul.f32 %v3090, %v3095
  %v3102 = vmul.f32 %v3091, %v3095
  %v3103 = vmul.f32 %v3092, %v3095
  %v3104 = vmul.f32 %v3093, %v3095
  %v3105 = vld [vmem:[%s5] sm:$0x1]
  %v3107 = vlaneseq
  %v3108 = vshrl.u32 %v3107, 7
  %v3109 = vsub.s32 0, %v3108
  %v3110 = vrot.slane %v3105, %v3109
  %v3112 = vmul.f32 %v3096, %v3110
  %v3113 = vmul.f32 %v3097, %v3110
  %v3114 = vmul.f32 %v3098, %v3110
  %v3115 = vmul.f32 %v3099, %v3110
  %v3116 = vmul.f32 %v3100, %v3110
  %v3117 = vmul.f32 %v3101, %v3110
  %v3118 = vmul.f32 %v3102, %v3110
  %v3119 = vmul.f32 %v3103, %v3110
  %v3120 = vmul.f32 %v3104, %v3110
  %v3121 = vld [vmem:[%s6] sm:$0x1]
  %v3123 = vlaneseq
  %v3124 = vshrl.u32 %v3123, 7
  %v3125 = vsub.s32 0, %v3124
  %v3126 = vrot.slane %v3121, %v3125
  %v3128 = vadd.f32 %v3112, %v3126
  %v3129 = vadd.f32 %v3113, %v3126
  %v3130 = vadd.f32 %v3114, %v3126
  %v3131 = vadd.f32 %v3115, %v3126
  %v3132 = vadd.f32 %v3116, %v3126
  %v3133 = vadd.f32 %v3117, %v3126
  %v3134 = vadd.f32 %v3118, %v3126
  %v3135 = vadd.f32 %v3119, %v3126
  %v3136 = vadd.f32 %v3120, %v3126
  %v3137 = vmax.f32 %v3128, 0.0
  %v3138 = vmax.f32 %v3129, 0.0
  %v3139 = vmax.f32 %v3130, 0.0
  %v3140 = vmax.f32 %v3131, 0.0
  %v3141 = vmax.f32 %v3132, 0.0
  %v3142 = vmax.f32 %v3133, 0.0
  %v3143 = vmax.f32 %v3134, 0.0
  %v3144 = vmax.f32 %v3135, 0.0
  %v3145 = vmax.f32 %v3136, 0.0
  %v3146 = vlaneseq
  %v3147 = vshrl.u32 %v3146, 7
  %v3148 = vadd.s32 %v3147, 8
  %v3149 = vadd.s32 %v3147, 16
  %v3150 = vadd.s32 %v3147, 24
  %v3151 = vlaneseq
  %v3152 = vand.u32 %v3151, 127
  %vm3153 = vcmp.eq.s32.totalorder %v3147, %v3152
  %vm3154 = vcmp.eq.s32.totalorder %v3148, %v3152
  %vm3155 = vcmp.eq.s32.totalorder %v3149, %v3152
  %vm3156 = vcmp.eq.s32.totalorder %v3150, %v3152
  %v3157 = vsel %vm3153, 1, 0
  %v3158 = vsel %vm3154, 1, 0
  %v3159 = vsel %vm3155, 1, 0
  %v3160 = vsel %vm3156, 1, 0
  %v3161 = vcvt.s32.f32 %v3157
  %v3162 = vcvt.s32.f32 %v3158
  %v3163 = vcvt.s32.f32 %v3159
  %v3164 = vcvt.s32.f32 %v3160
  %v3166 = vsel %vm293, %v3161, 0
  %v3169 = vsel %vm293, %v3162, 0
  %v3172 = vsel %vm293, %v3163, 0
  %v3175 = vsel %vm293, %v3164, 0
  %v3178 = vsel %vm293, %v3137, 0
  %v3181 = vsel %vm293, %v3138, 0
  %v3184 = vsel %vm293, %v3139, 0
  %v3187 = vsel %vm293, %v3140, 0
  %v3190 = vsel %vm293, %v3141, 0
  %3192 = vmatprep.subr.mxu0 0.0
  %3193 = vmatpush1.xpose.msra.mxu0 %v3178
  %3194 = vmatprep.subr.mxu0 0.0
  %3195 = vmatpush1.xpose.msra.mxu0 %v3181
  %3196 = vmatprep.subr.mxu0 0.0
  %3197 = vmatpush1.xpose.msra.mxu0 %v3184
  %3198 = vmatprep.subr.mxu0 0.0
  %3199 = vmatpush1.xpose.msra.mxu0 %v3187
  %3200 = vmatprep.subr.mxu0 0.0
  %3201 = vmatpush1.xpose.msra.mxu0 %v3190
  %3202 = vmatprep.subr.mxu0 0.0
  %3203 = vmatpush1.xpose.msra.mxu0 0.0
  %3204 = vmatprep.subr.mxu0 0.0
  %3205 = vmatpush1.xpose.msra.mxu0 0.0
  %3206 = vmatprep.subr.mxu0 0.0
  %3207 = vmatpush1.xpose.msra.mxu0 0.0
  %3208 = vmatprep.subr.mxu0 0.0
  %3209 = vmatpush1.xpose.msra.mxu0 0.0
  %3210 = vmatprep.subr.mxu0 0.0
  %3211 = vmatpush1.xpose.msra.mxu0 0.0
  %3212 = vmatprep.subr.mxu0 0.0
  %3213 = vmatpush1.xpose.msra.mxu0 0.0
  %3214 = vmatprep.subr.mxu0 0.0
  %3215 = vmatpush1.xpose.msra.mxu0 0.0
  %3216 = vmatprep.subr.mxu0 0.0
  %3217 = vmatpush1.xpose.msra.mxu0 0.0
  %3218 = vmatprep.subr.mxu0 0.0
  %3219 = vmatpush1.xpose.msra.mxu0 0.0
  %3220 = vmatprep.subr.mxu0 0.0
  %3221 = vmatpush1.xpose.msra.mxu0 0.0
  %3222 = vmatprep.subr.mxu0 0.0
  %3223 = vmatpush1.xpose.msra.mxu0 0.0
  %3224 = vmatprep.subr.mxu0 0.0
  %3225 = vmatpush1.xpose.msra.mxu0 0.0
  %3226 = vmatprep.subr.mxu0 0.0
  %3227 = vmatpush1.xpose.msra.mxu0 0.0
  %3228 = vmatprep.subr.mxu0 0.0
  %3229 = vmatpush1.xpose.msra.mxu0 0.0
  %3230 = vmatprep.subr.mxu0 0.0
  %3231 = vmatpush1.xpose.msra.mxu0 0.0
  %3232 = vmatprep.subr.mxu0 0.0
  %3233 = vmatpush1.xpose.msra.mxu0 0.0
  %3234 = vmatprep.subr.mxu0 0.0
  %3235 = vmatpush1.xpose.msra.mxu0 0.0
  %3236 = vmatprep.subr.mxu0 0.0
  %3237 = vmatpush1.xpose.msra.mxu0 0.0
  %3238 = vmatprep.subr.mxu0 0.0
  %3239 = vmatpush1.xpose.msra.mxu0 0.0
  %3240 = vmatprep.subr.mxu0 0.0
  %3241 = vmatpush1.xpose.msra.mxu0 0.0
  %3242 = vmatprep.subr.mxu0 0.0
  %3243 = vmatpush1.xpose.msra.mxu0 0.0
  %3244 = vmatprep.subr.mxu0 0.0
  %3245 = vmatpush1.xpose.msra.mxu0 0.0
  %3246 = vmatprep.subr.mxu0 0.0
  %3247 = vmatpush1.xpose.msra.mxu0 0.0
  %3248 = vmatprep.subr.mxu0 0.0
  %3249 = vmatpush1.xpose.msra.mxu0 0.0
  %3250 = vmatprep.subr.mxu0 0.0
  %3251 = vmatpush1.xpose.msra.mxu0 0.0
  %3252 = vmatprep.subr.mxu0 0.0
  %3253 = vmatpush1.xpose.msra.mxu0 0.0
  %3254 = vmatprep.subr.mxu0 0.0
  %3255 = vmatpush1.xpose.msra.mxu0 0.0
  %3256 = vmatprep.mubr.f32.mxu0 0.0
  %3257 = vmatmul.mubr.f32.gmra.mrb[0].mxu0 %v3166
  %v3258 = vpop.f32.mrb[0].mxu0
  %v3259 = vadd.f32 0.0, %v3258
  %v3260 = vpop.f32.mrb[0].mxu0
  %3261 = vmatprep.mubr.f32.mxu0 0.0
  %3262 = vmatmul.mubr.f32.gmra.mrb[0].mxu0 %v3169
  %v3263 = vpop.f32.mrb[0].mxu0
  %v3264 = vadd.f32 0.0, %v3263
  %v3265 = vpop.f32.mrb[0].mxu0
  %3266 = vmatprep.mubr.f32.mxu0 0.0
  %3267 = vmatmul.mubr.f32.gmra.mrb[0].mxu0 %v3172
  %v3268 = vpop.f32.mrb[0].mxu0
  %v3269 = vadd.f32 0.0, %v3268
  %v3270 = vpop.f32.mrb[0].mxu0
  %3271 = vmatprep.mubr.f32.mxu0 0.0
  %3272 = vmatmul.mubr.f32.gmra.mrb[0].mxu0 %v3175
  %v3273 = vpop.f32.mrb[0].mxu0
  %v3274 = vadd.f32 0.0, %v3273
  %v3275 = vpop.f32.mrb[0].mxu0
  %3276 = vdwg.mxu0
  %vm3277 = vcmask 293888
  %3278 = vst.msk [vmem:[%s7] sm:$0xff] %vm3277, %v3259
  %3279 = vst.msk [vmem:[%s7 + $0x8] sm:$0xff] %vm3277, %v3264
  %3280 = vst.msk [vmem:[%s7 + $0x10] sm:$0xff] %vm3277, %v3269
  %3281 = vst.msk [vmem:[%s7 + $0x18] sm:$0xff] %vm3277, %v3274
  %vm3286 = vcmask 1043456
  %v3287 = vrot.slane %v3141, 4
  %v3288 = vrot.slane %v3142, 4
  %v3289 = vsel %vm3286, %v3287, %v3288
  %v3290 = vrot.slane %v3143, 4
  %v3291 = vsel %vm3286, %v3288, %v3290
  %v3292 = vrot.slane %v3144, 4
  %v3293 = vsel %vm3286, %v3290, %v3292
  %v3294 = vrot.slane %v3145, 4
  %v3295 = vsel %vm3286, %v3292, %v3294
  %v3296 = vsel %vm293, %v3289, 0
  %v3298 = vsel %vm293, %v3291, 0
  %v3300 = vsel %vm293, %v3293, 0
  %v3302 = vsel %vm293, %v3295, 0
  %v3304 = vsel %vm293, %v3294, 0
  %3306 = vmatprep.subr.mxu0 0.0
  %3307 = vmatpush1.xpose.msra.mxu0 %v3296
  %3308 = vmatprep.subr.mxu0 0.0
  %3309 = vmatpush1.xpose.msra.mxu0 %v3298
  %3310 = vmatprep.subr.mxu0 0.0
  %3311 = vmatpush1.xpose.msra.mxu0 %v3300
  %3312 = vmatprep.subr.mxu0 0.0
  %3313 = vmatpush1.xpose.msra.mxu0 %v3302
  %3314 = vmatprep.subr.mxu0 0.0
  %3315 = vmatpush1.xpose.msra.mxu0 %v3304
  %3316 = vmatprep.subr.mxu0 0.0
  %3317 = vmatpush1.xpose.msra.mxu0 0.0
  %3318 = vmatprep.subr.mxu0 0.0
  %3319 = vmatpush1.xpose.msra.mxu0 0.0
  %3320 = vmatprep.subr.mxu0 0.0
  %3321 = vmatpush1.xpose.msra.mxu0 0.0
  %3322 = vmatprep.subr.mxu0 0.0
  %3323 = vmatpush1.xpose.msra.mxu0 0.0
  %3324 = vmatprep.subr.mxu0 0.0
  %3325 = vmatpush1.xpose.msra.mxu0 0.0
  %3326 = vmatprep.subr.mxu0 0.0
  %3327 = vmatpush1.xpose.msra.mxu0 0.0
  %3328 = vmatprep.subr.mxu0 0.0
  %3329 = vmatpush1.xpose.msra.mxu0 0.0
  %3330 = vmatprep.subr.mxu0 0.0
  %3331 = vmatpush1.xpose.msra.mxu0 0.0
  %3332 = vmatprep.subr.mxu0 0.0
  %3333 = vmatpush1.xpose.msra.mxu0 0.0
  %3334 = vmatprep.subr.mxu0 0.0
  %3335 = vmatpush1.xpose.msra.mxu0 0.0
  %3336 = vmatprep.subr.mxu0 0.0
  %3337 = vmatpush1.xpose.msra.mxu0 0.0
  %3338 = vmatprep.subr.mxu0 0.0
  %3339 = vmatpush1.xpose.msra.mxu0 0.0
  %3340 = vmatprep.subr.mxu0 0.0
  %3341 = vmatpush1.xpose.msra.mxu0 0.0
  %3342 = vmatprep.subr.mxu0 0.0
  %3343 = vmatpush1.xpose.msra.mxu0 0.0
  %3344 = vmatprep.subr.mxu0 0.0
  %3345 = vmatpush1.xpose.msra.mxu0 0.0
  %3346 = vmatprep.subr.mxu0 0.0
  %3347 = vmatpush1.xpose.msra.mxu0 0.0
  %3348 = vmatprep.subr.mxu0 0.0
  %3349 = vmatpush1.xpose.msra.mxu0 0.0
  %3350 = vmatprep.subr.mxu0 0.0
  %3351 = vmatpush1.xpose.msra.mxu0 0.0
  %3352 = vmatprep.subr.mxu0 0.0
  %3353 = vmatpush1.xpose.msra.mxu0 0.0
  %3354 = vmatprep.subr.mxu0 0.0
  %3355 = vmatpush1.xpose.msra.mxu0 0.0
  %3356 = vmatprep.subr.mxu0 0.0
  %3357 = vmatpush1.xpose.msra.mxu0 0.0
  %3358 = vmatprep.subr.mxu0 0.0
  %3359 = vmatpush1.xpose.msra.mxu0 0.0
  %3360 = vmatprep.subr.mxu0 0.0
  %3361 = vmatpush1.xpose.msra.mxu0 0.0
  %3362 = vmatprep.subr.mxu0 0.0
  %3363 = vmatpush1.xpose.msra.mxu0 0.0
  %3364 = vmatprep.subr.mxu0 0.0
  %3365 = vmatpush1.xpose.msra.mxu0 0.0
  %3366 = vmatprep.subr.mxu0 0.0
  %3367 = vmatpush1.xpose.msra.mxu0 0.0
  %3368 = vmatprep.subr.mxu0 0.0
  %3369 = vmatpush1.xpose.msra.mxu0 0.0
  %3370 = vmatprep.mubr.f32.mxu0 0.0
  %3371 = vmatmul.mubr.f32.gmra.mrb[0].mxu0 %v3166
  %v3372 = vpop.f32.mrb[0].mxu0
  %v3373 = vadd.f32 0.0, %v3372
  %v3374 = vpop.f32.mrb[0].mxu0
  %3375 = vmatprep.mubr.f32.mxu0 0.0
  %3376 = vmatmul.mubr.f32.gmra.mrb[0].mxu0 %v3169
  %v3377 = vpop.f32.mrb[0].mxu0
  %v3378 = vadd.f32 0.0, %v3377
  %v3379 = vpop.f32.mrb[0].mxu0
  %3380 = vmatprep.mubr.f32.mxu0 0.0
  %3381 = vmatmul.mubr.f32.gmra.mrb[0].mxu0 %v3172
  %v3382 = vpop.f32.mrb[0].mxu0
  %v3383 = vadd.f32 0.0, %v3382
  %v3384 = vpop.f32.mrb[0].mxu0
  %3385 = vmatprep.mubr.f32.mxu0 0.0
  %3386 = vmatmul.mubr.f32.gmra.mrb[0].mxu0 %v3175
  %v3387 = vpop.f32.mrb[0].mxu0
  %v3388 = vadd.f32 0.0, %v3387
  %v3389 = vpop.f32.mrb[0].mxu0
  %3390 = vdwg.mxu0
  %s3391 = scalar_lea.vmem %s7, 32
  %3392 = vst.msk [vmem:[%s3391] sm:$0xff] %vm3277, %v3373
  %3393 = vst.msk [vmem:[%s3391 + $0x8] sm:$0xff] %vm3277, %v3378
  %3394 = vst.msk [vmem:[%s3391 + $0x10] sm:$0xff] %vm3277, %v3383
  %3395 = vst.msk [vmem:[%s3391 + $0x18] sm:$0xff] %vm3277, %v3388
  // Predicated region
  $region30: #{cnn_forward.2} parent=0 // pred_check
    _
  $region31: #{cnn_forward.2} parent=0 // pred_check_branch
    %3397 = sbr.rel (0) target = $region33
  $region32: #{cnn_forward.2} parent=0 // pred_region
    _
  $region33: #{cnn_forward.2} parent=0 // pred_fallthru
    _
  // Predicated region
  $region34: #{cnn_forward.2} parent=0 // pred_check
    _
  $region35: #{cnn_forward.2} parent=0 // pred_check_branch
    %3399 = sbr.rel (0) target = $region37
  $region36: #{cnn_forward.2} parent=0 // pred_region
    _
  $region37: #{cnn_forward.2} parent=0 // pred_fallthru
    _

</llo_original>
